<compile_context>
chip_gen: v7x
topology: tpu7x:2x2x1
jax: 0.10.0
libtpu: 0.0.40
codegen_flags: <defaults>
</compile_context>

<pallas_src>
import functools
import math

import jax
import jax.numpy as jnp
from jax.experimental import pallas as pl
from jax.experimental.pallas import tpu as pltpu

_VMEM_LIMIT = 48 * 1024 * 1024  # <= v7x 64 MiB per-TC VMEM


# ---------------------------------------------------------------------------
# Pallas kernels
# ---------------------------------------------------------------------------
def linear_kernel_nok(x_ref, w_ref, b_ref, o_ref, *, activation):
    # Single-K-tile path: x [tm, K] bf16, w [K, tn] bf16, b [1, tn] f32 -> o [tm, tn]
    y = jnp.dot(x_ref[...], w_ref[...], preferred_element_type=jnp.float32) + b_ref[...]
    if activation == "relu":
        y = jnp.maximum(y, 0.0)
    o_ref[...] = y.astype(o_ref.dtype)


def linear_kernel_k(x_ref, w_ref, b_ref, o_ref, acc_ref, *, activation):
    # K-tiled path with f32 VMEM accumulator.
    @pl.when(pl.program_id(2) == 0)
    def _init():
        acc_ref[...] = jnp.zeros_like(acc_ref)

    acc_ref[...] += jnp.dot(x_ref[...], w_ref[...], preferred_element_type=jnp.float32)

    @pl.when(pl.program_id(2) == pl.num_programs(2) - 1)
    def _finalize():
        y = acc_ref[...] + b_ref[...]
        if activation == "relu":
            y = jnp.maximum(y, 0.0)
        o_ref[...] = y.astype(o_ref.dtype)


def _ln_finalize(y_f32, gamma, beta, out_dtype):
    # LayerNorm over the last (lane) axis, eps = 1e-12 (matches the reference impl).
    mean = jnp.mean(y_f32, axis=-1, keepdims=True)
    var = jnp.mean((y_f32 - mean) ** 2, axis=-1, keepdims=True)
    inv = jax.lax.rsqrt(var + 1e-12)
    return (gamma * (y_f32 - mean) * inv + beta).astype(out_dtype)


def linear_ln_kernel_nok(x_ref, w_ref, b_ref, r_ref, g_ref, beta_ref, o_ref):
    # Fused: LayerNorm(x @ W + b + residual), single K tile.
    y = jnp.dot(x_ref[...], w_ref[...], preferred_element_type=jnp.float32)
    y = y + b_ref[...] + r_ref[...].astype(jnp.float32)
    o_ref[...] = _ln_finalize(y, g_ref[...], beta_ref[...], o_ref.dtype)


def linear_ln_kernel_k(x_ref, w_ref, b_ref, r_ref, g_ref, beta_ref, o_ref, acc_ref):
    @pl.when(pl.program_id(1) == 0)
    def _init():
        acc_ref[...] = jnp.zeros_like(acc_ref)

    acc_ref[...] += jnp.dot(x_ref[...], w_ref[...], preferred_element_type=jnp.float32)

    @pl.when(pl.program_id(1) == pl.num_programs(1) - 1)
    def _finalize():
        y = acc_ref[...] + b_ref[...] + r_ref[...].astype(jnp.float32)
        o_ref[...] = _ln_finalize(y, g_ref[...], beta_ref[...], o_ref.dtype)


def _mha_core(q_all, k_all, v_all, masked, n_head, scale):
    """q_all [Lq, D], k_all/v_all [Lk, D] (bf16), masked bool broadcastable to [Lq, Lk]."""
    D = q_all.shape[-1]
    dk = D // n_head
    outs = []
    for h in range(n_head):  # static unroll over heads
        lo = h * dk
        q = (q_all[:, lo:lo + dk].astype(jnp.float32) * scale).astype(jnp.bfloat16)
        k = k_all[:, lo:lo + dk].astype(jnp.bfloat16)
        v = v_all[:, lo:lo + dk].astype(jnp.bfloat16)
        # NT contraction (contract last dims) -> no explicit k.T / XLU transpose.
        s = jax.lax.dot_general(q, k, (((1,), (1,)), ((), ())),
                                preferred_element_type=jnp.float32)
        s = jnp.where(masked, -10000.0, s)            # masked_fill(mask==0, -10000)
        s = s - jnp.max(s, axis=-1, keepdims=True)    # f32 softmax statistics
        p = jnp.exp(s)
        p = p * pl.reciprocal(jnp.sum(p, axis=-1, keepdims=True), approx=True)
        outs.append(jnp.dot(p.astype(jnp.bfloat16), v, preferred_element_type=jnp.float32))
    # Single lane-dense [Lq, D] result (one unmasked store at the call site).
    return jnp.concatenate(outs, axis=-1)


def self_attn_kernel(qkv_ref, kvalid_ref, qvalid_ref, o_ref, *, n_head, scale, causal):
    # qkv: [L, 3D] bf16 (fused projection slab), kvalid: [1, L], qvalid: [L, 1] (f32, 0==pad)
    L, D3 = qkv_ref.shape
    D = D3 // 3
    valid = qvalid_ref[...] * kvalid_ref[...]          # [L, 1] * [1, L] -> [L, L]
    if causal:
        qi = jax.lax.broadcasted_iota(jnp.int32, (L, L), 0)
        ki = jax.lax.broadcasted_iota(jnp.int32, (L, L), 1)
        valid = valid * (ki <= qi).astype(valid.dtype)
    masked = valid == 0.0                              # hoisted out of the head loop
    qkv = qkv_ref[...]
    out = _mha_core(qkv[:, :D], qkv[:, D:2 * D], qkv[:, 2 * D:], masked, n_head, scale)
    o_ref[...] = out.astype(o_ref.dtype)


def cross_attn_kernel(q_ref, kv_ref, kvalid_ref, o_ref, *, n_head, scale):
    # q: [Lq, D] bf16, kv: [Lk, 2D] bf16 (fused KV slab), kvalid: [1, Lk] (f32, 0==pad)
    D = q_ref.shape[-1]
    masked = kvalid_ref[...] == 0.0                    # [1, Lk], broadcasts over queries
    kv = kv_ref[...]
    out = _mha_core(q_ref[...], kv[:, :D], kv[:, D:], masked, n_head, scale)
    o_ref[...] = out.astype(o_ref.dtype)


# ---------------------------------------------------------------------------
# Pallas wrappers
# ---------------------------------------------------------------------------
def _pick_k_tile(K):
    for t in (512, 256, 128):
        if K % t == 0:
            return t
    return K  # fall back to full K (exact reduction); fine for moderate K


def linear(x2d, w_kn, b_1n, activation=None, out_dtype=jnp.bfloat16):
    """x2d: [M, K] bf16; w_kn: [K, N] bf16 (pre-transposed); b_1n: [1, N] f32."""
    M, K = x2d.shape
    N = w_kn.shape[1]
    tm = min(M, 256)
    tn = min(N, 512)          # multiple of 128 or full N (vocab projection streams over N)
    tk = _pick_k_tile(K)
    assert K % tk == 0
    nk = K // tk
    params = pltpu.CompilerParams(
        dimension_semantics=("parallel", "parallel") if nk == 1
        else ("parallel", "parallel", "arbitrary"),
        vmem_limit_bytes=_VMEM_LIMIT)
    if nk == 1:
        # Single K tile: no accumulator, x block constant across N tiles (no re-DMA).
        return pl.pallas_call(
            functools.partial(linear_kernel_nok, activation=activation),
            out_shape=jax.ShapeDtypeStruct((M, N), out_dtype),
            grid=(pl.cdiv(M, tm), pl.cdiv(N, tn)),
            in_specs=[
                pl.BlockSpec((tm, K), lambda i, j: (i, 0)),
                pl.BlockSpec((K, tn), lambda i, j: (0, j)),
                pl.BlockSpec((1, tn), lambda i, j: (0, j)),
            ],
            out_specs=pl.BlockSpec((tm, tn), lambda i, j: (i, j)),
            compiler_params=params,
        )(x2d, w_kn, b_1n)
    return pl.pallas_call(
        functools.partial(linear_kernel_k, activation=activation),
        out_shape=jax.ShapeDtypeStruct((M, N), out_dtype),
        grid=(pl.cdiv(M, tm), pl.cdiv(N, tn), nk),
        in_specs=[
            pl.BlockSpec((tm, tk), lambda i, j, k: (i, k)),
            pl.BlockSpec((tk, tn), lambda i, j, k: (k, j)),
            pl.BlockSpec((1, tn), lambda i, j, k: (0, j)),
        ],
        out_specs=pl.BlockSpec((tm, tn), lambda i, j, k: (i, j)),
        scratch_shapes=[pltpu.VMEM((tm, tn), jnp.float32)],
        compiler_params=params,
    )(x2d, w_kn, b_1n)


def linear_residual_ln(x2d, w_kn, b_1n, res2d, gamma, beta, out_dtype=jnp.bfloat16):
    """LayerNorm(x2d @ W + b + res2d).  Requires N == d_model in a single lane tile."""
    M, K = x2d.shape
    D = w_kn.shape[1]
    tm = min(M, 256)
    tk = _pick_k_tile(K)
    assert K % tk == 0
    nk = K // tk
    if nk == 1:
        return pl.pallas_call(
            linear_ln_kernel_nok,
            out_shape=jax.ShapeDtypeStruct((M, D), out_dtype),
            grid=(pl.cdiv(M, tm),),
            in_specs=[
                pl.BlockSpec((tm, K), lambda i: (i, 0)),
                pl.BlockSpec((K, D), lambda i: (0, 0)),
                pl.BlockSpec((1, D), lambda i: (0, 0)),
                pl.BlockSpec((tm, D), lambda i: (i, 0)),
                pl.BlockSpec((1, D), lambda i: (0, 0)),
                pl.BlockSpec((1, D), lambda i: (0, 0)),
            ],
            out_specs=pl.BlockSpec((tm, D), lambda i: (i, 0)),
            compiler_params=pltpu.CompilerParams(
                dimension_semantics=("parallel",), vmem_limit_bytes=_VMEM_LIMIT),
        )(x2d, w_kn, b_1n, res2d, gamma, beta)
    return pl.pallas_call(
        linear_ln_kernel_k,
        out_shape=jax.ShapeDtypeStruct((M, D), out_dtype),
        grid=(pl.cdiv(M, tm), nk),
        in_specs=[
            pl.BlockSpec((tm, tk), lambda i, k: (i, k)),
            pl.BlockSpec((tk, D), lambda i, k: (k, 0)),
            pl.BlockSpec((1, D), lambda i, k: (0, 0)),
            pl.BlockSpec((tm, D), lambda i, k: (i, 0)),
            pl.BlockSpec((1, D), lambda i, k: (0, 0)),
            pl.BlockSpec((1, D), lambda i, k: (0, 0)),
        ],
        out_specs=pl.BlockSpec((tm, D), lambda i, k: (i, 0)),
        scratch_shapes=[pltpu.VMEM((tm, D), jnp.float32)],
        compiler_params=pltpu.CompilerParams(
            dimension_semantics=("parallel", "arbitrary"), vmem_limit_bytes=_VMEM_LIMIT),
    )(x2d, w_kn, b_1n, res2d, gamma, beta)


def self_attention_call(qkv, kvalid, qvalid, n_head, causal):
    """qkv: [B, L, 3D] bf16; kvalid: [B, 1, L] f32; qvalid: [B, L, 1] f32 -> [B, L, D] bf16."""
    B, L, D3 = qkv.shape
    D = D3 // 3
    scale = 1.0 / math.sqrt(D // n_head)
    kern = functools.partial(self_attn_kernel, n_head=n_head, scale=scale, causal=causal)
    return pl.pallas_call(
        kern,
        out_shape=jax.ShapeDtypeStruct((B, L, D), jnp.bfloat16),
        grid=(B,),
        in_specs=[
            pl.BlockSpec((None, L, D3), lambda b: (b, 0, 0)),
            pl.BlockSpec((None, 1, L), lambda b: (b, 0, 0)),
            pl.BlockSpec((None, L, 1), lambda b: (b, 0, 0)),
        ],
        out_specs=pl.BlockSpec((None, L, D), lambda b: (b, 0, 0)),
        compiler_params=pltpu.CompilerParams(dimension_semantics=("parallel",)),
    )(qkv, kvalid, qvalid)


def cross_attention_call(q, kv, kvalid, n_head):
    """q: [B, Lq, D] bf16; kv: [B, Lk, 2D] bf16; kvalid: [B, 1, Lk] f32 -> [B, Lq, D] bf16."""
    B, Lq, D = q.shape
    Lk = kv.shape[1]
    scale = 1.0 / math.sqrt(D // n_head)
    kern = functools.partial(cross_attn_kernel, n_head=n_head, scale=scale)
    return pl.pallas_call(
        kern,
        out_shape=jax.ShapeDtypeStruct((B, Lq, D), jnp.bfloat16),
        grid=(B,),
        in_specs=[
            pl.BlockSpec((None, Lq, D), lambda b: (b, 0, 0)),
            pl.BlockSpec((None, Lk, 2 * D), lambda b: (b, 0, 0)),
            pl.BlockSpec((None, 1, Lk), lambda b: (b, 0, 0)),
        ],
        out_specs=pl.BlockSpec((None, Lq, D), lambda b: (b, 0, 0)),
        compiler_params=pltpu.CompilerParams(dimension_semantics=("parallel",)),
    )(q, kv, kvalid)


# ---------------------------------------------------------------------------
# Model pieces (glue around the kernels)
# ---------------------------------------------------------------------------
def sinusoidal_encoding(max_len, d_model):
    pos = jnp.arange(max_len, dtype=jnp.float32)[:, None]
    two_i = jnp.arange(0, d_model, 2, dtype=jnp.float32)
    angles = pos / (10000.0 ** (two_i / d_model))
    enc = jnp.zeros((max_len, d_model), jnp.float32)
    enc = enc.at[:, 0::2].set(jnp.sin(angles))
    enc = enc.at[:, 1::2].set(jnp.cos(angles))
    return enc


def encoder_layer(x, kvalid, qvalid, p, n_head):
    B, L, D = x.shape
    res = x.reshape(B * L, D)
    qkv = linear(res, p["attn"]["wqkv_w"], p["attn"]["wqkv_b"]).reshape(B, L, 3 * D)
    att = self_attention_call(qkv, kvalid, qvalid, n_head, causal=False)
    x = linear_residual_ln(att.reshape(B * L, D), p["attn"]["wo_w"], p["attn"]["wo_b"],
                           res, p["norm1_g"], p["norm1_b"])
    res = x
    h = linear(x, p["ffn"]["l1_w"], p["ffn"]["l1_b"], activation="relu")
    x = linear_residual_ln(h, p["ffn"]["l2_w"], p["ffn"]["l2_b"],
                           res, p["norm2_g"], p["norm2_b"])
    return x.reshape(B, L, D)


def decoder_layer(y, enc, trg_qvalid, dec_kvalid, src_kvalid, p, n_head):
    B, Lt, D = y.shape
    Ls = enc.shape[1]
    # masked (causal + trg-pad-query) self attention
    res = y.reshape(B * Lt, D)
    qkv = linear(res, p["self_attn"]["wqkv_w"], p["self_attn"]["wqkv_b"]).reshape(B, Lt, 3 * D)
    att = self_attention_call(qkv, dec_kvalid, trg_qvalid, n_head, causal=True)
    y = linear_residual_ln(att.reshape(B * Lt, D), p["self_attn"]["wo_w"], p["self_attn"]["wo_b"],
                           res, p["norm1_g"], p["norm1_b"])
    # encoder-decoder cross attention (src key padding mask)
    res = y
    q = linear(y, p["cross_attn"]["wq_w"], p["cross_attn"]["wq_b"]).reshape(B, Lt, D)
    kv = linear(enc.reshape(B * Ls, D), p["cross_attn"]["wkv_w"],
                p["cross_attn"]["wkv_b"]).reshape(B, Ls, 2 * D)
    att = cross_attention_call(q, kv, src_kvalid, n_head)
    y = linear_residual_ln(att.reshape(B * Lt, D), p["cross_attn"]["wo_w"], p["cross_attn"]["wo_b"],
                           res, p["norm2_g"], p["norm2_b"])
    # feed forward
    res = y
    h = linear(y, p["ffn"]["l1_w"], p["ffn"]["l1_b"], activation="relu")
    y = linear_residual_ln(h, p["ffn"]["l2_w"], p["ffn"]["l2_b"],
                           res, p["norm3_g"], p["norm3_b"])
    return y.reshape(B, Lt, D)


def transformer_forward(params, src, trg, *, src_pad_idx, trg_pad_idx, n_head):
    B, Ls = src.shape
    Lt = trg.shape[1]
    f32 = jnp.float32

    # Validity vectors only (no [B, Lq, Lk] mask materialization):
    #   encoder / cross attention mask keys where src == pad
    #   decoder self attention masks query rows where trg == pad, plus causal (in-kernel iota)
    src_kvalid = (src != src_pad_idx).astype(f32)[:, None, :]     # [B, 1, Ls]
    enc_qvalid = jnp.ones((B, Ls, 1), f32)
    trg_qvalid = (trg != trg_pad_idx).astype(f32)[:, :, None]     # [B, Lt, 1]
    dec_kvalid = jnp.ones((B, 1, Lt), f32)

    pos = params["pos_encoding"]

    # ---- encoder ----  (embedding gather + pos add stay in plain JAX; dropout == identity)
    x = (jnp.take(params["enc_tok_emb"], src, axis=0) + pos[:Ls][None]).astype(jnp.bfloat16)
    for lp in params["enc_layers"]:
        x = encoder_layer(x, src_kvalid, enc_qvalid, lp, n_head)
    enc_src = x

    # ---- decoder ----
    y = (jnp.take(params["dec_tok_emb"], trg, axis=0) + pos[:Lt][None]).astype(jnp.bfloat16)
    for lp in params["dec_layers"]:
        y = decoder_layer(y, enc_src, trg_qvalid, dec_kvalid, src_kvalid, lp, n_head)

    B_, L_, D_ = y.shape
    V = params["out_w"].shape[1]
    logits = linear(y.reshape(B_ * L_, D_), params["out_w"], params["out_b"],
                    out_dtype=jnp.float32)
    return logits.reshape(B_, L_, V)


# ---------------------------------------------------------------------------
# Deterministic parameter init (synthetic weights, not a checkpoint)
# Weights drawn in torch layout [out, in], stored pre-transposed [in, out] in bf16.
# ---------------------------------------------------------------------------
def _dense(key, out_dim, in_dim, scale=0.05):
    kw, kb = jax.random.split(key)
    w = jax.random.normal(kw, (out_dim, in_dim), jnp.float32) * scale
    b = jax.random.normal(kb, (out_dim,), jnp.float32) * scale
    return w.T.astype(jnp.bfloat16), b.reshape(1, out_dim)


def _mha_self_params(key, d_model):
    kq, kk, kv, ko = jax.random.split(key, 4)
    wq, bq = _dense(kq, d_model, d_model)
    wk, bk = _dense(kk, d_model, d_model)
    wv, bv = _dense(kv, d_model, d_model)
    wo, bo = _dense(ko, d_model, d_model)
    return {
        "wqkv_w": jnp.concatenate([wq, wk, wv], axis=1),   # [D, 3D] bf16 (fused QKV)
        "wqkv_b": jnp.concatenate([bq, bk, bv], axis=1),   # [1, 3D] f32
        "wo_w": wo, "wo_b": bo,
    }


def _mha_cross_params(key, d_model):
    kq, kk, kv, ko = jax.random.split(key, 4)
    wq, bq = _dense(kq, d_model, d_model)
    wk, bk = _dense(kk, d_model, d_model)
    wv, bv = _dense(kv, d_model, d_model)
    wo, bo = _dense(ko, d_model, d_model)
    return {
        "wq_w": wq, "wq_b": bq,
        "wkv_w": jnp.concatenate([wk, wv], axis=1),        # [D, 2D] bf16 (fused KV)
        "wkv_b": jnp.concatenate([bk, bv], axis=1),
        "wo_w": wo, "wo_b": bo,
    }


def _ffn_params(key, d_model, ffn_hidden):
    k1, k2 = jax.random.split(key)
    w1, b1 = _dense(k1, ffn_hidden, d_model)
    w2, b2 = _dense(k2, d_model, ffn_hidden)
    return {"l1_w": w1, "l1_b": b1, "l2_w": w2, "l2_b": b2}


def init_params(key, enc_vocab, dec_vocab, d_model, n_head, ffn_hidden, n_layers,
                max_len, src_pad_idx, trg_pad_idx):
    keys = jax.random.split(key, 8)
    D = d_model

    enc_tok = jax.random.normal(keys[0], (enc_vocab, D), jnp.float32) * 0.1
    enc_tok = enc_tok.at[src_pad_idx].set(0.0)     # nn.Embedding(padding_idx)
    dec_tok = jax.random.normal(keys[1], (dec_vocab, D), jnp.float32) * 0.1
    dec_tok = dec_tok.at[trg_pad_idx].set(0.0)

    ones = jnp.ones((1, D), jnp.float32)
    zeros = jnp.zeros((1, D), jnp.float32)

    def enc_layer_params(k):
        ka, kf = jax.random.split(k)
        return {
            "attn": _mha_self_params(ka, D),
            "ffn": _ffn_params(kf, D, ffn_hidden),
            "norm1_g": ones, "norm1_b": zeros,
            "norm2_g": ones, "norm2_b": zeros,
        }

    def dec_layer_params(k):
        ka, kc, kf = jax.random.split(k, 3)
        return {
            "self_attn": _mha_self_params(ka, D),
            "cross_attn": _mha_cross_params(kc, D),
            "ffn": _ffn_params(kf, D, ffn_hidden),
            "norm1_g": ones, "norm1_b": zeros,
            "norm2_g": ones, "norm2_b": zeros,
            "norm3_g": ones, "norm3_b": zeros,
        }

    enc_keys = jax.random.split(keys[2], n_layers)
    dec_keys = jax.random.split(keys[3], n_layers)
    out_w, out_b = _dense(keys[4], dec_vocab, D)           # [D, V] bf16 vocab projection

    return {
        "enc_tok_emb": enc_tok,
        "dec_tok_emb": dec_tok,
        "pos_encoding": sinusoidal_encoding(max_len, D),
        "enc_layers": [enc_layer_params(k) for k in enc_keys],
        "dec_layers": [dec_layer_params(k) for k in dec_keys],
        "out_w": out_w,
        "out_b": out_b,
    }


# ---------------------------------------------------------------------------
if __name__ == "__main__":
    B = 2
    max_len = 8
    enc_vocab_size = 32
    dec_vocab_size = 32
    d_model = 32
    n_head = 4
    ffn_hidden = 64
    n_layers = 2
    src_pad_idx = 1
    trg_pad_idx = 1
    trg_sos_idx = 2  # unused in forward (only used for generation)

    key = jax.random.PRNGKey(0)
    k_src, k_trg, k_par = jax.random.split(key, 3)

    src = jax.random.randint(k_src, (B, max_len), 0, enc_vocab_size, dtype=jnp.int32)
    trg = jax.random.randint(k_trg, (B, max_len), 0, dec_vocab_size, dtype=jnp.int32)
    # insert some pad tokens so the masks actually do something
    src = src.at[:, -1].set(src_pad_idx)
    trg = trg.at[:, -2:].set(trg_pad_idx)

    params = init_params(k_par, enc_vocab_size, dec_vocab_size, d_model, n_head,
                         ffn_hidden, n_layers, max_len, src_pad_idx, trg_pad_idx)

    fwd = jax.jit(functools.partial(transformer_forward,
                                    src_pad_idx=src_pad_idx,
                                    trg_pad_idx=trg_pad_idx,
                                    n_head=n_head))
    out = fwd(params, src, trg)
    out = jax.block_until_ready(out)
    assert out.shape == (B, max_len, dec_vocab_size)
    assert jnp.all(jnp.isfinite(out))
    print("KERNEL_OK")
</pallas_src>

<mosaic_0001>
module attributes {stable_mosaic.version = 11 : i64} {
  func.func @linear_kernel_nok(%arg0: i32, %arg1: i32, %arg2: memref<16x32xbf16, #tpu.memory_space<vmem>>, %arg3: memref<32x96xbf16, #tpu.memory_space<vmem>>, %arg4: memref<1x96xf32, #tpu.memory_space<vmem>>, %arg5: memref<16x96xbf16, #tpu.memory_space<vmem>>) attributes {dimension_semantics = [#tpu.dimension_semantics<parallel>, #tpu.dimension_semantics<parallel>], iteration_bounds = array<i64: 1, 1>, scalar_prefetch = 0 : i64, scratch_operands = 0 : i64, tpu.core_type = #tpu.core_type<tc>, window_params = [{transform_indices = @transform_0, window_bounds = array<i64: 16, 32>}, {transform_indices = @transform_1, window_bounds = array<i64: 32, 96>}, {transform_indices = @transform_2, window_bounds = array<i64: 1, 96>}, {transform_indices = @transform_3, window_bounds = array<i64: 16, 96>}]} {
    %c0 = arith.constant 0 : index
    %c0_0 = arith.constant 0 : index
    %0 = vector.load %arg2[%c0, %c0_0] : memref<16x32xbf16, #tpu.memory_space<vmem>>, vector<16x32xbf16>
    %c0_1 = arith.constant 0 : index
    %c0_2 = arith.constant 0 : index
    %1 = vector.load %arg3[%c0_1, %c0_2] : memref<32x96xbf16, #tpu.memory_space<vmem>>, vector<32x96xbf16>
    %cst = arith.constant dense<0.000000e+00> : vector<16x96xf32>
    %2 = tpu.matmul %0, %1, %cst {dimension_numbers = #tpu.dot_dimension_numbers<[1], [0], [0], [1], [0, 0, 1, 1], [], []>} : vector<16x32xbf16>, vector<32x96xbf16>, vector<16x96xf32> -> vector<16x96xf32>
    %c0_3 = arith.constant 0 : index
    %c0_4 = arith.constant 0 : index
    %3 = vector.load %arg4[%c0_3, %c0_4] : memref<1x96xf32, #tpu.memory_space<vmem>>, vector<1x96xf32>
    %4 = vector.broadcast %3 : vector<1x96xf32> to vector<16x96xf32>
    %5 = arith.addf %2, %4 : vector<16x96xf32>
    %6 = arith.truncf %5 : vector<16x96xf32> to vector<16x96xbf16>
    %c0_5 = arith.constant 0 : index
    %c0_6 = arith.constant 0 : index
    %7 = vector.load %arg5[%c0_5, %c0_6] : memref<16x96xbf16, #tpu.memory_space<vmem>>, vector<16x96xbf16>
    tpu.vector_store %arg5[%c0_5, %c0_6], %6 {strides = array<i32>} : memref<16x96xbf16, #tpu.memory_space<vmem>>, vector<16x96xbf16>,
    return
  }
  func.func @transform_0(%arg0: i32, %arg1: i32) -> (i32, i32) {
    %c0_i32 = arith.constant 0 : i32
    %c0_i32_0 = arith.constant 0 : i32
    return %arg0, %c0_i32 : i32, i32
  }
  func.func @transform_1(%arg0: i32, %arg1: i32) -> (i32, i32) {
    %c0_i32 = arith.constant 0 : i32
    %c0_i32_0 = arith.constant 0 : i32
    return %c0_i32, %arg1 : i32, i32
  }
  func.func @transform_2(%arg0: i32, %arg1: i32) -> (i32, i32) {
    %c0_i32 = arith.constant 0 : i32
    %c0_i32_0 = arith.constant 0 : i32
    return %c0_i32, %arg1 : i32, i32
  }
  func.func @transform_3(%arg0: i32, %arg1: i32) -> (i32, i32) {
    %c0_i32 = arith.constant 0 : i32
    return %arg0, %arg1 : i32, i32
  }
}

module attributes {stable_mosaic.version = 11 : i64} {
  func.func @linear_ln_kernel_nok(%arg0: i32, %arg1: memref<16x32xbf16, #tpu.memory_space<vmem>>, %arg2: memref<32x32xbf16, #tpu.memory_space<vmem>>, %arg3: memref<1x32xf32, #tpu.memory_space<vmem>>, %arg4: memref<16x32xbf16, #tpu.memory_space<vmem>>, %arg5: memref<1x32xf32, #tpu.memory_space<vmem>>, %arg6: memref<1x32xf32, #tpu.memory_space<vmem>>, %arg7: memref<16x32xbf16, #tpu.memory_space<vmem>>) attributes {dimension_semantics = [#tpu.dimension_semantics<parallel>], iteration_bounds = array<i64: 1>, scalar_prefetch = 0 : i64, scratch_operands = 0 : i64, tpu.core_type = #tpu.core_type<tc>, window_params = [{transform_indices = @transform_0, window_bounds = array<i64: 16, 32>}, {pipeline_mode = #tpu.pipeline_mode<synchronous>, transform_indices = @transform_1, window_bounds = array<i64: 32, 32>}, {pipeline_mode = #tpu.pipeline_mode<synchronous>, transform_indices = @transform_2, window_bounds = array<i64: 1, 32>}, {transform_indices = @transform_3, window_bounds = array<i64: 16, 32>}, {pipeline_mode = #tpu.pipeline_mode<synchronous>, transform_indices = @transform_4, window_bounds = array<i64: 1, 32>}, {pipeline_mode = #tpu.pipeline_mode<synchronous>, transform_indices = @transform_5, window_bounds = array<i64: 1, 32>}, {transform_indices = @transform_6, window_bounds = array<i64: 16, 32>}]} {
    %c0 = arith.constant 0 : index
    %c0_0 = arith.constant 0 : index
    %0 = vector.load %arg1[%c0, %c0_0] : memref<16x32xbf16, #tpu.memory_space<vmem>>, vector<16x32xbf16>
    %c0_1 = arith.constant 0 : index
    %c0_2 = arith.constant 0 : index
    %1 = vector.load %arg2[%c0_1, %c0_2] : memref<32x32xbf16, #tpu.memory_space<vmem>>, vector<32x32xbf16>
    %cst = arith.constant dense<0.000000e+00> : vector<16x32xf32>
    %2 = tpu.matmul %0, %1, %cst {dimension_numbers = #tpu.dot_dimension_numbers<[1], [0], [0], [1], [0, 0, 1, 1], [], []>} : vector<16x32xbf16>, vector<32x32xbf16>, vector<16x32xf32> -> vector<16x32xf32>
    %c0_3 = arith.constant 0 : index
    %c0_4 = arith.constant 0 : index
    %3 = vector.load %arg3[%c0_3, %c0_4] : memref<1x32xf32, #tpu.memory_space<vmem>>, vector<1x32xf32>
    %4 = vector.broadcast %3 : vector<1x32xf32> to vector<16x32xf32>
    %5 = arith.addf %2, %4 : vector<16x32xf32>
    %c0_5 = arith.constant 0 : index
    %c0_6 = arith.constant 0 : index
    %6 = vector.load %arg4[%c0_5, %c0_6] : memref<16x32xbf16, #tpu.memory_space<vmem>>, vector<16x32xbf16>
    %7 = arith.extf %6 : vector<16x32xbf16> to vector<16x32xf32>
    %8 = arith.addf %5, %7 : vector<16x32xf32>
    %c0_7 = arith.constant 0 : index
    %c0_8 = arith.constant 0 : index
    %9 = vector.load %arg5[%c0_7, %c0_8] : memref<1x32xf32, #tpu.memory_space<vmem>>, vector<1x32xf32>
    %c0_9 = arith.constant 0 : index
    %c0_10 = arith.constant 0 : index
    %10 = vector.load %arg6[%c0_9, %c0_10] : memref<1x32xf32, #tpu.memory_space<vmem>>, vector<1x32xf32>
    %cst_11 = arith.constant dense<0.000000e+00> : vector<16xf32>
    %11 = vector.multi_reduction <add>, %8, %cst_11 [1] : vector<16x32xf32> to vector<16xf32>
    %12 = vector.shape_cast %11 : vector<16xf32> to vector<16x1xf32>
    %cst_12 = arith.constant 3.200000e+01 : f32
    %13 = vector.broadcast %cst_12 : f32 to vector<16x1xf32>
    %14 = arith.divf %12, %13 : vector<16x1xf32>
    %15 = vector.broadcast %14 : vector<16x1xf32> to vector<16x32xf32>
    %16 = arith.subf %8, %15 : vector<16x32xf32>
    %17 = arith.mulf %16, %16 : vector<16x32xf32>
    %cst_13 = arith.constant dense<0.000000e+00> : vector<16xf32>
    %18 = vector.multi_reduction <add>, %17, %cst_13 [1] : vector<16x32xf32> to vector<16xf32>
    %19 = vector.shape_cast %18 : vector<16xf32> to vector<16x1xf32>
    %cst_14 = arith.constant 3.200000e+01 : f32
    %20 = vector.broadcast %cst_14 : f32 to vector<16x1xf32>
    %21 = arith.divf %19, %20 : vector<16x1xf32>
    %cst_15 = arith.constant 9.99999996E-13 : f32
    %22 = vector.broadcast %cst_15 : f32 to vector<16x1xf32>
    %23 = arith.addf %21, %22 : vector<16x1xf32>
    %24 = math.rsqrt %23 : vector<16x1xf32>
    %25 = vector.broadcast %14 : vector<16x1xf32> to vector<16x32xf32>
    %26 = arith.subf %8, %25 : vector<16x32xf32>
    %27 = vector.broadcast %9 : vector<1x32xf32> to vector<16x32xf32>
    %28 = arith.mulf %27, %26 : vector<16x32xf32>
    %29 = vector.broadcast %24 : vector<16x1xf32> to vector<16x32xf32>
    %30 = arith.mulf %28, %29 : vector<16x32xf32>
    %31 = vector.broadcast %10 : vector<1x32xf32> to vector<16x32xf32>
    %32 = arith.addf %30, %31 : vector<16x32xf32>
    %33 = arith.truncf %32 : vector<16x32xf32> to vector<16x32xbf16>
    %c0_16 = arith.constant 0 : index
    %c0_17 = arith.constant 0 : index
    %34 = vector.load %arg7[%c0_16, %c0_17] : memref<16x32xbf16, #tpu.memory_space<vmem>>, vector<16x32xbf16>
    tpu.vector_store %arg7[%c0_16, %c0_17], %33 {strides = array<i32>} : memref<16x32xbf16, #tpu.memory_space<vmem>>, vector<16x32xbf16>,
    return
  }
  func.func @transform_0(%arg0: i32) -> (i32, i32) {
    %c0_i32 = arith.constant 0 : i32
    %c0_i32_0 = arith.constant 0 : i32
    return %arg0, %c0_i32 : i32, i32
  }
  func.func @transform_1(%arg0: i32) -> (i32, i32) {
    %c0_i32 = arith.constant 0 : i32
    %c0_i32_0 = arith.constant 0 : i32
    %c0_i32_1 = arith.constant 0 : i32
    return %c0_i32, %c0_i32_0 : i32, i32
  }
  func.func @transform_2(%arg0: i32) -> (i32, i32) {
    %c0_i32 = arith.constant 0 : i32
    %c0_i32_0 = arith.constant 0 : i32
    %c0_i32_1 = arith.constant 0 : i32
    return %c0_i32, %c0_i32_0 : i32, i32
  }
  func.func @transform_3(%arg0: i32) -> (i32, i32) {
    %c0_i32 = arith.constant 0 : i32
    %c0_i32_0 = arith.constant 0 : i32
    return %arg0, %c0_i32 : i32, i32
  }
  func.func @transform_4(%arg0: i32) -> (i32, i32) {
    %c0_i32 = arith.constant 0 : i32
    %c0_i32_0 = arith.constant 0 : i32
    %c0_i32_1 = arith.constant 0 : i32
    return %c0_i32, %c0_i32_0 : i32, i32
  }
  func.func @transform_5(%arg0: i32) -> (i32, i32) {
    %c0_i32 = arith.constant 0 : i32
    %c0_i32_0 = arith.constant 0 : i32
    %c0_i32_1 = arith.constant 0 : i32
    return %c0_i32, %c0_i32_0 : i32, i32
  }
  func.func @transform_6(%arg0: i32) -> (i32, i32) {
    %c0_i32 = arith.constant 0 : i32
    %c0_i32_0 = arith.constant 0 : i32
    return %arg0, %c0_i32 : i32, i32
  }
}

module attributes {stable_mosaic.version = 11 : i64} {
  func.func @self_attn_kernel(%arg0: i32, %arg1: memref<1x8x96xbf16, #tpu.memory_space<vmem>>, %arg2: memref<1x1x8xf32, #tpu.memory_space<vmem>>, %arg3: memref<1x8x1xf32, #tpu.memory_space<vmem>>, %arg4: memref<1x8x32xbf16, #tpu.memory_space<vmem>>) attributes {dimension_semantics = [#tpu.dimension_semantics<parallel>], iteration_bounds = array<i64: 2>, scalar_prefetch = 0 : i64, scratch_operands = 0 : i64, tpu.core_type = #tpu.core_type<tc>, window_params = [{transform_indices = @transform_0, window_bounds = array<i64: 1, 8, 96>}, {transform_indices = @transform_1, window_bounds = array<i64: 1, 1, 8>}, {transform_indices = @transform_2, window_bounds = array<i64: 1, 8, 1>}, {transform_indices = @transform_3, window_bounds = array<i64: 1, 8, 32>}]} {
    %c0 = arith.constant 0 : index
    %c0_0 = arith.constant 0 : index
    %c0_1 = arith.constant 0 : index
    %0 = vector.load %arg3[%c0, %c0_0, %c0_1] : memref<1x8x1xf32, #tpu.memory_space<vmem>>, vector<1x8x1xf32>
    %1 = vector.shape_cast %0 : vector<1x8x1xf32> to vector<8x1xf32>
    %c0_2 = arith.constant 0 : index
    %c0_3 = arith.constant 0 : index
    %c0_4 = arith.constant 0 : index
    %2 = vector.load %arg2[%c0_2, %c0_3, %c0_4] : memref<1x1x8xf32, #tpu.memory_space<vmem>>, vector<1x1x8xf32>
    %3 = vector.shape_cast %2 : vector<1x1x8xf32> to vector<1x8xf32>
    %4 = vector.broadcast %1 : vector<8x1xf32> to vector<8x8xf32>
    %5 = vector.broadcast %3 : vector<1x8xf32> to vector<8x8xf32>
    %6 = arith.mulf %4, %5 : vector<8x8xf32>
    %cst = arith.constant 0.000000e+00 : f32
    %7 = vector.broadcast %cst : f32 to vector<8x8xf32>
    %8 = arith.cmpf oeq, %6, %7 : vector<8x8xf32>
    %c0_5 = arith.constant 0 : index
    %c0_6 = arith.constant 0 : index
    %c0_7 = arith.constant 0 : index
    %9 = vector.load %arg1[%c0_5, %c0_6, %c0_7] : memref<1x8x96xbf16, #tpu.memory_space<vmem>>, vector<1x8x96xbf16>
    %10 = vector.shape_cast %9 : vector<1x8x96xbf16> to vector<8x96xbf16>
    %11 = vector.extract_strided_slice %10 {offsets = [0, 0], sizes = [8, 32], strides = [1, 1]} : vector<8x96xbf16> to vector<8x32xbf16>
    %12 = vector.extract_strided_slice %10 {offsets = [0, 32], sizes = [8, 32], strides = [1, 1]} : vector<8x96xbf16> to vector<8x32xbf16>
    %13 = vector.extract_strided_slice %10 {offsets = [0, 64], sizes = [8, 32], strides = [1, 1]} : vector<8x96xbf16> to vector<8x32xbf16>
    %14 = vector.extract_strided_slice %11 {offsets = [0, 0], sizes = [8, 8], strides = [1, 1]} : vector<8x32xbf16> to vector<8x8xbf16>
    %15 = arith.extf %14 : vector<8x8xbf16> to vector<8x8xf32>
    %cst_8 = arith.constant 0.353553385 : f32
    %16 = vector.broadcast %cst_8 : f32 to vector<8x8xf32>
    %17 = arith.mulf %15, %16 : vector<8x8xf32>
    %18 = arith.truncf %17 : vector<8x8xf32> to vector<8x8xbf16>
    %19 = vector.extract_strided_slice %12 {offsets = [0, 0], sizes = [8, 8], strides = [1, 1]} : vector<8x32xbf16> to vector<8x8xbf16>
    %20 = vector.extract_strided_slice %13 {offsets = [0, 0], sizes = [8, 8], strides = [1, 1]} : vector<8x32xbf16> to vector<8x8xbf16>
    %cst_9 = arith.constant dense<0.000000e+00> : vector<8x8xf32>
    %21 = tpu.matmul %18, %19, %cst_9 {dimension_numbers = #tpu.dot_dimension_numbers<[1], [1], [0], [0], [0, 0, 1, 0], [], []>} : vector<8x8xbf16>, vector<8x8xbf16>, vector<8x8xf32> -> vector<8x8xf32>
    %cst_10 = arith.constant -1.000000e+04 : f32
    %22 = vector.broadcast %cst_10 : f32 to vector<8x8xf32>
    %23 = arith.select %8, %22, %21 : vector<8x8xi1>, vector<8x8xf32>
    %cst_11 = arith.constant dense<0xFF800000> : vector<8xf32>
    %24 = vector.multi_reduction <maximumf>, %23, %cst_11 [1] : vector<8x8xf32> to vector<8xf32>
    %25 = vector.shape_cast %24 : vector<8xf32> to vector<8x1xf32>
    %26 = vector.broadcast %25 : vector<8x1xf32> to vector<8x8xf32>
    %27 = arith.subf %23, %26 : vector<8x8xf32>
    %28 = math.exp %27 : vector<8x8xf32>
    %cst_12 = arith.constant dense<0.000000e+00> : vector<8xf32>
    %29 = vector.multi_reduction <add>, %28, %cst_12 [1] : vector<8x8xf32> to vector<8xf32>
    %30 = vector.shape_cast %29 : vector<8xf32> to vector<8x1xf32>
    %31 = tpu.reciprocal %30 {approx = true} : vector<8x1xf32> -> vector<8x1xf32>
    %32 = vector.broadcast %31 : vector<8x1xf32> to vector<8x8xf32>
    %33 = arith.mulf %28, %32 : vector<8x8xf32>
    %34 = arith.truncf %33 : vector<8x8xf32> to vector<8x8xbf16>
    %cst_13 = arith.constant dense<0.000000e+00> : vector<8x8xf32>
    %35 = tpu.matmul %34, %20, %cst_13 {dimension_numbers = #tpu.dot_dimension_numbers<[1], [0], [0], [1], [0, 0, 1, 1], [], []>} : vector<8x8xbf16>, vector<8x8xbf16>, vector<8x8xf32> -> vector<8x8xf32>
    %36 = vector.extract_strided_slice %11 {offsets = [0, 8], sizes = [8, 8], strides = [1, 1]} : vector<8x32xbf16> to vector<8x8xbf16>
    %37 = arith.extf %36 : vector<8x8xbf16> to vector<8x8xf32>
    %cst_14 = arith.constant 0.353553385 : f32
    %38 = vector.broadcast %cst_14 : f32 to vector<8x8xf32>
    %39 = arith.mulf %37, %38 : vector<8x8xf32>
    %40 = arith.truncf %39 : vector<8x8xf32> to vector<8x8xbf16>
    %41 = vector.extract_strided_slice %12 {offsets = [0, 8], sizes = [8, 8], strides = [1, 1]} : vector<8x32xbf16> to vector<8x8xbf16>
    %42 = vector.extract_strided_slice %13 {offsets = [0, 8], sizes = [8, 8], strides = [1, 1]} : vector<8x32xbf16> to vector<8x8xbf16>
    %cst_15 = arith.constant dense<0.000000e+00> : vector<8x8xf32>
    %43 = tpu.matmul %40, %41, %cst_15 {dimension_numbers = #tpu.dot_dimension_numbers<[1], [1], [0], [0], [0, 0, 1, 0], [], []>} : vector<8x8xbf16>, vector<8x8xbf16>, vector<8x8xf32> -> vector<8x8xf32>
    %cst_16 = arith.constant -1.000000e+04 : f32
    %44 = vector.broadcast %cst_16 : f32 to vector<8x8xf32>
    %45 = arith.select %8, %44, %43 : vector<8x8xi1>, vector<8x8xf32>
    %cst_17 = arith.constant dense<0xFF800000> : vector<8xf32>
    %46 = vector.multi_reduction <maximumf>, %45, %cst_17 [1] : vector<8x8xf32> to vector<8xf32>
    %47 = vector.shape_cast %46 : vector<8xf32> to vector<8x1xf32>
    %48 = vector.broadcast %47 : vector<8x1xf32> to vector<8x8xf32>
    %49 = arith.subf %45, %48 : vector<8x8xf32>
    %50 = math.exp %49 : vector<8x8xf32>
    %cst_18 = arith.constant dense<0.000000e+00> : vector<8xf32>
    %51 = vector.multi_reduction <add>, %50, %cst_18 [1] : vector<8x8xf32> to vector<8xf32>
    %52 = vector.shape_cast %51 : vector<8xf32> to vector<8x1xf32>
    %53 = tpu.reciprocal %52 {approx = true} : vector<8x1xf32> -> vector<8x1xf32>
    %54 = vector.broadcast %53 : vector<8x1xf32> to vector<8x8xf32>
    %55 = arith.mulf %50, %54 : vector<8x8xf32>
    %56 = arith.truncf %55 : vector<8x8xf32> to vector<8x8xbf16>
    %cst_19 = arith.constant dense<0.000000e+00> : vector<8x8xf32>
    %57 = tpu.matmul %56, %42, %cst_19 {dimension_numbers = #tpu.dot_dimension_numbers<[1], [0], [0], [1], [0, 0, 1, 1], [], []>} : vector<8x8xbf16>, vector<8x8xbf16>, vector<8x8xf32> -> vector<8x8xf32>
    %58 = vector.extract_strided_slice %11 {offsets = [0, 16], sizes = [8, 8], strides = [1, 1]} : vector<8x32xbf16> to vector<8x8xbf16>
    %59 = arith.extf %58 : vector<8x8xbf16> to vector<8x8xf32>
    %cst_20 = arith.constant 0.353553385 : f32
    %60 = vector.broadcast %cst_20 : f32 to vector<8x8xf32>
    %61 = arith.mulf %59, %60 : vector<8x8xf32>
    %62 = arith.truncf %61 : vector<8x8xf32> to vector<8x8xbf16>
    %63 = vector.extract_strided_slice %12 {offsets = [0, 16], sizes = [8, 8], strides = [1, 1]} : vector<8x32xbf16> to vector<8x8xbf16>
    %64 = vector.extract_strided_slice %13 {offsets = [0, 16], sizes = [8, 8], strides = [1, 1]} : vector<8x32xbf16> to vector<8x8xbf16>
    %cst_21 = arith.constant dense<0.000000e+00> : vector<8x8xf32>
    %65 = tpu.matmul %62, %63, %cst_21 {dimension_numbers = #tpu.dot_dimension_numbers<[1], [1], [0], [0], [0, 0, 1, 0], [], []>} : vector<8x8xbf16>, vector<8x8xbf16>, vector<8x8xf32> -> vector<8x8xf32>
    %cst_22 = arith.constant -1.000000e+04 : f32
    %66 = vector.broadcast %cst_22 : f32 to vector<8x8xf32>
    %67 = arith.select %8, %66, %65 : vector<8x8xi1>, vector<8x8xf32>
    %cst_23 = arith.constant dense<0xFF800000> : vector<8xf32>
    %68 = vector.multi_reduction <maximumf>, %67, %cst_23 [1] : vector<8x8xf32> to vector<8xf32>
    %69 = vector.shape_cast %68 : vector<8xf32> to vector<8x1xf32>
    %70 = vector.broadcast %69 : vector<8x1xf32> to vector<8x8xf32>
    %71 = arith.subf %67, %70 : vector<8x8xf32>
    %72 = math.exp %71 : vector<8x8xf32>
    %cst_24 = arith.constant dense<0.000000e+00> : vector<8xf32>
    %73 = vector.multi_reduction <add>, %72, %cst_24 [1] : vector<8x8xf32> to vector<8xf32>
    %74 = vector.shape_cast %73 : vector<8xf32> to vector<8x1xf32>
    %75 = tpu.reciprocal %74 {approx = true} : vector<8x1xf32> -> vector<8x1xf32>
    %76 = vector.broadcast %75 : vector<8x1xf32> to vector<8x8xf32>
    %77 = arith.mulf %72, %76 : vector<8x8xf32>
    %78 = arith.truncf %77 : vector<8x8xf32> to vector<8x8xbf16>
    %cst_25 = arith.constant dense<0.000000e+00> : vector<8x8xf32>
    %79 = tpu.matmul %78, %64, %cst_25 {dimension_numbers = #tpu.dot_dimension_numbers<[1], [0], [0], [1], [0, 0, 1, 1], [], []>} : vector<8x8xbf16>, vector<8x8xbf16>, vector<8x8xf32> -> vector<8x8xf32>
    %80 = vector.extract_strided_slice %11 {offsets = [0, 24], sizes = [8, 8], strides = [1, 1]} : vector<8x32xbf16> to vector<8x8xbf16>
    %81 = arith.extf %80 : vector<8x8xbf16> to vector<8x8xf32>
    %cst_26 = arith.constant 0.353553385 : f32
    %82 = vector.broadcast %cst_26 : f32 to vector<8x8xf32>
    %83 = arith.mulf %81, %82 : vector<8x8xf32>
    %84 = arith.truncf %83 : vector<8x8xf32> to vector<8x8xbf16>
    %85 = vector.extract_strided_slice %12 {offsets = [0, 24], sizes = [8, 8], strides = [1, 1]} : vector<8x32xbf16> to vector<8x8xbf16>
    %86 = vector.extract_strided_slice %13 {offsets = [0, 24], sizes = [8, 8], strides = [1, 1]} : vector<8x32xbf16> to vector<8x8xbf16>
    %cst_27 = arith.constant dense<0.000000e+00> : vector<8x8xf32>
    %87 = tpu.matmul %84, %85, %cst_27 {dimension_numbers = #tpu.dot_dimension_numbers<[1], [1], [0], [0], [0, 0, 1, 0], [], []>} : vector<8x8xbf16>, vector<8x8xbf16>, vector<8x8xf32> -> vector<8x8xf32>
    %cst_28 = arith.constant -1.000000e+04 : f32
    %88 = vector.broadcast %cst_28 : f32 to vector<8x8xf32>
    %89 = arith.select %8, %88, %87 : vector<8x8xi1>, vector<8x8xf32>
    %cst_29 = arith.constant dense<0xFF800000> : vector<8xf32>
    %90 = vector.multi_reduction <maximumf>, %89, %cst_29 [1] : vector<8x8xf32> to vector<8xf32>
    %91 = vector.shape_cast %90 : vector<8xf32> to vector<8x1xf32>
    %92 = vector.broadcast %91 : vector<8x1xf32> to vector<8x8xf32>
    %93 = arith.subf %89, %92 : vector<8x8xf32>
    %94 = math.exp %93 : vector<8x8xf32>
    %cst_30 = arith.constant dense<0.000000e+00> : vector<8xf32>
    %95 = vector.multi_reduction <add>, %94, %cst_30 [1] : vector<8x8xf32> to vector<8xf32>
    %96 = vector.shape_cast %95 : vector<8xf32> to vector<8x1xf32>
    %97 = tpu.reciprocal %96 {approx = true} : vector<8x1xf32> -> vector<8x1xf32>
    %98 = vector.broadcast %97 : vector<8x1xf32> to vector<8x8xf32>
    %99 = arith.mulf %94, %98 : vector<8x8xf32>
    %100 = arith.truncf %99 : vector<8x8xf32> to vector<8x8xbf16>
    %cst_31 = arith.constant dense<0.000000e+00> : vector<8x8xf32>
    %101 = tpu.matmul %100, %86, %cst_31 {dimension_numbers = #tpu.dot_dimension_numbers<[1], [0], [0], [1], [0, 0, 1, 1], [], []>} : vector<8x8xbf16>, vector<8x8xbf16>, vector<8x8xf32> -> vector<8x8xf32>
    %102 = tpu.concatenate %35, %57, %79, %101 in 1 : vector<8x8xf32>, vector<8x8xf32>, vector<8x8xf32>, vector<8x8xf32> -> vector<8x32xf32>
    %103 = arith.truncf %102 : vector<8x32xf32> to vector<8x32xbf16>
    %c0_32 = arith.constant 0 : index
    %c0_33 = arith.constant 0 : index
    %c0_34 = arith.constant 0 : index
    %104 = vector.load %arg4[%c0_32, %c0_33, %c0_34] : memref<1x8x32xbf16, #tpu.memory_space<vmem>>, vector<1x8x32xbf16>
    %105 = vector.shape_cast %104 : vector<1x8x32xbf16> to vector<8x32xbf16>
    %106 = vector.shape_cast %103 : vector<8x32xbf16> to vector<1x8x32xbf16>
    tpu.vector_store %arg4[%c0_32, %c0_33, %c0_34], %106 {strides = array<i32>} : memref<1x8x32xbf16, #tpu.memory_space<vmem>>, vector<1x8x32xbf16>,
    return
  }
  func.func @transform_0(%arg0: i32) -> (i32, i32, i32) {
    %c0_i32 = arith.constant 0 : i32
    %c0_i32_0 = arith.constant 0 : i32
    %c0_i32_1 = arith.constant 0 : i32
    return %arg0, %c0_i32, %c0_i32_0 : i32, i32, i32
  }
  func.func @transform_1(%arg0: i32) -> (i32, i32, i32) {
    %c0_i32 = arith.constant 0 : i32
    %c0_i32_0 = arith.constant 0 : i32
    %c0_i32_1 = arith.constant 0 : i32
    return %arg0, %c0_i32, %c0_i32_0 : i32, i32, i32
  }
  func.func @transform_2(%arg0: i32) -> (i32, i32, i32) {
    %c0_i32 = arith.constant 0 : i32
    %c0_i32_0 = arith.constant 0 : i32
    %c0_i32_1 = arith.constant 0 : i32
    return %arg0, %c0_i32, %c0_i32_0 : i32, i32, i32
  }
  func.func @transform_3(%arg0: i32) -> (i32, i32, i32) {
    %c0_i32 = arith.constant 0 : i32
    %c0_i32_0 = arith.constant 0 : i32
    %c0_i32_1 = arith.constant 0 : i32
    return %arg0, %c0_i32, %c0_i32_0 : i32, i32, i32
  }
}

module attributes {stable_mosaic.version = 11 : i64} {
  func.func @linear_kernel_nok(%arg0: i32, %arg1: i32, %arg2: memref<16x32xbf16, #tpu.memory_space<vmem>>, %arg3: memref<32x64xbf16, #tpu.memory_space<vmem>>, %arg4: memref<1x64xf32, #tpu.memory_space<vmem>>, %arg5: memref<16x64xbf16, #tpu.memory_space<vmem>>) attributes {dimension_semantics = [#tpu.dimension_semantics<parallel>, #tpu.dimension_semantics<parallel>], iteration_bounds = array<i64: 1, 1>, scalar_prefetch = 0 : i64, scratch_operands = 0 : i64, tpu.core_type = #tpu.core_type<tc>, window_params = [{transform_indices = @transform_0, window_bounds = array<i64: 16, 32>}, {transform_indices = @transform_1, window_bounds = array<i64: 32, 64>}, {transform_indices = @transform_2, window_bounds = array<i64: 1, 64>}, {transform_indices = @transform_3, window_bounds = array<i64: 16, 64>}]} {
    %c0 = arith.constant 0 : index
    %c0_0 = arith.constant 0 : index
    %0 = vector.load %arg2[%c0, %c0_0] : memref<16x32xbf16, #tpu.memory_space<vmem>>, vector<16x32xbf16>
    %c0_1 = arith.constant 0 : index
    %c0_2 = arith.constant 0 : index
    %1 = vector.load %arg3[%c0_1, %c0_2] : memref<32x64xbf16, #tpu.memory_space<vmem>>, vector<32x64xbf16>
    %cst = arith.constant dense<0.000000e+00> : vector<16x64xf32>
    %2 = tpu.matmul %0, %1, %cst {dimension_numbers = #tpu.dot_dimension_numbers<[1], [0], [0], [1], [0, 0, 1, 1], [], []>} : vector<16x32xbf16>, vector<32x64xbf16>, vector<16x64xf32> -> vector<16x64xf32>
    %c0_3 = arith.constant 0 : index
    %c0_4 = arith.constant 0 : index
    %3 = vector.load %arg4[%c0_3, %c0_4] : memref<1x64xf32, #tpu.memory_space<vmem>>, vector<1x64xf32>
    %4 = vector.broadcast %3 : vector<1x64xf32> to vector<16x64xf32>
    %5 = arith.addf %2, %4 : vector<16x64xf32>
    %cst_5 = arith.constant 0.000000e+00 : f32
    %6 = vector.broadcast %cst_5 : f32 to vector<16x64xf32>
    %7 = arith.maximumf %5, %6 : vector<16x64xf32>
    %8 = arith.truncf %7 : vector<16x64xf32> to vector<16x64xbf16>
    %c0_6 = arith.constant 0 : index
    %c0_7 = arith.constant 0 : index
    %9 = vector.load %arg5[%c0_6, %c0_7] : memref<16x64xbf16, #tpu.memory_space<vmem>>, vector<16x64xbf16>
    tpu.vector_store %arg5[%c0_6, %c0_7], %8 {strides = array<i32>} : memref<16x64xbf16, #tpu.memory_space<vmem>>, vector<16x64xbf16>,
    return
  }
  func.func @transform_0(%arg0: i32, %arg1: i32) -> (i32, i32) {
    %c0_i32 = arith.constant 0 : i32
    %c0_i32_0 = arith.constant 0 : i32
    return %arg0, %c0_i32 : i32, i32
  }
  func.func @transform_1(%arg0: i32, %arg1: i32) -> (i32, i32) {
    %c0_i32 = arith.constant 0 : i32
    %c0_i32_0 = arith.constant 0 : i32
    return %c0_i32, %arg1 : i32, i32
  }
  func.func @transform_2(%arg0: i32, %arg1: i32) -> (i32, i32) {
    %c0_i32 = arith.constant 0 : i32
    %c0_i32_0 = arith.constant 0 : i32
    return %c0_i32, %arg1 : i32, i32
  }
  func.func @transform_3(%arg0: i32, %arg1: i32) -> (i32, i32) {
    %c0_i32 = arith.constant 0 : i32
    return %arg0, %arg1 : i32, i32
  }
}

module attributes {stable_mosaic.version = 11 : i64} {
  func.func @linear_kernel_nok(%arg0: i32, %arg1: i32, %arg2: memref<16x32xbf16, #tpu.memory_space<vmem>>, %arg3: memref<32x64xbf16, #tpu.memory_space<vmem>>, %arg4: memref<1x64xf32, #tpu.memory_space<vmem>>, %arg5: memref<16x64xbf16, #tpu.memory_space<vmem>>) attributes {dimension_semantics = [#tpu.dimension_semantics<parallel>, #tpu.dimension_semantics<parallel>], iteration_bounds = array<i64: 1, 1>, scalar_prefetch = 0 : i64, scratch_operands = 0 : i64, tpu.core_type = #tpu.core_type<tc>, window_params = [{transform_indices = @transform_0, window_bounds = array<i64: 16, 32>}, {transform_indices = @transform_1, window_bounds = array<i64: 32, 64>}, {transform_indices = @transform_2, window_bounds = array<i64: 1, 64>}, {transform_indices = @transform_3, window_bounds = array<i64: 16, 64>}]} {
    %c0 = arith.constant 0 : index
    %c0_0 = arith.constant 0 : index
    %0 = vector.load %arg2[%c0, %c0_0] : memref<16x32xbf16, #tpu.memory_space<vmem>>, vector<16x32xbf16>
    %c0_1 = arith.constant 0 : index
    %c0_2 = arith.constant 0 : index
    %1 = vector.load %arg3[%c0_1, %c0_2] : memref<32x64xbf16, #tpu.memory_space<vmem>>, vector<32x64xbf16>
    %cst = arith.constant dense<0.000000e+00> : vector<16x64xf32>
    %2 = tpu.matmul %0, %1, %cst {dimension_numbers = #tpu.dot_dimension_numbers<[1], [0], [0], [1], [0, 0, 1, 1], [], []>} : vector<16x32xbf16>, vector<32x64xbf16>, vector<16x64xf32> -> vector<16x64xf32>
    %c0_3 = arith.constant 0 : index
    %c0_4 = arith.constant 0 : index
    %3 = vector.load %arg4[%c0_3, %c0_4] : memref<1x64xf32, #tpu.memory_space<vmem>>, vector<1x64xf32>
    %4 = vector.broadcast %3 : vector<1x64xf32> to vector<16x64xf32>
    %5 = arith.addf %2, %4 : vector<16x64xf32>
    %6 = arith.truncf %5 : vector<16x64xf32> to vector<16x64xbf16>
    %c0_5 = arith.constant 0 : index
    %c0_6 = arith.constant 0 : index
    %7 = vector.load %arg5[%c0_5, %c0_6] : memref<16x64xbf16, #tpu.memory_space<vmem>>, vector<16x64xbf16>
    tpu.vector_store %arg5[%c0_5, %c0_6], %6 {strides = array<i32>} : memref<16x64xbf16, #tpu.memory_space<vmem>>, vector<16x64xbf16>,
    return
  }
  func.func @transform_0(%arg0: i32, %arg1: i32) -> (i32, i32) {
    %c0_i32 = arith.constant 0 : i32
    %c0_i32_0 = arith.constant 0 : i32
    return %arg0, %c0_i32 : i32, i32
  }
  func.func @transform_1(%arg0: i32, %arg1: i32) -> (i32, i32) {
    %c0_i32 = arith.constant 0 : i32
    %c0_i32_0 = arith.constant 0 : i32
    return %c0_i32, %arg1 : i32, i32
  }
  func.func @transform_2(%arg0: i32, %arg1: i32) -> (i32, i32) {
    %c0_i32 = arith.constant 0 : i32
    %c0_i32_0 = arith.constant 0 : i32
    return %c0_i32, %arg1 : i32, i32
  }
  func.func @transform_3(%arg0: i32, %arg1: i32) -> (i32, i32) {
    %c0_i32 = arith.constant 0 : i32
    return %arg0, %arg1 : i32, i32
  }
}

module attributes {stable_mosaic.version = 11 : i64} {
  func.func @linear_ln_kernel_nok(%arg0: i32, %arg1: memref<16x64xbf16, #tpu.memory_space<vmem>>, %arg2: memref<64x32xbf16, #tpu.memory_space<vmem>>, %arg3: memref<1x32xf32, #tpu.memory_space<vmem>>, %arg4: memref<16x32xbf16, #tpu.memory_space<vmem>>, %arg5: memref<1x32xf32, #tpu.memory_space<vmem>>, %arg6: memref<1x32xf32, #tpu.memory_space<vmem>>, %arg7: memref<16x32xbf16, #tpu.memory_space<vmem>>) attributes {dimension_semantics = [#tpu.dimension_semantics<parallel>], iteration_bounds = array<i64: 1>, scalar_prefetch = 0 : i64, scratch_operands = 0 : i64, tpu.core_type = #tpu.core_type<tc>, window_params = [{transform_indices = @transform_0, window_bounds = array<i64: 16, 64>}, {pipeline_mode = #tpu.pipeline_mode<synchronous>, transform_indices = @transform_1, window_bounds = array<i64: 64, 32>}, {pipeline_mode = #tpu.pipeline_mode<synchronous>, transform_indices = @transform_2, window_bounds = array<i64: 1, 32>}, {transform_indices = @transform_3, window_bounds = array<i64: 16, 32>}, {pipeline_mode = #tpu.pipeline_mode<synchronous>, transform_indices = @transform_4, window_bounds = array<i64: 1, 32>}, {pipeline_mode = #tpu.pipeline_mode<synchronous>, transform_indices = @transform_5, window_bounds = array<i64: 1, 32>}, {transform_indices = @transform_6, window_bounds = array<i64: 16, 32>}]} {
    %c0 = arith.constant 0 : index
    %c0_0 = arith.constant 0 : index
    %0 = vector.load %arg1[%c0, %c0_0] : memref<16x64xbf16, #tpu.memory_space<vmem>>, vector<16x64xbf16>
    %c0_1 = arith.constant 0 : index
    %c0_2 = arith.constant 0 : index
    %1 = vector.load %arg2[%c0_1, %c0_2] : memref<64x32xbf16, #tpu.memory_space<vmem>>, vector<64x32xbf16>
    %cst = arith.constant dense<0.000000e+00> : vector<16x32xf32>
    %2 = tpu.matmul %0, %1, %cst {dimension_numbers = #tpu.dot_dimension_numbers<[1], [0], [0], [1], [0, 0, 1, 1], [], []>} : vector<16x64xbf16>, vector<64x32xbf16>, vector<16x32xf32> -> vector<16x32xf32>
    %c0_3 = arith.constant 0 : index
    %c0_4 = arith.constant 0 : index
    %3 = vector.load %arg3[%c0_3, %c0_4] : memref<1x32xf32, #tpu.memory_space<vmem>>, vector<1x32xf32>
    %4 = vector.broadcast %3 : vector<1x32xf32> to vector<16x32xf32>
    %5 = arith.addf %2, %4 : vector<16x32xf32>
    %c0_5 = arith.constant 0 : index
    %c0_6 = arith.constant 0 : index
    %6 = vector.load %arg4[%c0_5, %c0_6] : memref<16x32xbf16, #tpu.memory_space<vmem>>, vector<16x32xbf16>
    %7 = arith.extf %6 : vector<16x32xbf16> to vector<16x32xf32>
    %8 = arith.addf %5, %7 : vector<16x32xf32>
    %c0_7 = arith.constant 0 : index
    %c0_8 = arith.constant 0 : index
    %9 = vector.load %arg5[%c0_7, %c0_8] : memref<1x32xf32, #tpu.memory_space<vmem>>, vector<1x32xf32>
    %c0_9 = arith.constant 0 : index
    %c0_10 = arith.constant 0 : index
    %10 = vector.load %arg6[%c0_9, %c0_10] : memref<1x32xf32, #tpu.memory_space<vmem>>, vector<1x32xf32>
    %cst_11 = arith.constant dense<0.000000e+00> : vector<16xf32>
    %11 = vector.multi_reduction <add>, %8, %cst_11 [1] : vector<16x32xf32> to vector<16xf32>
    %12 = vector.shape_cast %11 : vector<16xf32> to vector<16x1xf32>
    %cst_12 = arith.constant 3.200000e+01 : f32
    %13 = vector.broadcast %cst_12 : f32 to vector<16x1xf32>
    %14 = arith.divf %12, %13 : vector<16x1xf32>
    %15 = vector.broadcast %14 : vector<16x1xf32> to vector<16x32xf32>
    %16 = arith.subf %8, %15 : vector<16x32xf32>
    %17 = arith.mulf %16, %16 : vector<16x32xf32>
    %cst_13 = arith.constant dense<0.000000e+00> : vector<16xf32>
    %18 = vector.multi_reduction <add>, %17, %cst_13 [1] : vector<16x32xf32> to vector<16xf32>
    %19 = vector.shape_cast %18 : vector<16xf32> to vector<16x1xf32>
    %cst_14 = arith.constant 3.200000e+01 : f32
    %20 = vector.broadcast %cst_14 : f32 to vector<16x1xf32>
    %21 = arith.divf %19, %20 : vector<16x1xf32>
    %cst_15 = arith.constant 9.99999996E-13 : f32
    %22 = vector.broadcast %cst_15 : f32 to vector<16x1xf32>
    %23 = arith.addf %21, %22 : vector<16x1xf32>
    %24 = math.rsqrt %23 : vector<16x1xf32>
    %25 = vector.broadcast %14 : vector<16x1xf32> to vector<16x32xf32>
    %26 = arith.subf %8, %25 : vector<16x32xf32>
    %27 = vector.broadcast %9 : vector<1x32xf32> to vector<16x32xf32>
    %28 = arith.mulf %27, %26 : vector<16x32xf32>
    %29 = vector.broadcast %24 : vector<16x1xf32> to vector<16x32xf32>
    %30 = arith.mulf %28, %29 : vector<16x32xf32>
    %31 = vector.broadcast %10 : vector<1x32xf32> to vector<16x32xf32>
    %32 = arith.addf %30, %31 : vector<16x32xf32>
    %33 = arith.truncf %32 : vector<16x32xf32> to vector<16x32xbf16>
    %c0_16 = arith.constant 0 : index
    %c0_17 = arith.constant 0 : index
    %34 = vector.load %arg7[%c0_16, %c0_17] : memref<16x32xbf16, #tpu.memory_space<vmem>>, vector<16x32xbf16>
    tpu.vector_store %arg7[%c0_16, %c0_17], %33 {strides = array<i32>} : memref<16x32xbf16, #tpu.memory_space<vmem>>, vector<16x32xbf16>,
    return
  }
  func.func @transform_0(%arg0: i32) -> (i32, i32) {
    %c0_i32 = arith.constant 0 : i32
    %c0_i32_0 = arith.constant 0 : i32
    return %arg0, %c0_i32 : i32, i32
  }
  func.func @transform_1(%arg0: i32) -> (i32, i32) {
    %c0_i32 = arith.constant 0 : i32
    %c0_i32_0 = arith.constant 0 : i32
    %c0_i32_1 = arith.constant 0 : i32
    return %c0_i32, %c0_i32_0 : i32, i32
  }
  func.func @transform_2(%arg0: i32) -> (i32, i32) {
    %c0_i32 = arith.constant 0 : i32
    %c0_i32_0 = arith.constant 0 : i32
    %c0_i32_1 = arith.constant 0 : i32
    return %c0_i32, %c0_i32_0 : i32, i32
  }
  func.func @transform_3(%arg0: i32) -> (i32, i32) {
    %c0_i32 = arith.constant 0 : i32
    %c0_i32_0 = arith.constant 0 : i32
    return %arg0, %c0_i32 : i32, i32
  }
  func.func @transform_4(%arg0: i32) -> (i32, i32) {
    %c0_i32 = arith.constant 0 : i32
    %c0_i32_0 = arith.constant 0 : i32
    %c0_i32_1 = arith.constant 0 : i32
    return %c0_i32, %c0_i32_0 : i32, i32
  }
  func.func @transform_5(%arg0: i32) -> (i32, i32) {
    %c0_i32 = arith.constant 0 : i32
    %c0_i32_0 = arith.constant 0 : i32
    %c0_i32_1 = arith.constant 0 : i32
    return %c0_i32, %c0_i32_0 : i32, i32
  }
  func.func @transform_6(%arg0: i32) -> (i32, i32) {
    %c0_i32 = arith.constant 0 : i32
    %c0_i32_0 = arith.constant 0 : i32
    return %arg0, %c0_i32 : i32, i32
  }
}

module attributes {stable_mosaic.version = 11 : i64} {
  func.func @self_attn_kernel(%arg0: i32, %arg1: memref<1x8x96xbf16, #tpu.memory_space<vmem>>, %arg2: memref<1x1x8xf32, #tpu.memory_space<vmem>>, %arg3: memref<1x8x1xf32, #tpu.memory_space<vmem>>, %arg4: memref<1x8x32xbf16, #tpu.memory_space<vmem>>) attributes {dimension_semantics = [#tpu.dimension_semantics<parallel>], iteration_bounds = array<i64: 2>, scalar_prefetch = 0 : i64, scratch_operands = 0 : i64, tpu.core_type = #tpu.core_type<tc>, window_params = [{transform_indices = @transform_0, window_bounds = array<i64: 1, 8, 96>}, {transform_indices = @transform_1, window_bounds = array<i64: 1, 1, 8>}, {transform_indices = @transform_2, window_bounds = array<i64: 1, 8, 1>}, {transform_indices = @transform_3, window_bounds = array<i64: 1, 8, 32>}]} {
    %c0 = arith.constant 0 : index
    %c0_0 = arith.constant 0 : index
    %c0_1 = arith.constant 0 : index
    %0 = vector.load %arg3[%c0, %c0_0, %c0_1] : memref<1x8x1xf32, #tpu.memory_space<vmem>>, vector<1x8x1xf32>
    %1 = vector.shape_cast %0 : vector<1x8x1xf32> to vector<8x1xf32>
    %c0_2 = arith.constant 0 : index
    %c0_3 = arith.constant 0 : index
    %c0_4 = arith.constant 0 : index
    %2 = vector.load %arg2[%c0_2, %c0_3, %c0_4] : memref<1x1x8xf32, #tpu.memory_space<vmem>>, vector<1x1x8xf32>
    %3 = vector.shape_cast %2 : vector<1x1x8xf32> to vector<1x8xf32>
    %4 = vector.broadcast %1 : vector<8x1xf32> to vector<8x8xf32>
    %5 = vector.broadcast %3 : vector<1x8xf32> to vector<8x8xf32>
    %6 = arith.mulf %4, %5 : vector<8x8xf32>
    %7 = tpu.iota {dimensions = array<i32: 0>} : vector<8x8xi32>
    %8 = tpu.iota {dimensions = array<i32: 1>} : vector<8x8xi32>
    %9 = arith.cmpi sle, %8, %7 : vector<8x8xi32>
    %10 = arith.extui %9 : vector<8x8xi1> to vector<8x8xi32>
    %11 = arith.sitofp %10 : vector<8x8xi32> to vector<8x8xf32>
    %12 = arith.mulf %6, %11 : vector<8x8xf32>
    %cst = arith.constant 0.000000e+00 : f32
    %13 = vector.broadcast %cst : f32 to vector<8x8xf32>
    %14 = arith.cmpf oeq, %12, %13 : vector<8x8xf32>
    %c0_5 = arith.constant 0 : index
    %c0_6 = arith.constant 0 : index
    %c0_7 = arith.constant 0 : index
    %15 = vector.load %arg1[%c0_5, %c0_6, %c0_7] : memref<1x8x96xbf16, #tpu.memory_space<vmem>>, vector<1x8x96xbf16>
    %16 = vector.shape_cast %15 : vector<1x8x96xbf16> to vector<8x96xbf16>
    %17 = vector.extract_strided_slice %16 {offsets = [0, 0], sizes = [8, 32], strides = [1, 1]} : vector<8x96xbf16> to vector<8x32xbf16>
    %18 = vector.extract_strided_slice %16 {offsets = [0, 32], sizes = [8, 32], strides = [1, 1]} : vector<8x96xbf16> to vector<8x32xbf16>
    %19 = vector.extract_strided_slice %16 {offsets = [0, 64], sizes = [8, 32], strides = [1, 1]} : vector<8x96xbf16> to vector<8x32xbf16>
    %20 = vector.extract_strided_slice %17 {offsets = [0, 0], sizes = [8, 8], strides = [1, 1]} : vector<8x32xbf16> to vector<8x8xbf16>
    %21 = arith.extf %20 : vector<8x8xbf16> to vector<8x8xf32>
    %cst_8 = arith.constant 0.353553385 : f32
    %22 = vector.broadcast %cst_8 : f32 to vector<8x8xf32>
    %23 = arith.mulf %21, %22 : vector<8x8xf32>
    %24 = arith.truncf %23 : vector<8x8xf32> to vector<8x8xbf16>
    %25 = vector.extract_strided_slice %18 {offsets = [0, 0], sizes = [8, 8], strides = [1, 1]} : vector<8x32xbf16> to vector<8x8xbf16>
    %26 = vector.extract_strided_slice %19 {offsets = [0, 0], sizes = [8, 8], strides = [1, 1]} : vector<8x32xbf16> to vector<8x8xbf16>
    %cst_9 = arith.constant dense<0.000000e+00> : vector<8x8xf32>
    %27 = tpu.matmul %24, %25, %cst_9 {dimension_numbers = #tpu.dot_dimension_numbers<[1], [1], [0], [0], [0, 0, 1, 0], [], []>} : vector<8x8xbf16>, vector<8x8xbf16>, vector<8x8xf32> -> vector<8x8xf32>
    %cst_10 = arith.constant -1.000000e+04 : f32
    %28 = vector.broadcast %cst_10 : f32 to vector<8x8xf32>
    %29 = arith.select %14, %28, %27 : vector<8x8xi1>, vector<8x8xf32>
    %cst_11 = arith.constant dense<0xFF800000> : vector<8xf32>
    %30 = vector.multi_reduction <maximumf>, %29, %cst_11 [1] : vector<8x8xf32> to vector<8xf32>
    %31 = vector.shape_cast %30 : vector<8xf32> to vector<8x1xf32>
    %32 = vector.broadcast %31 : vector<8x1xf32> to vector<8x8xf32>
    %33 = arith.subf %29, %32 : vector<8x8xf32>
    %34 = math.exp %33 : vector<8x8xf32>
    %cst_12 = arith.constant dense<0.000000e+00> : vector<8xf32>
    %35 = vector.multi_reduction <add>, %34, %cst_12 [1] : vector<8x8xf32> to vector<8xf32>
    %36 = vector.shape_cast %35 : vector<8xf32> to vector<8x1xf32>
    %37 = tpu.reciprocal %36 {approx = true} : vector<8x1xf32> -> vector<8x1xf32>
    %38 = vector.broadcast %37 : vector<8x1xf32> to vector<8x8xf32>
    %39 = arith.mulf %34, %38 : vector<8x8xf32>
    %40 = arith.truncf %39 : vector<8x8xf32> to vector<8x8xbf16>
    %cst_13 = arith.constant dense<0.000000e+00> : vector<8x8xf32>
    %41 = tpu.matmul %40, %26, %cst_13 {dimension_numbers = #tpu.dot_dimension_numbers<[1], [0], [0], [1], [0, 0, 1, 1], [], []>} : vector<8x8xbf16>, vector<8x8xbf16>, vector<8x8xf32> -> vector<8x8xf32>
    %42 = vector.extract_strided_slice %17 {offsets = [0, 8], sizes = [8, 8], strides = [1, 1]} : vector<8x32xbf16> to vector<8x8xbf16>
    %43 = arith.extf %42 : vector<8x8xbf16> to vector<8x8xf32>
    %cst_14 = arith.constant 0.353553385 : f32
    %44 = vector.broadcast %cst_14 : f32 to vector<8x8xf32>
    %45 = arith.mulf %43, %44 : vector<8x8xf32>
    %46 = arith.truncf %45 : vector<8x8xf32> to vector<8x8xbf16>
    %47 = vector.extract_strided_slice %18 {offsets = [0, 8], sizes = [8, 8], strides = [1, 1]} : vector<8x32xbf16> to vector<8x8xbf16>
    %48 = vector.extract_strided_slice %19 {offsets = [0, 8], sizes = [8, 8], strides = [1, 1]} : vector<8x32xbf16> to vector<8x8xbf16>
    %cst_15 = arith.constant dense<0.000000e+00> : vector<8x8xf32>
    %49 = tpu.matmul %46, %47, %cst_15 {dimension_numbers = #tpu.dot_dimension_numbers<[1], [1], [0], [0], [0, 0, 1, 0], [], []>} : vector<8x8xbf16>, vector<8x8xbf16>, vector<8x8xf32> -> vector<8x8xf32>
    %cst_16 = arith.constant -1.000000e+04 : f32
    %50 = vector.broadcast %cst_16 : f32 to vector<8x8xf32>
    %51 = arith.select %14, %50, %49 : vector<8x8xi1>, vector<8x8xf32>
    %cst_17 = arith.constant dense<0xFF800000> : vector<8xf32>
    %52 = vector.multi_reduction <maximumf>, %51, %cst_17 [1] : vector<8x8xf32> to vector<8xf32>
    %53 = vector.shape_cast %52 : vector<8xf32> to vector<8x1xf32>
    %54 = vector.broadcast %53 : vector<8x1xf32> to vector<8x8xf32>
    %55 = arith.subf %51, %54 : vector<8x8xf32>
    %56 = math.exp %55 : vector<8x8xf32>
    %cst_18 = arith.constant dense<0.000000e+00> : vector<8xf32>
    %57 = vector.multi_reduction <add>, %56, %cst_18 [1] : vector<8x8xf32> to vector<8xf32>
    %58 = vector.shape_cast %57 : vector<8xf32> to vector<8x1xf32>
    %59 = tpu.reciprocal %58 {approx = true} : vector<8x1xf32> -> vector<8x1xf32>
    %60 = vector.broadcast %59 : vector<8x1xf32> to vector<8x8xf32>
    %61 = arith.mulf %56, %60 : vector<8x8xf32>
    %62 = arith.truncf %61 : vector<8x8xf32> to vector<8x8xbf16>
    %cst_19 = arith.constant dense<0.000000e+00> : vector<8x8xf32>
    %63 = tpu.matmul %62, %48, %cst_19 {dimension_numbers = #tpu.dot_dimension_numbers<[1], [0], [0], [1], [0, 0, 1, 1], [], []>} : vector<8x8xbf16>, vector<8x8xbf16>, vector<8x8xf32> -> vector<8x8xf32>
    %64 = vector.extract_strided_slice %17 {offsets = [0, 16], sizes = [8, 8], strides = [1, 1]} : vector<8x32xbf16> to vector<8x8xbf16>
    %65 = arith.extf %64 : vector<8x8xbf16> to vector<8x8xf32>
    %cst_20 = arith.constant 0.353553385 : f32
    %66 = vector.broadcast %cst_20 : f32 to vector<8x8xf32>
    %67 = arith.mulf %65, %66 : vector<8x8xf32>
    %68 = arith.truncf %67 : vector<8x8xf32> to vector<8x8xbf16>
    %69 = vector.extract_strided_slice %18 {offsets = [0, 16], sizes = [8, 8], strides = [1, 1]} : vector<8x32xbf16> to vector<8x8xbf16>
    %70 = vector.extract_strided_slice %19 {offsets = [0, 16], sizes = [8, 8], strides = [1, 1]} : vector<8x32xbf16> to vector<8x8xbf16>
    %cst_21 = arith.constant dense<0.000000e+00> : vector<8x8xf32>
    %71 = tpu.matmul %68, %69, %cst_21 {dimension_numbers = #tpu.dot_dimension_numbers<[1], [1], [0], [0], [0, 0, 1, 0], [], []>} : vector<8x8xbf16>, vector<8x8xbf16>, vector<8x8xf32> -> vector<8x8xf32>
    %cst_22 = arith.constant -1.000000e+04 : f32
    %72 = vector.broadcast %cst_22 : f32 to vector<8x8xf32>
    %73 = arith.select %14, %72, %71 : vector<8x8xi1>, vector<8x8xf32>
    %cst_23 = arith.constant dense<0xFF800000> : vector<8xf32>
    %74 = vector.multi_reduction <maximumf>, %73, %cst_23 [1] : vector<8x8xf32> to vector<8xf32>
    %75 = vector.shape_cast %74 : vector<8xf32> to vector<8x1xf32>
    %76 = vector.broadcast %75 : vector<8x1xf32> to vector<8x8xf32>
    %77 = arith.subf %73, %76 : vector<8x8xf32>
    %78 = math.exp %77 : vector<8x8xf32>
    %cst_24 = arith.constant dense<0.000000e+00> : vector<8xf32>
    %79 = vector.multi_reduction <add>, %78, %cst_24 [1] : vector<8x8xf32> to vector<8xf32>
    %80 = vector.shape_cast %79 : vector<8xf32> to vector<8x1xf32>
    %81 = tpu.reciprocal %80 {approx = true} : vector<8x1xf32> -> vector<8x1xf32>
    %82 = vector.broadcast %81 : vector<8x1xf32> to vector<8x8xf32>
    %83 = arith.mulf %78, %82 : vector<8x8xf32>
    %84 = arith.truncf %83 : vector<8x8xf32> to vector<8x8xbf16>
    %cst_25 = arith.constant dense<0.000000e+00> : vector<8x8xf32>
    %85 = tpu.matmul %84, %70, %cst_25 {dimension_numbers = #tpu.dot_dimension_numbers<[1], [0], [0], [1], [0, 0, 1, 1], [], []>} : vector<8x8xbf16>, vector<8x8xbf16>, vector<8x8xf32> -> vector<8x8xf32>
    %86 = vector.extract_strided_slice %17 {offsets = [0, 24], sizes = [8, 8], strides = [1, 1]} : vector<8x32xbf16> to vector<8x8xbf16>
    %87 = arith.extf %86 : vector<8x8xbf16> to vector<8x8xf32>
    %cst_26 = arith.constant 0.353553385 : f32
    %88 = vector.broadcast %cst_26 : f32 to vector<8x8xf32>
    %89 = arith.mulf %87, %88 : vector<8x8xf32>
    %90 = arith.truncf %89 : vector<8x8xf32> to vector<8x8xbf16>
    %91 = vector.extract_strided_slice %18 {offsets = [0, 24], sizes = [8, 8], strides = [1, 1]} : vector<8x32xbf16> to vector<8x8xbf16>
    %92 = vector.extract_strided_slice %19 {offsets = [0, 24], sizes = [8, 8], strides = [1, 1]} : vector<8x32xbf16> to vector<8x8xbf16>
    %cst_27 = arith.constant dense<0.000000e+00> : vector<8x8xf32>
    %93 = tpu.matmul %90, %91, %cst_27 {dimension_numbers = #tpu.dot_dimension_numbers<[1], [1], [0], [0], [0, 0, 1, 0], [], []>} : vector<8x8xbf16>, vector<8x8xbf16>, vector<8x8xf32> -> vector<8x8xf32>
    %cst_28 = arith.constant -1.000000e+04 : f32
    %94 = vector.broadcast %cst_28 : f32 to vector<8x8xf32>
    %95 = arith.select %14, %94, %93 : vector<8x8xi1>, vector<8x8xf32>
    %cst_29 = arith.constant dense<0xFF800000> : vector<8xf32>
    %96 = vector.multi_reduction <maximumf>, %95, %cst_29 [1] : vector<8x8xf32> to vector<8xf32>
    %97 = vector.shape_cast %96 : vector<8xf32> to vector<8x1xf32>
    %98 = vector.broadcast %97 : vector<8x1xf32> to vector<8x8xf32>
    %99 = arith.subf %95, %98 : vector<8x8xf32>
    %100 = math.exp %99 : vector<8x8xf32>
    %cst_30 = arith.constant dense<0.000000e+00> : vector<8xf32>
    %101 = vector.multi_reduction <add>, %100, %cst_30 [1] : vector<8x8xf32> to vector<8xf32>
    %102 = vector.shape_cast %101 : vector<8xf32> to vector<8x1xf32>
    %103 = tpu.reciprocal %102 {approx = true} : vector<8x1xf32> -> vector<8x1xf32>
    %104 = vector.broadcast %103 : vector<8x1xf32> to vector<8x8xf32>
    %105 = arith.mulf %100, %104 : vector<8x8xf32>
    %106 = arith.truncf %105 : vector<8x8xf32> to vector<8x8xbf16>
    %cst_31 = arith.constant dense<0.000000e+00> : vector<8x8xf32>
    %107 = tpu.matmul %106, %92, %cst_31 {dimension_numbers = #tpu.dot_dimension_numbers<[1], [0], [0], [1], [0, 0, 1, 1], [], []>} : vector<8x8xbf16>, vector<8x8xbf16>, vector<8x8xf32> -> vector<8x8xf32>
    %108 = tpu.concatenate %41, %63, %85, %107 in 1 : vector<8x8xf32>, vector<8x8xf32>, vector<8x8xf32>, vector<8x8xf32> -> vector<8x32xf32>
    %109 = arith.truncf %108 : vector<8x32xf32> to vector<8x32xbf16>
    %c0_32 = arith.constant 0 : index
    %c0_33 = arith.constant 0 : index
    %c0_34 = arith.constant 0 : index
    %110 = vector.load %arg4[%c0_32, %c0_33, %c0_34] : memref<1x8x32xbf16, #tpu.memory_space<vmem>>, vector<1x8x32xbf16>
    %111 = vector.shape_cast %110 : vector<1x8x32xbf16> to vector<8x32xbf16>
    %112 = vector.shape_cast %109 : vector<8x32xbf16> to vector<1x8x32xbf16>
    tpu.vector_store %arg4[%c0_32, %c0_33, %c0_34], %112 {strides = array<i32>} : memref<1x8x32xbf16, #tpu.memory_space<vmem>>, vector<1x8x32xbf16>,
    return
  }
  func.func @transform_0(%arg0: i32) -> (i32, i32, i32) {
    %c0_i32 = arith.constant 0 : i32
    %c0_i32_0 = arith.constant 0 : i32
    %c0_i32_1 = arith.constant 0 : i32
    return %arg0, %c0_i32, %c0_i32_0 : i32, i32, i32
  }
  func.func @transform_1(%arg0: i32) -> (i32, i32, i32) {
    %c0_i32 = arith.constant 0 : i32
    %c0_i32_0 = arith.constant 0 : i32
    %c0_i32_1 = arith.constant 0 : i32
    return %arg0, %c0_i32, %c0_i32_0 : i32, i32, i32
  }
  func.func @transform_2(%arg0: i32) -> (i32, i32, i32) {
    %c0_i32 = arith.constant 0 : i32
    %c0_i32_0 = arith.constant 0 : i32
    %c0_i32_1 = arith.constant 0 : i32
    return %arg0, %c0_i32, %c0_i32_0 : i32, i32, i32
  }
  func.func @transform_3(%arg0: i32) -> (i32, i32, i32) {
    %c0_i32 = arith.constant 0 : i32
    %c0_i32_0 = arith.constant 0 : i32
    %c0_i32_1 = arith.constant 0 : i32
    return %arg0, %c0_i32, %c0_i32_0 : i32, i32, i32
  }
}

module attributes {stable_mosaic.version = 11 : i64} {
  func.func @linear_kernel_nok(%arg0: i32, %arg1: i32, %arg2: memref<16x32xbf16, #tpu.memory_space<vmem>>, %arg3: memref<32x32xbf16, #tpu.memory_space<vmem>>, %arg4: memref<1x32xf32, #tpu.memory_space<vmem>>, %arg5: memref<16x32xbf16, #tpu.memory_space<vmem>>) attributes {dimension_semantics = [#tpu.dimension_semantics<parallel>, #tpu.dimension_semantics<parallel>], iteration_bounds = array<i64: 1, 1>, scalar_prefetch = 0 : i64, scratch_operands = 0 : i64, tpu.core_type = #tpu.core_type<tc>, window_params = [{transform_indices = @transform_0, window_bounds = array<i64: 16, 32>}, {transform_indices = @transform_1, window_bounds = array<i64: 32, 32>}, {transform_indices = @transform_2, window_bounds = array<i64: 1, 32>}, {transform_indices = @transform_3, window_bounds = array<i64: 16, 32>}]} {
    %c0 = arith.constant 0 : index
    %c0_0 = arith.constant 0 : index
    %0 = vector.load %arg2[%c0, %c0_0] : memref<16x32xbf16, #tpu.memory_space<vmem>>, vector<16x32xbf16>
    %c0_1 = arith.constant 0 : index
    %c0_2 = arith.constant 0 : index
    %1 = vector.load %arg3[%c0_1, %c0_2] : memref<32x32xbf16, #tpu.memory_space<vmem>>, vector<32x32xbf16>
    %cst = arith.constant dense<0.000000e+00> : vector<16x32xf32>
    %2 = tpu.matmul %0, %1, %cst {dimension_numbers = #tpu.dot_dimension_numbers<[1], [0], [0], [1], [0, 0, 1, 1], [], []>} : vector<16x32xbf16>, vector<32x32xbf16>, vector<16x32xf32> -> vector<16x32xf32>
    %c0_3 = arith.constant 0 : index
    %c0_4 = arith.constant 0 : index
    %3 = vector.load %arg4[%c0_3, %c0_4] : memref<1x32xf32, #tpu.memory_space<vmem>>, vector<1x32xf32>
    %4 = vector.broadcast %3 : vector<1x32xf32> to vector<16x32xf32>
    %5 = arith.addf %2, %4 : vector<16x32xf32>
    %6 = arith.truncf %5 : vector<16x32xf32> to vector<16x32xbf16>
    %c0_5 = arith.constant 0 : index
    %c0_6 = arith.constant 0 : index
    %7 = vector.load %arg5[%c0_5, %c0_6] : memref<16x32xbf16, #tpu.memory_space<vmem>>, vector<16x32xbf16>
    tpu.vector_store %arg5[%c0_5, %c0_6], %6 {strides = array<i32>} : memref<16x32xbf16, #tpu.memory_space<vmem>>, vector<16x32xbf16>,
    return
  }
  func.func @transform_0(%arg0: i32, %arg1: i32) -> (i32, i32) {
    %c0_i32 = arith.constant 0 : i32
    %c0_i32_0 = arith.constant 0 : i32
    return %arg0, %c0_i32 : i32, i32
  }
  func.func @transform_1(%arg0: i32, %arg1: i32) -> (i32, i32) {
    %c0_i32 = arith.constant 0 : i32
    %c0_i32_0 = arith.constant 0 : i32
    return %c0_i32, %arg1 : i32, i32
  }
  func.func @transform_2(%arg0: i32, %arg1: i32) -> (i32, i32) {
    %c0_i32 = arith.constant 0 : i32
    %c0_i32_0 = arith.constant 0 : i32
    return %c0_i32, %arg1 : i32, i32
  }
  func.func @transform_3(%arg0: i32, %arg1: i32) -> (i32, i32) {
    %c0_i32 = arith.constant 0 : i32
    return %arg0, %arg1 : i32, i32
  }
}

module attributes {stable_mosaic.version = 11 : i64} {
  func.func @cross_attn_kernel(%arg0: i32, %arg1: memref<1x8x32xbf16, #tpu.memory_space<vmem>>, %arg2: memref<1x8x64xbf16, #tpu.memory_space<vmem>>, %arg3: memref<1x1x8xf32, #tpu.memory_space<vmem>>, %arg4: memref<1x8x32xbf16, #tpu.memory_space<vmem>>) attributes {dimension_semantics = [#tpu.dimension_semantics<parallel>], iteration_bounds = array<i64: 2>, scalar_prefetch = 0 : i64, scratch_operands = 0 : i64, tpu.core_type = #tpu.core_type<tc>, window_params = [{transform_indices = @transform_0, window_bounds = array<i64: 1, 8, 32>}, {transform_indices = @transform_1, window_bounds = array<i64: 1, 8, 64>}, {transform_indices = @transform_2, window_bounds = array<i64: 1, 1, 8>}, {transform_indices = @transform_3, window_bounds = array<i64: 1, 8, 32>}]} {
    %c0 = arith.constant 0 : index
    %c0_0 = arith.constant 0 : index
    %c0_1 = arith.constant 0 : index
    %0 = vector.load %arg3[%c0, %c0_0, %c0_1] : memref<1x1x8xf32, #tpu.memory_space<vmem>>, vector<1x1x8xf32>
    %1 = vector.shape_cast %0 : vector<1x1x8xf32> to vector<1x8xf32>
    %cst = arith.constant 0.000000e+00 : f32
    %2 = vector.broadcast %cst : f32 to vector<1x8xf32>
    %3 = arith.cmpf oeq, %1, %2 : vector<1x8xf32>
    %c0_2 = arith.constant 0 : index
    %c0_3 = arith.constant 0 : index
    %c0_4 = arith.constant 0 : index
    %4 = vector.load %arg2[%c0_2, %c0_3, %c0_4] : memref<1x8x64xbf16, #tpu.memory_space<vmem>>, vector<1x8x64xbf16>
    %5 = vector.shape_cast %4 : vector<1x8x64xbf16> to vector<8x64xbf16>
    %c0_5 = arith.constant 0 : index
    %c0_6 = arith.constant 0 : index
    %c0_7 = arith.constant 0 : index
    %6 = vector.load %arg1[%c0_5, %c0_6, %c0_7] : memref<1x8x32xbf16, #tpu.memory_space<vmem>>, vector<1x8x32xbf16>
    %7 = vector.shape_cast %6 : vector<1x8x32xbf16> to vector<8x32xbf16>
    %8 = vector.extract_strided_slice %5 {offsets = [0, 0], sizes = [8, 32], strides = [1, 1]} : vector<8x64xbf16> to vector<8x32xbf16>
    %9 = vector.extract_strided_slice %5 {offsets = [0, 32], sizes = [8, 32], strides = [1, 1]} : vector<8x64xbf16> to vector<8x32xbf16>
    %10 = vector.extract_strided_slice %7 {offsets = [0, 0], sizes = [8, 8], strides = [1, 1]} : vector<8x32xbf16> to vector<8x8xbf16>
    %11 = arith.extf %10 : vector<8x8xbf16> to vector<8x8xf32>
    %cst_8 = arith.constant 0.353553385 : f32
    %12 = vector.broadcast %cst_8 : f32 to vector<8x8xf32>
    %13 = arith.mulf %11, %12 : vector<8x8xf32>
    %14 = arith.truncf %13 : vector<8x8xf32> to vector<8x8xbf16>
    %15 = vector.extract_strided_slice %8 {offsets = [0, 0], sizes = [8, 8], strides = [1, 1]} : vector<8x32xbf16> to vector<8x8xbf16>
    %16 = vector.extract_strided_slice %9 {offsets = [0, 0], sizes = [8, 8], strides = [1, 1]} : vector<8x32xbf16> to vector<8x8xbf16>
    %cst_9 = arith.constant dense<0.000000e+00> : vector<8x8xf32>
    %17 = tpu.matmul %14, %15, %cst_9 {dimension_numbers = #tpu.dot_dimension_numbers<[1], [1], [0], [0], [0, 0, 1, 0], [], []>} : vector<8x8xbf16>, vector<8x8xbf16>, vector<8x8xf32> -> vector<8x8xf32>
    %cst_10 = arith.constant -1.000000e+04 : f32
    %18 = vector.shape_cast %3 : vector<1x8xi1> to vector<1x8xi1>
    %19 = vector.broadcast %18 : vector<1x8xi1> to vector<8x8xi1>
    %20 = vector.broadcast %cst_10 : f32 to vector<8x8xf32>
    %21 = arith.select %19, %20, %17 : vector<8x8xi1>, vector<8x8xf32>
    %cst_11 = arith.constant dense<0xFF800000> : vector<8xf32>
    %22 = vector.multi_reduction <maximumf>, %21, %cst_11 [1] : vector<8x8xf32> to vector<8xf32>
    %23 = vector.shape_cast %22 : vector<8xf32> to vector<8x1xf32>
    %24 = vector.broadcast %23 : vector<8x1xf32> to vector<8x8xf32>
    %25 = arith.subf %21, %24 : vector<8x8xf32>
    %26 = math.exp %25 : vector<8x8xf32>
    %cst_12 = arith.constant dense<0.000000e+00> : vector<8xf32>
    %27 = vector.multi_reduction <add>, %26, %cst_12 [1] : vector<8x8xf32> to vector<8xf32>
    %28 = vector.shape_cast %27 : vector<8xf32> to vector<8x1xf32>
    %29 = tpu.reciprocal %28 {approx = true} : vector<8x1xf32> -> vector<8x1xf32>
    %30 = vector.broadcast %29 : vector<8x1xf32> to vector<8x8xf32>
    %31 = arith.mulf %26, %30 : vector<8x8xf32>
    %32 = arith.truncf %31 : vector<8x8xf32> to vector<8x8xbf16>
    %cst_13 = arith.constant dense<0.000000e+00> : vector<8x8xf32>
    %33 = tpu.matmul %32, %16, %cst_13 {dimension_numbers = #tpu.dot_dimension_numbers<[1], [0], [0], [1], [0, 0, 1, 1], [], []>} : vector<8x8xbf16>, vector<8x8xbf16>, vector<8x8xf32> -> vector<8x8xf32>
    %34 = vector.extract_strided_slice %7 {offsets = [0, 8], sizes = [8, 8], strides = [1, 1]} : vector<8x32xbf16> to vector<8x8xbf16>
    %35 = arith.extf %34 : vector<8x8xbf16> to vector<8x8xf32>
    %cst_14 = arith.constant 0.353553385 : f32
    %36 = vector.broadcast %cst_14 : f32 to vector<8x8xf32>
    %37 = arith.mulf %35, %36 : vector<8x8xf32>
    %38 = arith.truncf %37 : vector<8x8xf32> to vector<8x8xbf16>
    %39 = vector.extract_strided_slice %8 {offsets = [0, 8], sizes = [8, 8], strides = [1, 1]} : vector<8x32xbf16> to vector<8x8xbf16>
    %40 = vector.extract_strided_slice %9 {offsets = [0, 8], sizes = [8, 8], strides = [1, 1]} : vector<8x32xbf16> to vector<8x8xbf16>
    %cst_15 = arith.constant dense<0.000000e+00> : vector<8x8xf32>
    %41 = tpu.matmul %38, %39, %cst_15 {dimension_numbers = #tpu.dot_dimension_numbers<[1], [1], [0], [0], [0, 0, 1, 0], [], []>} : vector<8x8xbf16>, vector<8x8xbf16>, vector<8x8xf32> -> vector<8x8xf32>
    %cst_16 = arith.constant -1.000000e+04 : f32
    %42 = vector.shape_cast %3 : vector<1x8xi1> to vector<1x8xi1>
    %43 = vector.broadcast %42 : vector<1x8xi1> to vector<8x8xi1>
    %44 = vector.broadcast %cst_16 : f32 to vector<8x8xf32>
    %45 = arith.select %43, %44, %41 : vector<8x8xi1>, vector<8x8xf32>
    %cst_17 = arith.constant dense<0xFF800000> : vector<8xf32>
    %46 = vector.multi_reduction <maximumf>, %45, %cst_17 [1] : vector<8x8xf32> to vector<8xf32>
    %47 = vector.shape_cast %46 : vector<8xf32> to vector<8x1xf32>
    %48 = vector.broadcast %47 : vector<8x1xf32> to vector<8x8xf32>
    %49 = arith.subf %45, %48 : vector<8x8xf32>
    %50 = math.exp %49 : vector<8x8xf32>
    %cst_18 = arith.constant dense<0.000000e+00> : vector<8xf32>
    %51 = vector.multi_reduction <add>, %50, %cst_18 [1] : vector<8x8xf32> to vector<8xf32>
    %52 = vector.shape_cast %51 : vector<8xf32> to vector<8x1xf32>
    %53 = tpu.reciprocal %52 {approx = true} : vector<8x1xf32> -> vector<8x1xf32>
    %54 = vector.broadcast %53 : vector<8x1xf32> to vector<8x8xf32>
    %55 = arith.mulf %50, %54 : vector<8x8xf32>
    %56 = arith.truncf %55 : vector<8x8xf32> to vector<8x8xbf16>
    %cst_19 = arith.constant dense<0.000000e+00> : vector<8x8xf32>
    %57 = tpu.matmul %56, %40, %cst_19 {dimension_numbers = #tpu.dot_dimension_numbers<[1], [0], [0], [1], [0, 0, 1, 1], [], []>} : vector<8x8xbf16>, vector<8x8xbf16>, vector<8x8xf32> -> vector<8x8xf32>
    %58 = vector.extract_strided_slice %7 {offsets = [0, 16], sizes = [8, 8], strides = [1, 1]} : vector<8x32xbf16> to vector<8x8xbf16>
    %59 = arith.extf %58 : vector<8x8xbf16> to vector<8x8xf32>
    %cst_20 = arith.constant 0.353553385 : f32
    %60 = vector.broadcast %cst_20 : f32 to vector<8x8xf32>
    %61 = arith.mulf %59, %60 : vector<8x8xf32>
    %62 = arith.truncf %61 : vector<8x8xf32> to vector<8x8xbf16>
    %63 = vector.extract_strided_slice %8 {offsets = [0, 16], sizes = [8, 8], strides = [1, 1]} : vector<8x32xbf16> to vector<8x8xbf16>
    %64 = vector.extract_strided_slice %9 {offsets = [0, 16], sizes = [8, 8], strides = [1, 1]} : vector<8x32xbf16> to vector<8x8xbf16>
    %cst_21 = arith.constant dense<0.000000e+00> : vector<8x8xf32>
    %65 = tpu.matmul %62, %63, %cst_21 {dimension_numbers = #tpu.dot_dimension_numbers<[1], [1], [0], [0], [0, 0, 1, 0], [], []>} : vector<8x8xbf16>, vector<8x8xbf16>, vector<8x8xf32> -> vector<8x8xf32>
    %cst_22 = arith.constant -1.000000e+04 : f32
    %66 = vector.shape_cast %3 : vector<1x8xi1> to vector<1x8xi1>
    %67 = vector.broadcast %66 : vector<1x8xi1> to vector<8x8xi1>
    %68 = vector.broadcast %cst_22 : f32 to vector<8x8xf32>
    %69 = arith.select %67, %68, %65 : vector<8x8xi1>, vector<8x8xf32>
    %cst_23 = arith.constant dense<0xFF800000> : vector<8xf32>
    %70 = vector.multi_reduction <maximumf>, %69, %cst_23 [1] : vector<8x8xf32> to vector<8xf32>
    %71 = vector.shape_cast %70 : vector<8xf32> to vector<8x1xf32>
    %72 = vector.broadcast %71 : vector<8x1xf32> to vector<8x8xf32>
    %73 = arith.subf %69, %72 : vector<8x8xf32>
    %74 = math.exp %73 : vector<8x8xf32>
    %cst_24 = arith.constant dense<0.000000e+00> : vector<8xf32>
    %75 = vector.multi_reduction <add>, %74, %cst_24 [1] : vector<8x8xf32> to vector<8xf32>
    %76 = vector.shape_cast %75 : vector<8xf32> to vector<8x1xf32>
    %77 = tpu.reciprocal %76 {approx = true} : vector<8x1xf32> -> vector<8x1xf32>
    %78 = vector.broadcast %77 : vector<8x1xf32> to vector<8x8xf32>
    %79 = arith.mulf %74, %78 : vector<8x8xf32>
    %80 = arith.truncf %79 : vector<8x8xf32> to vector<8x8xbf16>
    %cst_25 = arith.constant dense<0.000000e+00> : vector<8x8xf32>
    %81 = tpu.matmul %80, %64, %cst_25 {dimension_numbers = #tpu.dot_dimension_numbers<[1], [0], [0], [1], [0, 0, 1, 1], [], []>} : vector<8x8xbf16>, vector<8x8xbf16>, vector<8x8xf32> -> vector<8x8xf32>
    %82 = vector.extract_strided_slice %7 {offsets = [0, 24], sizes = [8, 8], strides = [1, 1]} : vector<8x32xbf16> to vector<8x8xbf16>
    %83 = arith.extf %82 : vector<8x8xbf16> to vector<8x8xf32>
    %cst_26 = arith.constant 0.353553385 : f32
    %84 = vector.broadcast %cst_26 : f32 to vector<8x8xf32>
    %85 = arith.mulf %83, %84 : vector<8x8xf32>
    %86 = arith.truncf %85 : vector<8x8xf32> to vector<8x8xbf16>
    %87 = vector.extract_strided_slice %8 {offsets = [0, 24], sizes = [8, 8], strides = [1, 1]} : vector<8x32xbf16> to vector<8x8xbf16>
    %88 = vector.extract_strided_slice %9 {offsets = [0, 24], sizes = [8, 8], strides = [1, 1]} : vector<8x32xbf16> to vector<8x8xbf16>
    %cst_27 = arith.constant dense<0.000000e+00> : vector<8x8xf32>
    %89 = tpu.matmul %86, %87, %cst_27 {dimension_numbers = #tpu.dot_dimension_numbers<[1], [1], [0], [0], [0, 0, 1, 0], [], []>} : vector<8x8xbf16>, vector<8x8xbf16>, vector<8x8xf32> -> vector<8x8xf32>
    %cst_28 = arith.constant -1.000000e+04 : f32
    %90 = vector.shape_cast %3 : vector<1x8xi1> to vector<1x8xi1>
    %91 = vector.broadcast %90 : vector<1x8xi1> to vector<8x8xi1>
    %92 = vector.broadcast %cst_28 : f32 to vector<8x8xf32>
    %93 = arith.select %91, %92, %89 : vector<8x8xi1>, vector<8x8xf32>
    %cst_29 = arith.constant dense<0xFF800000> : vector<8xf32>
    %94 = vector.multi_reduction <maximumf>, %93, %cst_29 [1] : vector<8x8xf32> to vector<8xf32>
    %95 = vector.shape_cast %94 : vector<8xf32> to vector<8x1xf32>
    %96 = vector.broadcast %95 : vector<8x1xf32> to vector<8x8xf32>
    %97 = arith.subf %93, %96 : vector<8x8xf32>
    %98 = math.exp %97 : vector<8x8xf32>
    %cst_30 = arith.constant dense<0.000000e+00> : vector<8xf32>
    %99 = vector.multi_reduction <add>, %98, %cst_30 [1] : vector<8x8xf32> to vector<8xf32>
    %100 = vector.shape_cast %99 : vector<8xf32> to vector<8x1xf32>
    %101 = tpu.reciprocal %100 {approx = true} : vector<8x1xf32> -> vector<8x1xf32>
    %102 = vector.broadcast %101 : vector<8x1xf32> to vector<8x8xf32>
    %103 = arith.mulf %98, %102 : vector<8x8xf32>
    %104 = arith.truncf %103 : vector<8x8xf32> to vector<8x8xbf16>
    %cst_31 = arith.constant dense<0.000000e+00> : vector<8x8xf32>
    %105 = tpu.matmul %104, %88, %cst_31 {dimension_numbers = #tpu.dot_dimension_numbers<[1], [0], [0], [1], [0, 0, 1, 1], [], []>} : vector<8x8xbf16>, vector<8x8xbf16>, vector<8x8xf32> -> vector<8x8xf32>
    %106 = tpu.concatenate %33, %57, %81, %105 in 1 : vector<8x8xf32>, vector<8x8xf32>, vector<8x8xf32>, vector<8x8xf32> -> vector<8x32xf32>
    %107 = arith.truncf %106 : vector<8x32xf32> to vector<8x32xbf16>
    %c0_32 = arith.constant 0 : index
    %c0_33 = arith.constant 0 : index
    %c0_34 = arith.constant 0 : index
    %108 = vector.load %arg4[%c0_32, %c0_33, %c0_34] : memref<1x8x32xbf16, #tpu.memory_space<vmem>>, vector<1x8x32xbf16>
    %109 = vector.shape_cast %108 : vector<1x8x32xbf16> to vector<8x32xbf16>
    %110 = vector.shape_cast %107 : vector<8x32xbf16> to vector<1x8x32xbf16>
    tpu.vector_store %arg4[%c0_32, %c0_33, %c0_34], %110 {strides = array<i32>} : memref<1x8x32xbf16, #tpu.memory_space<vmem>>, vector<1x8x32xbf16>,
    return
  }
  func.func @transform_0(%arg0: i32) -> (i32, i32, i32) {
    %c0_i32 = arith.constant 0 : i32
    %c0_i32_0 = arith.constant 0 : i32
    %c0_i32_1 = arith.constant 0 : i32
    return %arg0, %c0_i32, %c0_i32_0 : i32, i32, i32
  }
  func.func @transform_1(%arg0: i32) -> (i32, i32, i32) {
    %c0_i32 = arith.constant 0 : i32
    %c0_i32_0 = arith.constant 0 : i32
    %c0_i32_1 = arith.constant 0 : i32
    return %arg0, %c0_i32, %c0_i32_0 : i32, i32, i32
  }
  func.func @transform_2(%arg0: i32) -> (i32, i32, i32) {
    %c0_i32 = arith.constant 0 : i32
    %c0_i32_0 = arith.constant 0 : i32
    %c0_i32_1 = arith.constant 0 : i32
    return %arg0, %c0_i32, %c0_i32_0 : i32, i32, i32
  }
  func.func @transform_3(%arg0: i32) -> (i32, i32, i32) {
    %c0_i32 = arith.constant 0 : i32
    %c0_i32_0 = arith.constant 0 : i32
    %c0_i32_1 = arith.constant 0 : i32
    return %arg0, %c0_i32, %c0_i32_0 : i32, i32, i32
  }
}

module attributes {stable_mosaic.version = 11 : i64} {
  func.func @linear_kernel_nok(%arg0: i32, %arg1: i32, %arg2: memref<16x32xbf16, #tpu.memory_space<vmem>>, %arg3: memref<32x32xbf16, #tpu.memory_space<vmem>>, %arg4: memref<1x32xf32, #tpu.memory_space<vmem>>, %arg5: memref<16x32xf32, #tpu.memory_space<vmem>>) attributes {dimension_semantics = [#tpu.dimension_semantics<parallel>, #tpu.dimension_semantics<parallel>], iteration_bounds = array<i64: 1, 1>, scalar_prefetch = 0 : i64, scratch_operands = 0 : i64, tpu.core_type = #tpu.core_type<tc>, window_params = [{transform_indices = @transform_0, window_bounds = array<i64: 16, 32>}, {transform_indices = @transform_1, window_bounds = array<i64: 32, 32>}, {transform_indices = @transform_2, window_bounds = array<i64: 1, 32>}, {transform_indices = @transform_3, window_bounds = array<i64: 16, 32>}]} {
    %c0 = arith.constant 0 : index
    %c0_0 = arith.constant 0 : index
    %0 = vector.load %arg2[%c0, %c0_0] : memref<16x32xbf16, #tpu.memory_space<vmem>>, vector<16x32xbf16>
    %c0_1 = arith.constant 0 : index
    %c0_2 = arith.constant 0 : index
    %1 = vector.load %arg3[%c0_1, %c0_2] : memref<32x32xbf16, #tpu.memory_space<vmem>>, vector<32x32xbf16>
    %cst = arith.constant dense<0.000000e+00> : vector<16x32xf32>
    %2 = tpu.matmul %0, %1, %cst {dimension_numbers = #tpu.dot_dimension_numbers<[1], [0], [0], [1], [0, 0, 1, 1], [], []>} : vector<16x32xbf16>, vector<32x32xbf16>, vector<16x32xf32> -> vector<16x32xf32>
    %c0_3 = arith.constant 0 : index
    %c0_4 = arith.constant 0 : index
    %3 = vector.load %arg4[%c0_3, %c0_4] : memref<1x32xf32, #tpu.memory_space<vmem>>, vector<1x32xf32>
    %4 = vector.broadcast %3 : vector<1x32xf32> to vector<16x32xf32>
    %5 = arith.addf %2, %4 : vector<16x32xf32>
    %c0_5 = arith.constant 0 : index
    %c0_6 = arith.constant 0 : index
    %6 = vector.load %arg5[%c0_5, %c0_6] : memref<16x32xf32, #tpu.memory_space<vmem>>, vector<16x32xf32>
    tpu.vector_store %arg5[%c0_5, %c0_6], %5 {strides = array<i32>} : memref<16x32xf32, #tpu.memory_space<vmem>>, vector<16x32xf32>,
    return
  }
  func.func @transform_0(%arg0: i32, %arg1: i32) -> (i32, i32) {
    %c0_i32 = arith.constant 0 : i32
    %c0_i32_0 = arith.constant 0 : i32
    return %arg0, %c0_i32 : i32, i32
  }
  func.func @transform_1(%arg0: i32, %arg1: i32) -> (i32, i32) {
    %c0_i32 = arith.constant 0 : i32
    %c0_i32_0 = arith.constant 0 : i32
    return %c0_i32, %arg1 : i32, i32
  }
  func.func @transform_2(%arg0: i32, %arg1: i32) -> (i32, i32) {
    %c0_i32 = arith.constant 0 : i32
    %c0_i32_0 = arith.constant 0 : i32
    return %c0_i32, %arg1 : i32, i32
  }
  func.func @transform_3(%arg0: i32, %arg1: i32) -> (i32, i32) {
    %c0_i32 = arith.constant 0 : i32
    return %arg0, %arg1 : i32, i32
  }
}

</mosaic_0001>

<llo_original>
// kernel: transformer_forward.29
$region0: #{transformer_forward.29}
  #allocation0 [shape = 'u32[]', space=smem, size = 0x4, offset = 0x4, fixed_abs, tag = 'smem constant byte address 0x4 - core index']
  #allocation1 [shape = 'u32[144,128]{1,0:T(1,128)}', space=vmem, size = 0x12000, scoped, tag = 'internal scratch']
  %s0 = inlined_call_operand.vmem [shape: bf16[16,32], index: 0, kind: input, shape index: {}]
  %s1 = inlined_call_operand.vmem [shape: bf16[32,96], index: 1, kind: input, shape index: {}]
  %s2 = inlined_call_operand.vmem [shape: f32[1,96], index: 2, kind: input, shape index: {}]
  %s3 = inlined_call_operand.vmem [shape: bf16[16,96], index: 3, kind: output, shape index: {}]
  %s4 = sld [smem:[#allocation0]]
  $region22: #{transformer_forward.29} parent=0
    _
  %s6 = ssub.s32 1, %s4
  %s7 = scalar_select 0, %s6, %s4
  // Predicated region
  $region2: #{transformer_forward.29} parent=0 // pred_check
    _
  $region3: #{transformer_forward.29} parent=0 // pred_check_branch
    %9 = sbr.rel (0) target = $region5
  $region4: #{transformer_forward.29} parent=0 // pred_region
    _
  $region5: #{transformer_forward.29} parent=0 // pred_fallthru
    _
  // Predicated region
  $region6: #{transformer_forward.29} parent=0 // pred_check
    _
  $region7: #{transformer_forward.29} parent=0 // pred_check_branch
    %11 = sbr.rel (0) target = $region9
  $region8: #{transformer_forward.29} parent=0 // pred_region
    _
  $region9: #{transformer_forward.29} parent=0 // pred_fallthru
    _
  // Predicated region
  $region10: #{transformer_forward.29} parent=0 // pred_check
    _
  $region11: #{transformer_forward.29} parent=0 // pred_check_branch
    %13 = sbr.rel (0) target = $region13
  $region12: #{transformer_forward.29} parent=0 // pred_region
    _
  $region13: #{transformer_forward.29} parent=0 // pred_fallthru
    _
  %v15 = vld [vmem:[%s0] sm:$0xf]
  %v16 = vld [vmem:[%s0 + $0x4] sm:$0xf]
  %v17 = vld [vmem:[%s1] sm:$0xf]
  %v18 = vld [vmem:[%s1 + $0x4] sm:$0xf]
  %v19 = vld [vmem:[%s1 + $0x8] sm:$0xf]
  %v20 = vld [vmem:[%s1 + $0xc] sm:$0xf]
  %v21 = vld [vmem:[%s2] sm:$0x1]
  %v23 = vlaneseq
  %v24 = vshrl.u32 %v23, 7
  %v25 = vsub.s32 0, %v24
  %v26 = vrot.slane %v21, %v25
  %v30 = vunpack.c.l.b16 %v15
  %v31 = vunpack.c.l.b16 %v16
  %v32 = vpack.c.b16 %v31, %v30
  %v37 = vunpack.c.l.b16 %v17
  %v38 = vunpack.c.l.b16 %v18
  %v39 = vunpack.c.l.b16 %v19
  %v40 = vunpack.c.l.b16 %v20
  %v41 = vpack.c.b16 %v38, %v37
  %v42 = vpack.c.b16 %v40, %v39
  %vm45 = vcmask 261120
  %v47 = vsel %vm45, %v32, 0
  %49 = vmatprep.subr.bf16.mxu0 0
  %50 = vmatpush1.bf16.msra.mxu0 %v41
  %51 = vmatprep.subr.bf16.mxu0 0
  %52 = vmatpush1.bf16.msra.mxu0 %v42
  %53 = vmatprep.subr.bf16.mxu0 0
  %54 = vmatpush1.bf16.msra.mxu0 0
  %55 = vmatprep.subr.bf16.mxu0 0
  %56 = vmatpush1.bf16.msra.mxu0 0
  %57 = vmatprep.subr.bf16.mxu0 0
  %58 = vmatpush1.bf16.msra.mxu0 0
  %59 = vmatprep.subr.bf16.mxu0 0
  %60 = vmatpush1.bf16.msra.mxu0 0
  %61 = vmatprep.subr.bf16.mxu0 0
  %62 = vmatpush1.bf16.msra.mxu0 0
  %63 = vmatprep.subr.bf16.mxu0 0
  %64 = vmatpush1.bf16.msra.mxu0 0
  %65 = vmatprep.subr.bf16.mxu0 0
  %66 = vmatpush1.bf16.msra.mxu0 0
  %67 = vmatprep.subr.bf16.mxu0 0
  %68 = vmatpush1.bf16.msra.mxu0 0
  %69 = vmatprep.subr.bf16.mxu0 0
  %70 = vmatpush1.bf16.msra.mxu0 0
  %71 = vmatprep.subr.bf16.mxu0 0
  %72 = vmatpush1.bf16.msra.mxu0 0
  %73 = vmatprep.subr.bf16.mxu0 0
  %74 = vmatpush1.bf16.msra.mxu0 0
  %75 = vmatprep.subr.bf16.mxu0 0
  %76 = vmatpush1.bf16.msra.mxu0 0
  %77 = vmatprep.subr.bf16.mxu0 0
  %78 = vmatpush1.bf16.msra.mxu0 0
  %79 = vmatprep.subr.bf16.mxu0 0
  %80 = vmatpush1.bf16.msra.mxu0 0
  %81 = vmatprep.mubr.bf16.mxu0 0
  %82 = vmatmul.mubr.bf16.gmra.mrb[0].mxu0 %v47
  %v83 = vpop.f32.mrb[0].mxu0
  %v84 = vadd.f32 %v26, %v83
  %v85 = vpop.f32.mrb[0].mxu0
  %v86 = vpop.f32.mrb[0].mxu0
  %v87 = vadd.f32 %v26, %v86
  %v88 = vpop.f32.mrb[0].mxu0
  %89 = vdwg.mxu0
  %v90 = vpack.c.bf16 %v87, %v84
  %v92 = vunpack.c.l.b16 %v90
  %v93 = vunpack.c.h.b16 %v90
  %v94 = vpack.c.b16 %v92, %v92
  %v95 = vpack.c.b16 %v93, %v93
  %vm98 = vcmask 781312
  %99 = vst.msk [vmem:[%s3] sm:$0xf] %vm98, %v94
  %100 = vst.msk [vmem:[%s3 + $0x4] sm:$0xf] %vm98, %v95
  // Predicated region
  $region14: #{transformer_forward.29} parent=0 // pred_check
    _
  $region15: #{transformer_forward.29} parent=0 // pred_check_branch
    %102 = sbr.rel (0) target = $region17
  $region16: #{transformer_forward.29} parent=0 // pred_region
    _
  $region17: #{transformer_forward.29} parent=0 // pred_fallthru
    _
  // Predicated region
  $region18: #{transformer_forward.29} parent=0 // pred_check
    _
  $region19: #{transformer_forward.29} parent=0 // pred_check_branch
    %104 = sbr.rel (0) target = $region21
  $region20: #{transformer_forward.29} parent=0 // pred_region
    _
  $region21: #{transformer_forward.29} parent=0 // pred_fallthru
    _

// kernel: transformer_forward.31
$region0: #{transformer_forward.31}
  #allocation0 [shape = 'u32[]', space=smem, size = 0x4, offset = 0x4, fixed_abs, tag = 'smem constant byte address 0x4 - core index']
  #allocation1 [shape = 'u32[144,128]{1,0:T(1,128)}', space=vmem, size = 0x12000, scoped, tag = 'internal scratch']
  %s0 = inlined_call_operand.vmem [shape: bf16[16,32], index: 0, kind: input, shape index: {}]
  %s1 = inlined_call_operand.vmem [shape: bf16[32,32], index: 1, kind: input, shape index: {}]
  %s2 = inlined_call_operand.vmem [shape: f32[1,32], index: 2, kind: input, shape index: {}]
  %s3 = inlined_call_operand.vmem [shape: bf16[16,32], index: 3, kind: input, shape index: {}]
  %s4 = inlined_call_operand.vmem [shape: f32[1,32], index: 4, kind: input, shape index: {}]
  %s5 = inlined_call_operand.vmem [shape: f32[1,32], index: 5, kind: input, shape index: {}]
  %s6 = inlined_call_operand.vmem [shape: bf16[16,32], index: 6, kind: output, shape index: {}]
  %s7 = sld [smem:[#allocation0]]
  $region34: #{transformer_forward.31} parent=0
    _
  %s9 = ssub.s32 1, %s7
  %s10 = scalar_select 0, %s9, %s7
  // Predicated region
  $region2: #{transformer_forward.31} parent=0 // pred_check
    _
  $region3: #{transformer_forward.31} parent=0 // pred_check_branch
    %12 = sbr.rel (0) target = $region5
  $region4: #{transformer_forward.31} parent=0 // pred_region
    _
  $region5: #{transformer_forward.31} parent=0 // pred_fallthru
    _
  // Predicated region
  $region6: #{transformer_forward.31} parent=0 // pred_check
    _
  $region7: #{transformer_forward.31} parent=0 // pred_check_branch
    %14 = sbr.rel (0) target = $region9
  $region8: #{transformer_forward.31} parent=0 // pred_region
    _
  $region9: #{transformer_forward.31} parent=0 // pred_fallthru
    _
  // Predicated region
  $region10: #{transformer_forward.31} parent=0 // pred_check
    _
  $region11: #{transformer_forward.31} parent=0 // pred_check_branch
    %16 = sbr.rel (0) target = $region13
  $region12: #{transformer_forward.31} parent=0 // pred_region
    _
  $region13: #{transformer_forward.31} parent=0 // pred_fallthru
    _
  // Predicated region
  $region14: #{transformer_forward.31} parent=0 // pred_check
    _
  $region15: #{transformer_forward.31} parent=0 // pred_check_branch
    %18 = sbr.rel (0) target = $region17
  $region16: #{transformer_forward.31} parent=0 // pred_region
    _
  $region17: #{transformer_forward.31} parent=0 // pred_fallthru
    _
  // Predicated region
  $region18: #{transformer_forward.31} parent=0 // pred_check
    _
  $region19: #{transformer_forward.31} parent=0 // pred_check_branch
    %20 = sbr.rel (0) target = $region21
  $region20: #{transformer_forward.31} parent=0 // pred_region
    _
  $region21: #{transformer_forward.31} parent=0 // pred_fallthru
    _
  // Predicated region
  $region22: #{transformer_forward.31} parent=0 // pred_check
    _
  $region23: #{transformer_forward.31} parent=0 // pred_check_branch
    %22 = sbr.rel (0) target = $region25
  $region24: #{transformer_forward.31} parent=0 // pred_region
    _
  $region25: #{transformer_forward.31} parent=0 // pred_fallthru
    _
  %v24 = vld [vmem:[%s0] sm:$0xf]
  %v25 = vld [vmem:[%s0 + $0x4] sm:$0xf]
  %v26 = vld [vmem:[%s1] sm:$0xf]
  %v27 = vld [vmem:[%s1 + $0x4] sm:$0xf]
  %v28 = vld [vmem:[%s1 + $0x8] sm:$0xf]
  %v29 = vld [vmem:[%s1 + $0xc] sm:$0xf]
  %v30 = vld [vmem:[%s2] sm:$0x1]
  %v32 = vlaneseq
  %v33 = vshrl.u32 %v32, 7
  %v34 = vsub.s32 0, %v33
  %v35 = vrot.slane %v30, %v34
  %v39 = vunpack.c.l.b16 %v24
  %v40 = vunpack.c.l.b16 %v25
  %v41 = vpack.c.b16 %v40, %v39
  %v46 = vunpack.c.l.b16 %v26
  %v47 = vunpack.c.l.b16 %v27
  %v48 = vunpack.c.l.b16 %v28
  %v49 = vunpack.c.l.b16 %v29
  %v50 = vpack.c.b16 %v47, %v46
  %v51 = vpack.c.b16 %v49, %v48
  %vm54 = vcmask 261120
  %v56 = vsel %vm54, %v41, 0
  %58 = vmatprep.subr.bf16.mxu0 0
  %59 = vmatpush1.bf16.msra.mxu0 %v50
  %60 = vmatprep.subr.bf16.mxu0 0
  %61 = vmatpush1.bf16.msra.mxu0 %v51
  %62 = vmatprep.subr.bf16.mxu0 0
  %63 = vmatpush1.bf16.msra.mxu0 0
  %64 = vmatprep.subr.bf16.mxu0 0
  %65 = vmatpush1.bf16.msra.mxu0 0
  %66 = vmatprep.subr.bf16.mxu0 0
  %67 = vmatpush1.bf16.msra.mxu0 0
  %68 = vmatprep.subr.bf16.mxu0 0
  %69 = vmatpush1.bf16.msra.mxu0 0
  %70 = vmatprep.subr.bf16.mxu0 0
  %71 = vmatpush1.bf16.msra.mxu0 0
  %72 = vmatprep.subr.bf16.mxu0 0
  %73 = vmatpush1.bf16.msra.mxu0 0
  %74 = vmatprep.subr.bf16.mxu0 0
  %75 = vmatpush1.bf16.msra.mxu0 0
  %76 = vmatprep.subr.bf16.mxu0 0
  %77 = vmatpush1.bf16.msra.mxu0 0
  %78 = vmatprep.subr.bf16.mxu0 0
  %79 = vmatpush1.bf16.msra.mxu0 0
  %80 = vmatprep.subr.bf16.mxu0 0
  %81 = vmatpush1.bf16.msra.mxu0 0
  %82 = vmatprep.subr.bf16.mxu0 0
  %83 = vmatpush1.bf16.msra.mxu0 0
  %84 = vmatprep.subr.bf16.mxu0 0
  %85 = vmatpush1.bf16.msra.mxu0 0
  %86 = vmatprep.subr.bf16.mxu0 0
  %87 = vmatpush1.bf16.msra.mxu0 0
  %88 = vmatprep.subr.bf16.mxu0 0
  %89 = vmatpush1.bf16.msra.mxu0 0
  %90 = vmatprep.mubr.bf16.mxu0 0
  %91 = vmatmul.mubr.bf16.gmra.mrb[0].mxu0 %v56
  %v92 = vpop.f32.mrb[0].mxu0
  %v93 = vadd.f32 %v35, %v92
  %v94 = vpop.f32.mrb[0].mxu0
  %v95 = vpop.f32.mrb[0].mxu0
  %v96 = vadd.f32 %v35, %v95
  %v97 = vpop.f32.mrb[0].mxu0
  %98 = vdwg.mxu0
  %v99 = vld [vmem:[%s3] sm:$0xf]
  %v100 = vld [vmem:[%s3 + $0x4] sm:$0xf]
  %v101 = vunpack.c.l.bf16 %v99
  %v102 = vunpack.c.l.bf16 %v100
  %v103 = vadd.f32 %v93, %v101
  %v104 = vadd.f32 %v96, %v102
  %v105 = vld [vmem:[%s4] sm:$0x1]
  %v106 = vld [vmem:[%s5] sm:$0x1]
  %v107 = vsel %vm54, %v103, 0.0
  %108 = vadd.xlane.f32.xlu0 %v107
  %v109 = vpop.xlane.xlu0 %108
  %v110 = vsel %vm54, %v104, 0.0
  %111 = vadd.xlane.f32.xlu0 %v110
  %v112 = vpop.xlane.xlu0 %111
  %v113 = vrcp.pop 32.0
  %v114 = vmul.f32 %v109, %v113
  %v115 = vmul.f32 %v112, %v113
  %v116 = vsub.f32 %v103, %v114
  %v117 = vsub.f32 %v104, %v115
  %v118 = vmul.f32 %v116, %v116
  %v119 = vmul.f32 %v117, %v117
  %v120 = vsel %vm54, %v118, 0.0
  %121 = vadd.xlane.f32.xlu0 %v120
  %v122 = vpop.xlane.xlu0 %121
  %v123 = vsel %vm54, %v119, 0.0
  %124 = vadd.xlane.f32.xlu0 %v123
  %v125 = vpop.xlane.xlu0 %124
  %v126 = vmul.f32 %v122, %v113
  %v127 = vmul.f32 %v125, %v113
  %v128 = vadd.f32 %v126, 1e-12
  %v129 = vadd.f32 %v127, 1e-12
  %v130 = vrsqrt.pop %v128
  %v131 = vrsqrt.pop %v129
  %v133 = vlaneseq
  %v134 = vshrl.u32 %v133, 7
  %v135 = vsub.s32 0, %v134
  %v136 = vrot.slane %v105, %v135
  %v138 = vmul.f32 %v136, %v116
  %v139 = vmul.f32 %v136, %v117
  %v140 = vmul.f32 %v138, %v130
  %v141 = vmul.f32 %v139, %v131
  %v143 = vlaneseq
  %v144 = vshrl.u32 %v143, 7
  %v145 = vsub.s32 0, %v144
  %v146 = vrot.slane %v106, %v145
  %v148 = vadd.f32 %v140, %v146
  %v149 = vadd.f32 %v141, %v146
  %v150 = vpack.c.bf16 %v149, %v148
  %v152 = vunpack.c.l.b16 %v150
  %v153 = vunpack.c.h.b16 %v150
  %v154 = vpack.c.b16 %v152, %v152
  %v155 = vpack.c.b16 %v153, %v153
  %vm158 = vcmask 257024
  %159 = vst.msk [vmem:[%s6] sm:$0xf] %vm158, %v154
  %160 = vst.msk [vmem:[%s6 + $0x4] sm:$0xf] %vm158, %v155
  // Predicated region
  $region26: #{transformer_forward.31} parent=0 // pred_check
    _
  $region27: #{transformer_forward.31} parent=0 // pred_check_branch
    %162 = sbr.rel (0) target = $region29
  $region28: #{transformer_forward.31} parent=0 // pred_region
    _
  $region29: #{transformer_forward.31} parent=0 // pred_fallthru
    _
  // Predicated region
  $region30: #{transformer_forward.31} parent=0 // pred_check
    _
  $region31: #{transformer_forward.31} parent=0 // pred_check_branch
    %164 = sbr.rel (0) target = $region33
  $region32: #{transformer_forward.31} parent=0 // pred_region
    _
  $region33: #{transformer_forward.31} parent=0 // pred_fallthru
    _

// kernel: transformer_forward.32
$region0: #{transformer_forward.32}
  #allocation0 [shape = 'u32[]', space=smem, size = 0x4, offset = 0x4, fixed_abs, tag = 'smem constant byte address 0x4 - core index']
  #allocation1 [shape = 'u32[144,128]{1,0:T(1,128)}', space=vmem, size = 0x12000, scoped, tag = 'internal scratch']
  %s0 = inlined_call_operand.vmem [shape: bf16[16,32], index: 0, kind: input, shape index: {}]
  %s1 = inlined_call_operand.vmem [shape: bf16[32,64], index: 1, kind: input, shape index: {}]
  %s2 = inlined_call_operand.vmem [shape: f32[1,64], index: 2, kind: input, shape index: {}]
  %s3 = inlined_call_operand.vmem [shape: bf16[16,64], index: 3, kind: output, shape index: {}]
  %s4 = sld [smem:[#allocation0]]
  $region22: #{transformer_forward.32} parent=0
    _
  %s6 = ssub.s32 1, %s4
  %s7 = scalar_select 0, %s6, %s4
  // Predicated region
  $region2: #{transformer_forward.32} parent=0 // pred_check
    _
  $region3: #{transformer_forward.32} parent=0 // pred_check_branch
    %9 = sbr.rel (0) target = $region5
  $region4: #{transformer_forward.32} parent=0 // pred_region
    _
  $region5: #{transformer_forward.32} parent=0 // pred_fallthru
    _
  // Predicated region
  $region6: #{transformer_forward.32} parent=0 // pred_check
    _
  $region7: #{transformer_forward.32} parent=0 // pred_check_branch
    %11 = sbr.rel (0) target = $region9
  $region8: #{transformer_forward.32} parent=0 // pred_region
    _
  $region9: #{transformer_forward.32} parent=0 // pred_fallthru
    _
  // Predicated region
  $region10: #{transformer_forward.32} parent=0 // pred_check
    _
  $region11: #{transformer_forward.32} parent=0 // pred_check_branch
    %13 = sbr.rel (0) target = $region13
  $region12: #{transformer_forward.32} parent=0 // pred_region
    _
  $region13: #{transformer_forward.32} parent=0 // pred_fallthru
    _
  %v15 = vld [vmem:[%s0] sm:$0xf]
  %v16 = vld [vmem:[%s0 + $0x4] sm:$0xf]
  %v17 = vld [vmem:[%s1] sm:$0xf]
  %v18 = vld [vmem:[%s1 + $0x4] sm:$0xf]
  %v19 = vld [vmem:[%s1 + $0x8] sm:$0xf]
  %v20 = vld [vmem:[%s1 + $0xc] sm:$0xf]
  %v21 = vld [vmem:[%s2] sm:$0x1]
  %v23 = vlaneseq
  %v24 = vshrl.u32 %v23, 7
  %v25 = vsub.s32 0, %v24
  %v26 = vrot.slane %v21, %v25
  %v30 = vunpack.c.l.b16 %v15
  %v31 = vunpack.c.l.b16 %v16
  %v32 = vpack.c.b16 %v31, %v30
  %v37 = vunpack.c.l.b16 %v17
  %v38 = vunpack.c.l.b16 %v18
  %v39 = vunpack.c.l.b16 %v19
  %v40 = vunpack.c.l.b16 %v20
  %v41 = vpack.c.b16 %v38, %v37
  %v42 = vpack.c.b16 %v40, %v39
  %vm45 = vcmask 261120
  %v47 = vsel %vm45, %v32, 0
  %49 = vmatprep.subr.bf16.mxu0 0
  %50 = vmatpush1.bf16.msra.mxu0 %v41
  %51 = vmatprep.subr.bf16.mxu0 0
  %52 = vmatpush1.bf16.msra.mxu0 %v42
  %53 = vmatprep.subr.bf16.mxu0 0
  %54 = vmatpush1.bf16.msra.mxu0 0
  %55 = vmatprep.subr.bf16.mxu0 0
  %56 = vmatpush1.bf16.msra.mxu0 0
  %57 = vmatprep.subr.bf16.mxu0 0
  %58 = vmatpush1.bf16.msra.mxu0 0
  %59 = vmatprep.subr.bf16.mxu0 0
  %60 = vmatpush1.bf16.msra.mxu0 0
  %61 = vmatprep.subr.bf16.mxu0 0
  %62 = vmatpush1.bf16.msra.mxu0 0
  %63 = vmatprep.subr.bf16.mxu0 0
  %64 = vmatpush1.bf16.msra.mxu0 0
  %65 = vmatprep.subr.bf16.mxu0 0
  %66 = vmatpush1.bf16.msra.mxu0 0
  %67 = vmatprep.subr.bf16.mxu0 0
  %68 = vmatpush1.bf16.msra.mxu0 0
  %69 = vmatprep.subr.bf16.mxu0 0
  %70 = vmatpush1.bf16.msra.mxu0 0
  %71 = vmatprep.subr.bf16.mxu0 0
  %72 = vmatpush1.bf16.msra.mxu0 0
  %73 = vmatprep.subr.bf16.mxu0 0
  %74 = vmatpush1.bf16.msra.mxu0 0
  %75 = vmatprep.subr.bf16.mxu0 0
  %76 = vmatpush1.bf16.msra.mxu0 0
  %77 = vmatprep.subr.bf16.mxu0 0
  %78 = vmatpush1.bf16.msra.mxu0 0
  %79 = vmatprep.subr.bf16.mxu0 0
  %80 = vmatpush1.bf16.msra.mxu0 0
  %81 = vmatprep.mubr.bf16.mxu0 0
  %82 = vmatmul.mubr.bf16.gmra.mrb[0].mxu0 %v47
  %v83 = vpop.f32.mrb[0].mxu0
  %v84 = vadd.f32 %v26, %v83
  %v85 = vpop.f32.mrb[0].mxu0
  %v86 = vpop.f32.mrb[0].mxu0
  %v87 = vadd.f32 %v26, %v86
  %v88 = vpop.f32.mrb[0].mxu0
  %89 = vdwg.mxu0
  %v90 = vmax.f32 %v84, 0.0
  %v91 = vmax.f32 %v87, 0.0
  %v92 = vpack.c.bf16 %v91, %v90
  %v94 = vunpack.c.l.b16 %v92
  %v95 = vunpack.c.h.b16 %v92
  %v96 = vpack.c.b16 %v94, %v94
  %v97 = vpack.c.b16 %v95, %v95
  %vm100 = vcmask 519168
  %101 = vst.msk [vmem:[%s3] sm:$0xf] %vm100, %v96
  %102 = vst.msk [vmem:[%s3 + $0x4] sm:$0xf] %vm100, %v97
  // Predicated region
  $region14: #{transformer_forward.32} parent=0 // pred_check
    _
  $region15: #{transformer_forward.32} parent=0 // pred_check_branch
    %104 = sbr.rel (0) target = $region17
  $region16: #{transformer_forward.32} parent=0 // pred_region
    _
  $region17: #{transformer_forward.32} parent=0 // pred_fallthru
    _
  // Predicated region
  $region18: #{transformer_forward.32} parent=0 // pred_check
    _
  $region19: #{transformer_forward.32} parent=0 // pred_check_branch
    %106 = sbr.rel (0) target = $region21
  $region20: #{transformer_forward.32} parent=0 // pred_region
    _
  $region21: #{transformer_forward.32} parent=0 // pred_fallthru
    _

// kernel: transformer_forward.30
$region0: #{transformer_forward.30}
  #allocation0 [shape = 'u32[]', space=smem, size = 0x4, offset = 0x4, fixed_abs, tag = 'smem constant byte address 0x4 - core index']
  #allocation1 [shape = 'u32[144,128]{1,0:T(1,128)}', space=vmem, size = 0x12000, scoped, tag = 'internal scratch']
  %s0 = inlined_call_operand.vmem [shape: bf16[2,8,96], index: 0, kind: input, shape index: {}]
  %s1 = inlined_call_operand.vmem [shape: f32[2,1,8], index: 1, kind: input, shape index: {}]
  %s2 = inlined_call_operand.vmem [shape: f32[2,8,1], index: 2, kind: input, shape index: {}]
  %s3 = inlined_call_operand.vmem [shape: bf16[2,8,32], index: 3, kind: output, shape index: {}]
  %s4 = sld [smem:[#allocation0]]
  $region45: #{transformer_forward.30} parent=0
    _
  %s6 = ssub.s32 1, %s4
  %s7 = scalar_select 0, %s6, %s4
  loop: start=0, step=1, limit=4
  $region2: #{transformer_forward.30} parent=0 // loop_pre_header
    _
  $region3: #{transformer_forward.30} parent=0 // loop_header
    %s9 = sphi 0, %s13
    %p10 = scmp.ge.s32.totalorder %s9, 4
    %s19 = sphi 0, %s21
    %s22 = sphi 0, %s19
    %s23 = sphi 0, %s22
    %s39 = sphi 0, %s23
    %s45 = sphi 0, %s47
    %s48 = sphi 0, %s45
    %s49 = sphi 0, %s48
    %s65 = sphi 0, %s49
    %s71 = sphi 0, %s73
    %s74 = sphi 0, %s71
    %s75 = sphi 0, %s74
    %s91 = sphi 0, %s75
    %s97 = sphi 0, %s99
    %s100 = sphi 0, %s97
    %s101 = sphi 0, %s100
    %s117 = sphi 0, %s101
  $region4: #{transformer_forward.30} parent=0 // loop_header_branch
    %12 = sbr.rel (%p10) target = $region8
  $region5: #{transformer_forward.30} parent=0 // loop_body
    %s14 = ssub.s32 %s9, 1
    %s15 = ssub.s32 %s9, 2
    %s16 = sadd.s32 %s9, 1
    %s17 = ssub.s32 %s9, %s16
    %p18 = scmp.eq.s32.totalorder %s17, 0
    %s20 = sadd.s32 %s19, 1
    %s21 = scalar_select %p18, %s19, %s20
    %p24 = pneg %p18
    %p25 = scmp.eq.s32.totalorder %s9, 1
    %p26 = por %p24, %p25
    %p27 = scmp.ne.s32.totalorder %s19, %s22
    %p28 = scmp.eq.s32.totalorder %s9, 0
    %p29 = por %p27, %p28
    %p30 = scmp.ne.s32.totalorder %s19, %s22
    %p31 = scmp.eq.s32.totalorder %s14, 1
    %p32 = por %p30, %p31
    %p33 = scmp.ne.s32.totalorder %s22, %s23
    %p34 = scmp.eq.s32.totalorder %s14, 0
    %p35 = por %p33, %p34
    %p36 = scmp.ne.s32.totalorder %s22, %s23
    %p37 = scmp.eq.s32.totalorder %s15, 1
    %p38 = por %p36, %p37
    %p40 = scmp.ne.s32.totalorder %s23, %s39
    %p41 = scmp.eq.s32.totalorder %s15, 0
    %p42 = por %p40, %p41
    %s43 = ssub.s32 %s9, %s16
    %p44 = scmp.eq.s32.totalorder %s43, 0
    %s46 = sadd.s32 %s45, 1
    %s47 = scalar_select %p44, %s45, %s46
    %p50 = pneg %p44
    %p51 = scmp.eq.s32.totalorder %s9, 1
    %p52 = por %p50, %p51
    %p53 = scmp.ne.s32.totalorder %s45, %s48
    %p54 = scmp.eq.s32.totalorder %s9, 0
    %p55 = por %p53, %p54
    %p56 = scmp.ne.s32.totalorder %s45, %s48
    %p57 = scmp.eq.s32.totalorder %s14, 1
    %p58 = por %p56, %p57
    %p59 = scmp.ne.s32.totalorder %s48, %s49
    %p60 = scmp.eq.s32.totalorder %s14, 0
    %p61 = por %p59, %p60
    %p62 = scmp.ne.s32.totalorder %s48, %s49
    %p63 = scmp.eq.s32.totalorder %s15, 1
    %p64 = por %p62, %p63
    %p66 = scmp.ne.s32.totalorder %s49, %s65
    %p67 = scmp.eq.s32.totalorder %s15, 0
    %p68 = por %p66, %p67
    %s69 = ssub.s32 %s9, %s16
    %p70 = scmp.eq.s32.totalorder %s69, 0
    %s72 = sadd.s32 %s71, 1
    %s73 = scalar_select %p70, %s71, %s72
    %p76 = pneg %p70
    %p77 = scmp.eq.s32.totalorder %s9, 1
    %p78 = por %p76, %p77
    %p79 = scmp.ne.s32.totalorder %s71, %s74
    %p80 = scmp.eq.s32.totalorder %s9, 0
    %p81 = por %p79, %p80
    %p82 = scmp.ne.s32.totalorder %s71, %s74
    %p83 = scmp.eq.s32.totalorder %s14, 1
    %p84 = por %p82, %p83
    %p85 = scmp.ne.s32.totalorder %s74, %s75
    %p86 = scmp.eq.s32.totalorder %s14, 0
    %p87 = por %p85, %p86
    %p88 = scmp.ne.s32.totalorder %s74, %s75
    %p89 = scmp.eq.s32.totalorder %s15, 1
    %p90 = por %p88, %p89
    %p92 = scmp.ne.s32.totalorder %s75, %s91
    %p93 = scmp.eq.s32.totalorder %s15, 0
    %p94 = por %p92, %p93
    %s95 = ssub.s32 %s9, %s16
    %p96 = scmp.eq.s32.totalorder %s95, 0
    %s98 = sadd.s32 %s97, 1
    %s99 = scalar_select %p96, %s97, %s98
    %p102 = pneg %p96
    %p103 = scmp.eq.s32.totalorder %s9, 1
    %p104 = por %p102, %p103
    %p105 = scmp.ne.s32.totalorder %s97, %s100
    %p106 = scmp.eq.s32.totalorder %s9, 0
    %p107 = por %p105, %p106
    %p108 = scmp.ne.s32.totalorder %s97, %s100
    %p109 = scmp.eq.s32.totalorder %s14, 1
    %p110 = por %p108, %p109
    %p111 = scmp.ne.s32.totalorder %s100, %s101
    %p112 = scmp.eq.s32.totalorder %s14, 0
    %p113 = por %p111, %p112
    %p114 = scmp.ne.s32.totalorder %s100, %s101
    %p115 = scmp.eq.s32.totalorder %s15, 1
    %p116 = por %p114, %p115
    %p118 = scmp.ne.s32.totalorder %s101, %s117
    %p119 = scmp.eq.s32.totalorder %s15, 0
    %p120 = por %p118, %p119
    %p121 = scmp.le.s32.totalorder 1, %s9
    %p122 = scmp.lt.s32.totalorder %s9, 3
    %p123 = pnand %p121, %p122
    %p124 = pneg %p123
    // Predicated region
    $region9: #{transformer_forward.30} parent=5 // pred_check
      _
    $region10: #{transformer_forward.30} parent=5 // pred_check_branch
      %126 = sbr.rel (%p123) target = $region12
    $region11: #{transformer_forward.30} parent=5 // pred_region
      %s127 = ssub.s32 %s9, 1
    $region12: #{transformer_forward.30} parent=5 // pred_fallthru
      _
    %p128 = scmp.lt.s32.totalorder %s9, 2
    // Predicated region
    $region13: #{transformer_forward.30} parent=5 // pred_check
      %p129 = pneg %p128
    $region14: #{transformer_forward.30} parent=5 // pred_check_branch
      %131 = sbr.rel (%p129) target = $region16
    $region15: #{transformer_forward.30} parent=5 // pred_region
      // Predicated region
      $region17: #{transformer_forward.30} parent=15 // pred_check
        %p132 = pneg %p29
      $region18: #{transformer_forward.30} parent=15 // pred_check_branch
        %134 = sbr.rel (%p132) target = $region20
      $region19: #{transformer_forward.30} parent=15 // pred_region
        %p135 = scmp.lt.s32.totalorder %s9, 1
        %s136 = scalar_select %p135, %s9, 1
        %s137 = smul.addr %s136, 4
        %s138 = scalar_lea.vmem %s0, %s137
      $region20: #{transformer_forward.30} parent=15 // pred_fallthru
        _
      // Predicated region
      $region21: #{transformer_forward.30} parent=15 // pred_check
        %p139 = pneg %p55
      $region22: #{transformer_forward.30} parent=15 // pred_check_branch
        %141 = sbr.rel (%p139) target = $region24
      $region23: #{transformer_forward.30} parent=15 // pred_region
        %p142 = scmp.lt.s32.totalorder %s9, 1
        %s143 = scalar_select %p142, %s9, 1
        %s144 = scalar_lea.vmem %s1, %s143
      $region24: #{transformer_forward.30} parent=15 // pred_fallthru
        _
      // Predicated region
      $region25: #{transformer_forward.30} parent=15 // pred_check
        %p145 = pneg %p81
      $region26: #{transformer_forward.30} parent=15 // pred_check_branch
        %147 = sbr.rel (%p145) target = $region28
      $region27: #{transformer_forward.30} parent=15 // pred_region
        %p148 = scmp.lt.s32.totalorder %s9, 1
        %s149 = scalar_select %p148, %s9, 1
        %s150 = smul.addr %s149, 8
        %s151 = scalar_lea.vmem %s2, %s150
      $region28: #{transformer_forward.30} parent=15 // pred_fallthru
        _
    $region16: #{transformer_forward.30} parent=5 // pred_fallthru
      _
    %p152 = scmp.le.s32.totalorder 1, %s9
    %p153 = scmp.lt.s32.totalorder %s9, 3
    %p154 = pnand %p152, %p153
    %p155 = pneg %p154
    // Predicated region
    $region29: #{transformer_forward.30} parent=5 // pred_check
      _
    $region30: #{transformer_forward.30} parent=5 // pred_check_branch
      %157 = sbr.rel (%p154) target = $region32
    $region31: #{transformer_forward.30} parent=5 // pred_region
      %s158 = ssub.s32 %s9, 1
      %p159 = scmp.lt.s32.totalorder %s14, 1
      %s160 = scalar_select %p159, %s14, 1
      %s161 = smul.addr %s160, 4
      %s162 = scalar_lea.vmem %s0, %s161
      %p163 = pneg %p35
      %p164 = pneg %p32
      %p165 = scmp.lt.s32.totalorder %s14, 1
      %s166 = scalar_select %p165, %s14, 1
      %s167 = scalar_lea.vmem %s1, %s166
      %p168 = pneg %p61
      %p169 = pneg %p58
      %p170 = scmp.lt.s32.totalorder %s14, 1
      %s171 = scalar_select %p170, %s14, 1
      %s172 = smul.addr %s171, 8
      %s173 = scalar_lea.vmem %s2, %s172
      %p174 = pneg %p87
      %p175 = pneg %p84
      %p176 = pneg %p113
      %p177 = pneg %p110
      %p178 = scmp.lt.s32.totalorder %s14, 1
      %s179 = scalar_select %p178, %s14, 1
      %s180 = smul.addr %s179, 4
      %s181 = scalar_lea.vmem %s3, %s180
      %p182 = scmp.lt.s32.totalorder %s14, 1
      %s183 = scalar_select %p182, %s14, 1
      %s184 = smul.addr %s183, 4
      %s185 = scalar_lea.vmem %s0, %s184
      %p186 = scmp.lt.s32.totalorder %s14, 1
      %s187 = scalar_select %p186, %s14, 1
      %s188 = scalar_lea.vmem %s1, %s187
      %p189 = scmp.lt.s32.totalorder %s14, 1
      %s190 = scalar_select %p189, %s14, 1
      %s191 = smul.addr %s190, 8
      %s192 = scalar_lea.vmem %s2, %s191
      %p193 = scmp.lt.s32.totalorder %s14, 1
      %s194 = scalar_select %p193, %s14, 1
      %s195 = smul.addr %s194, 4
      %s196 = scalar_lea.vmem %s3, %s195
      %v198 = vld [vmem:[%s192] sm:$0xff]
      %v199 = vld [vmem:[%s188] sm:$0x1]
      %201 = vset.pattern.permute.xlu0 0
      %202 = vperm.xlu0 %201, %v198
      %v203 = vpop.permute.xlu0 %202
      %v206 = vlaneseq
      %v207 = vshrl.u32 %v206, 7
      %v208 = vsub.s32 0, %v207
      %v209 = vrot.slane %v199, %v208
      %v211 = vmul.f32 %v203, %v209
      %vm212 = vcmp.eq.f32.partialorder %v211, 0.0
      %v213 = vld [vmem:[%s185] sm:$0xf]
      %v214 = vunpack.c.l.bf16 %v213
      %v215 = vmul.f32 %v214, 0.35355338
      %v216 = vpack.c.bf16 %v215, %v215
      %v218 = vunpack.c.l.b16 %v213
      %v219 = vpack.c.b16 %v218, %v218
      %220 = vrot.lane.b32.xlu0 %v219, 96
      %v221 = vpop.permute.xlu0 %220
      %vm222 = vcmask 64512
      %v224 = vsel %vm222, %v216, 0
      %v227 = vsel %vm222, %v221, 0
      %229 = vmatprep.subr.bf16.mxu0 0
      %230 = vmatpush1.bf16.xpose.msra.mxu0 %v227
      %231 = vmatprep.subr.bf16.mxu0 0
      %232 = vmatpush1.bf16.xpose.msra.mxu0 0
      %233 = vmatprep.subr.bf16.mxu0 0
      %234 = vmatpush1.bf16.xpose.msra.mxu0 0
      %235 = vmatprep.subr.bf16.mxu0 0
      %236 = vmatpush1.bf16.xpose.msra.mxu0 0
      %237 = vmatprep.subr.bf16.mxu0 0
      %238 = vmatpush1.bf16.xpose.msra.mxu0 0
      %239 = vmatprep.subr.bf16.mxu0 0
      %240 = vmatpush1.bf16.xpose.msra.mxu0 0
      %241 = vmatprep.subr.bf16.mxu0 0
      %242 = vmatpush1.bf16.xpose.msra.mxu0 0
      %243 = vmatprep.subr.bf16.mxu0 0
      %244 = vmatpush1.bf16.xpose.msra.mxu0 0
      %245 = vmatprep.subr.bf16.mxu0 0
      %246 = vmatpush1.bf16.xpose.msra.mxu0 0
      %247 = vmatprep.subr.bf16.mxu0 0
      %248 = vmatpush1.bf16.xpose.msra.mxu0 0
      %249 = vmatprep.subr.bf16.mxu0 0
      %250 = vmatpush1.bf16.xpose.msra.mxu0 0
      %251 = vmatprep.subr.bf16.mxu0 0
      %252 = vmatpush1.bf16.xpose.msra.mxu0 0
      %253 = vmatprep.subr.bf16.mxu0 0
      %254 = vmatpush1.bf16.xpose.msra.mxu0 0
      %255 = vmatprep.subr.bf16.mxu0 0
      %256 = vmatpush1.bf16.xpose.msra.mxu0 0
      %257 = vmatprep.subr.bf16.mxu0 0
      %258 = vmatpush1.bf16.xpose.msra.mxu0 0
      %259 = vmatprep.subr.bf16.mxu0 0
      %260 = vmatpush1.bf16.xpose.msra.mxu0 0
      %261 = vmatprep.mubr.bf16.mxu0 0
      %262 = vmatmul.mubr.bf16.gmra.mrb[0].mxu0 %v224
      %v263 = vpop.f32.mrb[0].mxu0
      %v264 = vadd.f32 0.0, %v263
      %v265 = vpop.f32.mrb[0].mxu0
      %v266 = vpop.f32.mrb[0].mxu0
      %v267 = vpop.f32.mrb[0].mxu0
      %268 = vdwg.mxu0
      %v269 = vsel %vm212, -10000.0, %v264
      %v270 = vsel %vm222, %v269, -inf
      %271 = vmax.xlane.f32.xlu0 %v270
      %v272 = vpop.xlane.xlu0 %271
      %v273 = vsub.f32 %v269, %v272
      %v274 = vmul.f32 %v273, 1.442695
      %v275 = vpow.pop %v274
      %v276 = vsel %vm222, %v275, 0.0
      %277 = vadd.xlane.f32.xlu0 %v276
      %v278 = vpop.xlane.xlu0 %277
      %v279 = vrcp.pop %v278
      %v280 = vmul.f32 %v275, %v279
      %v281 = vpack.c.bf16 %v280, %v280
      %282 = vrot.lane.b32.xlu0 %v219, 64
      %v283 = vpop.permute.xlu0 %282
      %v285 = vsel %vm222, %v281, 0
      %vm287 = vcmask 1043456
      %v289 = vsel %vm287, %v283, 0
      %291 = vmatprep.subr.bf16.mxu0 0
      %292 = vmatpush1.bf16.msra.mxu0 %v289
      %293 = vmatprep.subr.bf16.mxu0 0
      %294 = vmatpush1.bf16.msra.mxu0 0
      %295 = vmatprep.subr.bf16.mxu0 0
      %296 = vmatpush1.bf16.msra.mxu0 0
      %297 = vmatprep.subr.bf16.mxu0 0
      %298 = vmatpush1.bf16.msra.mxu0 0
      %299 = vmatprep.subr.bf16.mxu0 0
      %300 = vmatpush1.bf16.msra.mxu0 0
      %301 = vmatprep.subr.bf16.mxu0 0
      %302 = vmatpush1.bf16.msra.mxu0 0
      %303 = vmatprep.subr.bf16.mxu0 0
      %304 = vmatpush1.bf16.msra.mxu0 0
      %305 = vmatprep.subr.bf16.mxu0 0
      %306 = vmatpush1.bf16.msra.mxu0 0
      %307 = vmatprep.subr.bf16.mxu0 0
      %308 = vmatpush1.bf16.msra.mxu0 0
      %309 = vmatprep.subr.bf16.mxu0 0
      %310 = vmatpush1.bf16.msra.mxu0 0
      %311 = vmatprep.subr.bf16.mxu0 0
      %312 = vmatpush1.bf16.msra.mxu0 0
      %313 = vmatprep.subr.bf16.mxu0 0
      %314 = vmatpush1.bf16.msra.mxu0 0
      %315 = vmatprep.subr.bf16.mxu0 0
      %316 = vmatpush1.bf16.msra.mxu0 0
      %317 = vmatprep.subr.bf16.mxu0 0
      %318 = vmatpush1.bf16.msra.mxu0 0
      %319 = vmatprep.subr.bf16.mxu0 0
      %320 = vmatpush1.bf16.msra.mxu0 0
      %321 = vmatprep.subr.bf16.mxu0 0
      %322 = vmatpush1.bf16.msra.mxu0 0
      %323 = vmatprep.mubr.bf16.mxu0 0
      %324 = vmatmul.mubr.bf16.gmra.mrb[0].mxu0 %v285
      %v325 = vpop.f32.mrb[0].mxu0
      %v326 = vadd.f32 0.0, %v325
      %v327 = vpop.f32.mrb[0].mxu0
      %v328 = vpop.f32.mrb[0].mxu0
      %v329 = vpop.f32.mrb[0].mxu0
      %330 = vdwg.mxu0
      %332 = vrot.lane.b32.xlu0 %v216, 120
      %v333 = vpop.permute.xlu0 %332
      %334 = vrot.lane.b32.xlu0 %v219, 88
      %v335 = vpop.permute.xlu0 %334
      %v337 = vsel %vm222, %v333, 0
      %v340 = vsel %vm222, %v335, 0
      %342 = vmatprep.subr.bf16.mxu0 0
      %343 = vmatpush1.bf16.xpose.msra.mxu0 %v340
      %344 = vmatprep.subr.bf16.mxu0 0
      %345 = vmatpush1.bf16.xpose.msra.mxu0 0
      %346 = vmatprep.subr.bf16.mxu0 0
      %347 = vmatpush1.bf16.xpose.msra.mxu0 0
      %348 = vmatprep.subr.bf16.mxu0 0
      %349 = vmatpush1.bf16.xpose.msra.mxu0 0
      %350 = vmatprep.subr.bf16.mxu0 0
      %351 = vmatpush1.bf16.xpose.msra.mxu0 0
      %352 = vmatprep.subr.bf16.mxu0 0
      %353 = vmatpush1.bf16.xpose.msra.mxu0 0
      %354 = vmatprep.subr.bf16.mxu0 0
      %355 = vmatpush1.bf16.xpose.msra.mxu0 0
      %356 = vmatprep.subr.bf16.mxu0 0
      %357 = vmatpush1.bf16.xpose.msra.mxu0 0
      %358 = vmatprep.subr.bf16.mxu0 0
      %359 = vmatpush1.bf16.xpose.msra.mxu0 0
      %360 = vmatprep.subr.bf16.mxu0 0
      %361 = vmatpush1.bf16.xpose.msra.mxu0 0
      %362 = vmatprep.subr.bf16.mxu0 0
      %363 = vmatpush1.bf16.xpose.msra.mxu0 0
      %364 = vmatprep.subr.bf16.mxu0 0
      %365 = vmatpush1.bf16.xpose.msra.mxu0 0
      %366 = vmatprep.subr.bf16.mxu0 0
      %367 = vmatpush1.bf16.xpose.msra.mxu0 0
      %368 = vmatprep.subr.bf16.mxu0 0
      %369 = vmatpush1.bf16.xpose.msra.mxu0 0
      %370 = vmatprep.subr.bf16.mxu0 0
      %371 = vmatpush1.bf16.xpose.msra.mxu0 0
      %372 = vmatprep.subr.bf16.mxu0 0
      %373 = vmatpush1.bf16.xpose.msra.mxu0 0
      %374 = vmatprep.mubr.bf16.mxu0 0
      %375 = vmatmul.mubr.bf16.gmra.mrb[0].mxu0 %v337
      %v376 = vpop.f32.mrb[0].mxu0
      %v377 = vadd.f32 0.0, %v376
      %v378 = vpop.f32.mrb[0].mxu0
      %v379 = vpop.f32.mrb[0].mxu0
      %v380 = vpop.f32.mrb[0].mxu0
      %381 = vdwg.mxu0
      %v382 = vsel %vm212, -10000.0, %v377
      %v383 = vsel %vm222, %v382, -inf
      %384 = vmax.xlane.f32.xlu0 %v383
      %v385 = vpop.xlane.xlu0 %384
      %v386 = vsub.f32 %v382, %v385
      %v387 = vmul.f32 %v386, 1.442695
      %v388 = vpow.pop %v387
      %v389 = vsel %vm222, %v388, 0.0
      %390 = vadd.xlane.f32.xlu0 %v389
      %v391 = vpop.xlane.xlu0 %390
      %v392 = vrcp.pop %v391
      %v393 = vmul.f32 %v388, %v392
      %v394 = vpack.c.bf16 %v393, %v393
      %395 = vrot.lane.b32.xlu0 %v219, 56
      %v396 = vpop.permute.xlu0 %395
      %v398 = vsel %vm222, %v394, 0
      %v401 = vsel %vm287, %v396, 0
      %403 = vmatprep.subr.bf16.mxu0 0
      %404 = vmatpush1.bf16.msra.mxu0 %v401
      %405 = vmatprep.subr.bf16.mxu0 0
      %406 = vmatpush1.bf16.msra.mxu0 0
      %407 = vmatprep.subr.bf16.mxu0 0
      %408 = vmatpush1.bf16.msra.mxu0 0
      %409 = vmatprep.subr.bf16.mxu0 0
      %410 = vmatpush1.bf16.msra.mxu0 0
      %411 = vmatprep.subr.bf16.mxu0 0
      %412 = vmatpush1.bf16.msra.mxu0 0
      %413 = vmatprep.subr.bf16.mxu0 0
      %414 = vmatpush1.bf16.msra.mxu0 0
      %415 = vmatprep.subr.bf16.mxu0 0
      %416 = vmatpush1.bf16.msra.mxu0 0
      %417 = vmatprep.subr.bf16.mxu0 0
      %418 = vmatpush1.bf16.msra.mxu0 0
      %419 = vmatprep.subr.bf16.mxu0 0
      %420 = vmatpush1.bf16.msra.mxu0 0
      %421 = vmatprep.subr.bf16.mxu0 0
      %422 = vmatpush1.bf16.msra.mxu0 0
      %423 = vmatprep.subr.bf16.mxu0 0
      %424 = vmatpush1.bf16.msra.mxu0 0
      %425 = vmatprep.subr.bf16.mxu0 0
      %426 = vmatpush1.bf16.msra.mxu0 0
      %427 = vmatprep.subr.bf16.mxu0 0
      %428 = vmatpush1.bf16.msra.mxu0 0
      %429 = vmatprep.subr.bf16.mxu0 0
      %430 = vmatpush1.bf16.msra.mxu0 0
      %431 = vmatprep.subr.bf16.mxu0 0
      %432 = vmatpush1.bf16.msra.mxu0 0
      %433 = vmatprep.subr.bf16.mxu0 0
      %434 = vmatpush1.bf16.msra.mxu0 0
      %435 = vmatprep.mubr.bf16.mxu0 0
      %436 = vmatmul.mubr.bf16.gmra.mrb[0].mxu0 %v398
      %v437 = vpop.f32.mrb[0].mxu0
      %v438 = vadd.f32 0.0, %v437
      %v439 = vpop.f32.mrb[0].mxu0
      %v440 = vpop.f32.mrb[0].mxu0
      %v441 = vpop.f32.mrb[0].mxu0
      %442 = vdwg.mxu0
      %443 = vrot.lane.b32.xlu0 %v216, 112
      %v444 = vpop.permute.xlu0 %443
      %445 = vrot.lane.b32.xlu0 %v219, 80
      %v446 = vpop.permute.xlu0 %445
      %v448 = vsel %vm222, %v444, 0
      %v451 = vsel %vm222, %v446, 0
      %453 = vmatprep.subr.bf16.mxu0 0
      %454 = vmatpush1.bf16.xpose.msra.mxu0 %v451
      %455 = vmatprep.subr.bf16.mxu0 0
      %456 = vmatpush1.bf16.xpose.msra.mxu0 0
      %457 = vmatprep.subr.bf16.mxu0 0
      %458 = vmatpush1.bf16.xpose.msra.mxu0 0
      %459 = vmatprep.subr.bf16.mxu0 0
      %460 = vmatpush1.bf16.xpose.msra.mxu0 0
      %461 = vmatprep.subr.bf16.mxu0 0
      %462 = vmatpush1.bf16.xpose.msra.mxu0 0
      %463 = vmatprep.subr.bf16.mxu0 0
      %464 = vmatpush1.bf16.xpose.msra.mxu0 0
      %465 = vmatprep.subr.bf16.mxu0 0
      %466 = vmatpush1.bf16.xpose.msra.mxu0 0
      %467 = vmatprep.subr.bf16.mxu0 0
      %468 = vmatpush1.bf16.xpose.msra.mxu0 0
      %469 = vmatprep.subr.bf16.mxu0 0
      %470 = vmatpush1.bf16.xpose.msra.mxu0 0
      %471 = vmatprep.subr.bf16.mxu0 0
      %472 = vmatpush1.bf16.xpose.msra.mxu0 0
      %473 = vmatprep.subr.bf16.mxu0 0
      %474 = vmatpush1.bf16.xpose.msra.mxu0 0
      %475 = vmatprep.subr.bf16.mxu0 0
      %476 = vmatpush1.bf16.xpose.msra.mxu0 0
      %477 = vmatprep.subr.bf16.mxu0 0
      %478 = vmatpush1.bf16.xpose.msra.mxu0 0
      %479 = vmatprep.subr.bf16.mxu0 0
      %480 = vmatpush1.bf16.xpose.msra.mxu0 0
      %481 = vmatprep.subr.bf16.mxu0 0
      %482 = vmatpush1.bf16.xpose.msra.mxu0 0
      %483 = vmatprep.subr.bf16.mxu0 0
      %484 = vmatpush1.bf16.xpose.msra.mxu0 0
      %485 = vmatprep.mubr.bf16.mxu0 0
      %486 = vmatmul.mubr.bf16.gmra.mrb[0].mxu0 %v448
      %v487 = vpop.f32.mrb[0].mxu0
      %v488 = vadd.f32 0.0, %v487
      %v489 = vpop.f32.mrb[0].mxu0
      %v490 = vpop.f32.mrb[0].mxu0
      %v491 = vpop.f32.mrb[0].mxu0
      %492 = vdwg.mxu0
      %v493 = vsel %vm212, -10000.0, %v488
      %v494 = vsel %vm222, %v493, -inf
      %495 = vmax.xlane.f32.xlu0 %v494
      %v496 = vpop.xlane.xlu0 %495
      %v497 = vsub.f32 %v493, %v496
      %v498 = vmul.f32 %v497, 1.442695
      %v499 = vpow.pop %v498
      %v500 = vsel %vm222, %v499, 0.0
      %501 = vadd.xlane.f32.xlu0 %v500
      %v502 = vpop.xlane.xlu0 %501
      %v503 = vrcp.pop %v502
      %v504 = vmul.f32 %v499, %v503
      %v505 = vpack.c.bf16 %v504, %v504
      %506 = vrot.lane.b32.xlu0 %v219, 48
      %v507 = vpop.permute.xlu0 %506
      %v509 = vsel %vm222, %v505, 0
      %v512 = vsel %vm287, %v507, 0
      %514 = vmatprep.subr.bf16.mxu0 0
      %515 = vmatpush1.bf16.msra.mxu0 %v512
      %516 = vmatprep.subr.bf16.mxu0 0
      %517 = vmatpush1.bf16.msra.mxu0 0
      %518 = vmatprep.subr.bf16.mxu0 0
      %519 = vmatpush1.bf16.msra.mxu0 0
      %520 = vmatprep.subr.bf16.mxu0 0
      %521 = vmatpush1.bf16.msra.mxu0 0
      %522 = vmatprep.subr.bf16.mxu0 0
      %523 = vmatpush1.bf16.msra.mxu0 0
      %524 = vmatprep.subr.bf16.mxu0 0
      %525 = vmatpush1.bf16.msra.mxu0 0
      %526 = vmatprep.subr.bf16.mxu0 0
      %527 = vmatpush1.bf16.msra.mxu0 0
      %528 = vmatprep.subr.bf16.mxu0 0
      %529 = vmatpush1.bf16.msra.mxu0 0
      %530 = vmatprep.subr.bf16.mxu0 0
      %531 = vmatpush1.bf16.msra.mxu0 0
      %532 = vmatprep.subr.bf16.mxu0 0
      %533 = vmatpush1.bf16.msra.mxu0 0
      %534 = vmatprep.subr.bf16.mxu0 0
      %535 = vmatpush1.bf16.msra.mxu0 0
      %536 = vmatprep.subr.bf16.mxu0 0
      %537 = vmatpush1.bf16.msra.mxu0 0
      %538 = vmatprep.subr.bf16.mxu0 0
      %539 = vmatpush1.bf16.msra.mxu0 0
      %540 = vmatprep.subr.bf16.mxu0 0
      %541 = vmatpush1.bf16.msra.mxu0 0
      %542 = vmatprep.subr.bf16.mxu0 0
      %543 = vmatpush1.bf16.msra.mxu0 0
      %544 = vmatprep.subr.bf16.mxu0 0
      %545 = vmatpush1.bf16.msra.mxu0 0
      %546 = vmatprep.mubr.bf16.mxu0 0
      %547 = vmatmul.mubr.bf16.gmra.mrb[0].mxu0 %v509
      %v548 = vpop.f32.mrb[0].mxu0
      %v549 = vadd.f32 0.0, %v548
      %v550 = vpop.f32.mrb[0].mxu0
      %v551 = vpop.f32.mrb[0].mxu0
      %v552 = vpop.f32.mrb[0].mxu0
      %553 = vdwg.mxu0
      %554 = vrot.lane.b32.xlu0 %v216, 104
      %v555 = vpop.permute.xlu0 %554
      %556 = vrot.lane.b32.xlu0 %v219, 72
      %v557 = vpop.permute.xlu0 %556
      %v559 = vsel %vm222, %v555, 0
      %v562 = vsel %vm222, %v557, 0
      %564 = vmatprep.subr.bf16.mxu0 0
      %565 = vmatpush1.bf16.xpose.msra.mxu0 %v562
      %566 = vmatprep.subr.bf16.mxu0 0
      %567 = vmatpush1.bf16.xpose.msra.mxu0 0
      %568 = vmatprep.subr.bf16.mxu0 0
      %569 = vmatpush1.bf16.xpose.msra.mxu0 0
      %570 = vmatprep.subr.bf16.mxu0 0
      %571 = vmatpush1.bf16.xpose.msra.mxu0 0
      %572 = vmatprep.subr.bf16.mxu0 0
      %573 = vmatpush1.bf16.xpose.msra.mxu0 0
      %574 = vmatprep.subr.bf16.mxu0 0
      %575 = vmatpush1.bf16.xpose.msra.mxu0 0
      %576 = vmatprep.subr.bf16.mxu0 0
      %577 = vmatpush1.bf16.xpose.msra.mxu0 0
      %578 = vmatprep.subr.bf16.mxu0 0
      %579 = vmatpush1.bf16.xpose.msra.mxu0 0
      %580 = vmatprep.subr.bf16.mxu0 0
      %581 = vmatpush1.bf16.xpose.msra.mxu0 0
      %582 = vmatprep.subr.bf16.mxu0 0
      %583 = vmatpush1.bf16.xpose.msra.mxu0 0
      %584 = vmatprep.subr.bf16.mxu0 0
      %585 = vmatpush1.bf16.xpose.msra.mxu0 0
      %586 = vmatprep.subr.bf16.mxu0 0
      %587 = vmatpush1.bf16.xpose.msra.mxu0 0
      %588 = vmatprep.subr.bf16.mxu0 0
      %589 = vmatpush1.bf16.xpose.msra.mxu0 0
      %590 = vmatprep.subr.bf16.mxu0 0
      %591 = vmatpush1.bf16.xpose.msra.mxu0 0
      %592 = vmatprep.subr.bf16.mxu0 0
      %593 = vmatpush1.bf16.xpose.msra.mxu0 0
      %594 = vmatprep.subr.bf16.mxu0 0
      %595 = vmatpush1.bf16.xpose.msra.mxu0 0
      %596 = vmatprep.mubr.bf16.mxu0 0
      %597 = vmatmul.mubr.bf16.gmra.mrb[0].mxu0 %v559
      %v598 = vpop.f32.mrb[0].mxu0
      %v599 = vadd.f32 0.0, %v598
      %v600 = vpop.f32.mrb[0].mxu0
      %v601 = vpop.f32.mrb[0].mxu0
      %v602 = vpop.f32.mrb[0].mxu0
      %603 = vdwg.mxu0
      %v604 = vsel %vm212, -10000.0, %v599
      %v605 = vsel %vm222, %v604, -inf
      %606 = vmax.xlane.f32.xlu0 %v605
      %v607 = vpop.xlane.xlu0 %606
      %v608 = vsub.f32 %v604, %v607
      %v609 = vmul.f32 %v608, 1.442695
      %v610 = vpow.pop %v609
      %v611 = vsel %vm222, %v610, 0.0
      %612 = vadd.xlane.f32.xlu0 %v611
      %v613 = vpop.xlane.xlu0 %612
      %v614 = vrcp.pop %v613
      %v615 = vmul.f32 %v610, %v614
      %v616 = vpack.c.bf16 %v615, %v615
      %617 = vrot.lane.b32.xlu0 %v219, 40
      %v618 = vpop.permute.xlu0 %617
      %v620 = vsel %vm222, %v616, 0
      %v623 = vsel %vm287, %v618, 0
      %625 = vmatprep.subr.bf16.mxu0 0
      %626 = vmatpush1.bf16.msra.mxu0 %v623
      %627 = vmatprep.subr.bf16.mxu0 0
      %628 = vmatpush1.bf16.msra.mxu0 0
      %629 = vmatprep.subr.bf16.mxu0 0
      %630 = vmatpush1.bf16.msra.mxu0 0
      %631 = vmatprep.subr.bf16.mxu0 0
      %632 = vmatpush1.bf16.msra.mxu0 0
      %633 = vmatprep.subr.bf16.mxu0 0
      %634 = vmatpush1.bf16.msra.mxu0 0
      %635 = vmatprep.subr.bf16.mxu0 0
      %636 = vmatpush1.bf16.msra.mxu0 0
      %637 = vmatprep.subr.bf16.mxu0 0
      %638 = vmatpush1.bf16.msra.mxu0 0
      %639 = vmatprep.subr.bf16.mxu0 0
      %640 = vmatpush1.bf16.msra.mxu0 0
      %641 = vmatprep.subr.bf16.mxu0 0
      %642 = vmatpush1.bf16.msra.mxu0 0
      %643 = vmatprep.subr.bf16.mxu0 0
      %644 = vmatpush1.bf16.msra.mxu0 0
      %645 = vmatprep.subr.bf16.mxu0 0
      %646 = vmatpush1.bf16.msra.mxu0 0
      %647 = vmatprep.subr.bf16.mxu0 0
      %648 = vmatpush1.bf16.msra.mxu0 0
      %649 = vmatprep.subr.bf16.mxu0 0
      %650 = vmatpush1.bf16.msra.mxu0 0
      %651 = vmatprep.subr.bf16.mxu0 0
      %652 = vmatpush1.bf16.msra.mxu0 0
      %653 = vmatprep.subr.bf16.mxu0 0
      %654 = vmatpush1.bf16.msra.mxu0 0
      %655 = vmatprep.subr.bf16.mxu0 0
      %656 = vmatpush1.bf16.msra.mxu0 0
      %657 = vmatprep.mubr.bf16.mxu0 0
      %658 = vmatmul.mubr.bf16.gmra.mrb[0].mxu0 %v620
      %v659 = vpop.f32.mrb[0].mxu0
      %v660 = vadd.f32 0.0, %v659
      %v661 = vpop.f32.mrb[0].mxu0
      %v662 = vpop.f32.mrb[0].mxu0
      %v663 = vpop.f32.mrb[0].mxu0
      %664 = vdwg.mxu0
      %666 = vrot.lane.b32.xlu0 %v438, 8
      %v667 = vpop.permute.xlu0 %666
      %670 = vrot.lane.b32.xlu0 %v549, 16
      %v671 = vpop.permute.xlu0 %670
      %674 = vrot.lane.b32.xlu0 %v660, 24
      %v675 = vpop.permute.xlu0 %674
      %v677 = vsel %vm222, %v326, %v667
      %vm678 = vcmask 130048
      %v679 = vsel %vm678, %v677, %v671
      %vm680 = vcmask 195584
      %v681 = vsel %vm680, %v679, %v675
      %v682 = vpack.c.bf16 %v681, %v681
      %vm683 = vcmask 257024
      %684 = vst.msk [vmem:[%s196] sm:$0xf] %vm683, %v682
      %p685 = scmp.lt.s32.totalorder %s14, 1
      %s686 = scalar_select %p685, %s14, 1
      %s687 = smul.addr %s686, 4
      %s688 = scalar_lea.vmem %s3, %s687
      // Predicated region
      $region33: #{transformer_forward.30} parent=31 // pred_check
        %p689 = pneg %p110
      $region34: #{transformer_forward.30} parent=31 // pred_check_branch
        %691 = sbr.rel (%p689) target = $region36
      $region35: #{transformer_forward.30} parent=31 // pred_region
        _
      $region36: #{transformer_forward.30} parent=31 // pred_fallthru
        _
    $region32: #{transformer_forward.30} parent=5 // pred_fallthru
      _
    %p692 = scmp.le.s32.totalorder 2, %s9
    // Predicated region
    $region37: #{transformer_forward.30} parent=5 // pred_check
      %p693 = pneg %p692
    $region38: #{transformer_forward.30} parent=5 // pred_check_branch
      %695 = sbr.rel (%p693) target = $region40
    $region39: #{transformer_forward.30} parent=5 // pred_region
      %s696 = ssub.s32 %s9, 2
      // Predicated region
      $region41: #{transformer_forward.30} parent=39 // pred_check
        %p697 = pneg %p116
      $region42: #{transformer_forward.30} parent=39 // pred_check_branch
        %699 = sbr.rel (%p697) target = $region44
      $region43: #{transformer_forward.30} parent=39 // pred_region
        %p700 = scmp.lt.s32.totalorder %s15, 1
        %s701 = scalar_select %p700, %s15, 1
        %s702 = smul.addr %s701, 4
        %s703 = scalar_lea.vmem %s3, %s702
      $region44: #{transformer_forward.30} parent=39 // pred_fallthru
        _
    $region40: #{transformer_forward.30} parent=5 // pred_fallthru
      _
  $region6: #{transformer_forward.30} parent=0 // loop_footer
    %s13 = sadd.s32 1, %s9
  $region7: #{transformer_forward.30} parent=0 // loop_footer_branch
    %8 = sbr.rel target = $region3
  $region8: #{transformer_forward.30} parent=0 // loop_exit
    _

// kernel: transformer_forward.43
$region0: #{transformer_forward.43}
  #allocation0 [shape = 'u32[]', space=smem, size = 0x4, offset = 0x4, fixed_abs, tag = 'smem constant byte address 0x4 - core index']
  #allocation1 [shape = 'u32[144,128]{1,0:T(1,128)}', space=vmem, size = 0x12000, scoped, tag = 'internal scratch']
  %s0 = inlined_call_operand.vmem [shape: bf16[16,32], index: 0, kind: input, shape index: {}]
  %s1 = inlined_call_operand.vmem [shape: bf16[32,64], index: 1, kind: input, shape index: {}]
  %s2 = inlined_call_operand.vmem [shape: f32[1,64], index: 2, kind: input, shape index: {}]
  %s3 = inlined_call_operand.vmem [shape: bf16[16,64], index: 3, kind: output, shape index: {}]
  %s4 = sld [smem:[#allocation0]]
  $region22: #{transformer_forward.43} parent=0
    _
  %s6 = ssub.s32 1, %s4
  %s7 = scalar_select 0, %s6, %s4
  // Predicated region
  $region2: #{transformer_forward.43} parent=0 // pred_check
    _
  $region3: #{transformer_forward.43} parent=0 // pred_check_branch
    %9 = sbr.rel (0) target = $region5
  $region4: #{transformer_forward.43} parent=0 // pred_region
    _
  $region5: #{transformer_forward.43} parent=0 // pred_fallthru
    _
  // Predicated region
  $region6: #{transformer_forward.43} parent=0 // pred_check
    _
  $region7: #{transformer_forward.43} parent=0 // pred_check_branch
    %11 = sbr.rel (0) target = $region9
  $region8: #{transformer_forward.43} parent=0 // pred_region
    _
  $region9: #{transformer_forward.43} parent=0 // pred_fallthru
    _
  // Predicated region
  $region10: #{transformer_forward.43} parent=0 // pred_check
    _
  $region11: #{transformer_forward.43} parent=0 // pred_check_branch
    %13 = sbr.rel (0) target = $region13
  $region12: #{transformer_forward.43} parent=0 // pred_region
    _
  $region13: #{transformer_forward.43} parent=0 // pred_fallthru
    _
  %v15 = vld [vmem:[%s0] sm:$0xf]
  %v16 = vld [vmem:[%s0 + $0x4] sm:$0xf]
  %v17 = vld [vmem:[%s1] sm:$0xf]
  %v18 = vld [vmem:[%s1 + $0x4] sm:$0xf]
  %v19 = vld [vmem:[%s1 + $0x8] sm:$0xf]
  %v20 = vld [vmem:[%s1 + $0xc] sm:$0xf]
  %v21 = vld [vmem:[%s2] sm:$0x1]
  %v23 = vlaneseq
  %v24 = vshrl.u32 %v23, 7
  %v25 = vsub.s32 0, %v24
  %v26 = vrot.slane %v21, %v25
  %v30 = vunpack.c.l.b16 %v15
  %v31 = vunpack.c.l.b16 %v16
  %v32 = vpack.c.b16 %v31, %v30
  %v37 = vunpack.c.l.b16 %v17
  %v38 = vunpack.c.l.b16 %v18
  %v39 = vunpack.c.l.b16 %v19
  %v40 = vunpack.c.l.b16 %v20
  %v41 = vpack.c.b16 %v38, %v37
  %v42 = vpack.c.b16 %v40, %v39
  %vm45 = vcmask 261120
  %v47 = vsel %vm45, %v32, 0
  %49 = vmatprep.subr.bf16.mxu0 0
  %50 = vmatpush1.bf16.msra.mxu0 %v41
  %51 = vmatprep.subr.bf16.mxu0 0
  %52 = vmatpush1.bf16.msra.mxu0 %v42
  %53 = vmatprep.subr.bf16.mxu0 0
  %54 = vmatpush1.bf16.msra.mxu0 0
  %55 = vmatprep.subr.bf16.mxu0 0
  %56 = vmatpush1.bf16.msra.mxu0 0
  %57 = vmatprep.subr.bf16.mxu0 0
  %58 = vmatpush1.bf16.msra.mxu0 0
  %59 = vmatprep.subr.bf16.mxu0 0
  %60 = vmatpush1.bf16.msra.mxu0 0
  %61 = vmatprep.subr.bf16.mxu0 0
  %62 = vmatpush1.bf16.msra.mxu0 0
  %63 = vmatprep.subr.bf16.mxu0 0
  %64 = vmatpush1.bf16.msra.mxu0 0
  %65 = vmatprep.subr.bf16.mxu0 0
  %66 = vmatpush1.bf16.msra.mxu0 0
  %67 = vmatprep.subr.bf16.mxu0 0
  %68 = vmatpush1.bf16.msra.mxu0 0
  %69 = vmatprep.subr.bf16.mxu0 0
  %70 = vmatpush1.bf16.msra.mxu0 0
  %71 = vmatprep.subr.bf16.mxu0 0
  %72 = vmatpush1.bf16.msra.mxu0 0
  %73 = vmatprep.subr.bf16.mxu0 0
  %74 = vmatpush1.bf16.msra.mxu0 0
  %75 = vmatprep.subr.bf16.mxu0 0
  %76 = vmatpush1.bf16.msra.mxu0 0
  %77 = vmatprep.subr.bf16.mxu0 0
  %78 = vmatpush1.bf16.msra.mxu0 0
  %79 = vmatprep.subr.bf16.mxu0 0
  %80 = vmatpush1.bf16.msra.mxu0 0
  %81 = vmatprep.mubr.bf16.mxu0 0
  %82 = vmatmul.mubr.bf16.gmra.mrb[0].mxu0 %v47
  %v83 = vpop.f32.mrb[0].mxu0
  %v84 = vadd.f32 %v26, %v83
  %v85 = vpop.f32.mrb[0].mxu0
  %v86 = vpop.f32.mrb[0].mxu0
  %v87 = vadd.f32 %v26, %v86
  %v88 = vpop.f32.mrb[0].mxu0
  %89 = vdwg.mxu0
  %v90 = vpack.c.bf16 %v87, %v84
  %v92 = vunpack.c.l.b16 %v90
  %v93 = vunpack.c.h.b16 %v90
  %v94 = vpack.c.b16 %v92, %v92
  %v95 = vpack.c.b16 %v93, %v93
  %vm98 = vcmask 519168
  %99 = vst.msk [vmem:[%s3] sm:$0xf] %vm98, %v94
  %100 = vst.msk [vmem:[%s3 + $0x4] sm:$0xf] %vm98, %v95
  // Predicated region
  $region14: #{transformer_forward.43} parent=0 // pred_check
    _
  $region15: #{transformer_forward.43} parent=0 // pred_check_branch
    %102 = sbr.rel (0) target = $region17
  $region16: #{transformer_forward.43} parent=0 // pred_region
    _
  $region17: #{transformer_forward.43} parent=0 // pred_fallthru
    _
  // Predicated region
  $region18: #{transformer_forward.43} parent=0 // pred_check
    _
  $region19: #{transformer_forward.43} parent=0 // pred_check_branch
    %104 = sbr.rel (0) target = $region21
  $region20: #{transformer_forward.43} parent=0 // pred_region
    _
  $region21: #{transformer_forward.43} parent=0 // pred_fallthru
    _

// kernel: transformer_forward.33
$region0: #{transformer_forward.33}
  #allocation0 [shape = 'u32[]', space=smem, size = 0x4, offset = 0x4, fixed_abs, tag = 'smem constant byte address 0x4 - core index']
  #allocation1 [shape = 'u32[144,128]{1,0:T(1,128)}', space=vmem, size = 0x12000, scoped, tag = 'internal scratch']
  %s0 = inlined_call_operand.vmem [shape: bf16[16,64], index: 0, kind: input, shape index: {}]
  %s1 = inlined_call_operand.vmem [shape: bf16[64,32], index: 1, kind: input, shape index: {}]
  %s2 = inlined_call_operand.vmem [shape: f32[1,32], index: 2, kind: input, shape index: {}]
  %s3 = inlined_call_operand.vmem [shape: bf16[16,32], index: 3, kind: input, shape index: {}]
  %s4 = inlined_call_operand.vmem [shape: f32[1,32], index: 4, kind: input, shape index: {}]
  %s5 = inlined_call_operand.vmem [shape: f32[1,32], index: 5, kind: input, shape index: {}]
  %s6 = inlined_call_operand.vmem [shape: bf16[16,32], index: 6, kind: output, shape index: {}]
  %s7 = sld [smem:[#allocation0]]
  $region34: #{transformer_forward.33} parent=0
    _
  %s9 = ssub.s32 1, %s7
  %s10 = scalar_select 0, %s9, %s7
  // Predicated region
  $region2: #{transformer_forward.33} parent=0 // pred_check
    _
  $region3: #{transformer_forward.33} parent=0 // pred_check_branch
    %12 = sbr.rel (0) target = $region5
  $region4: #{transformer_forward.33} parent=0 // pred_region
    _
  $region5: #{transformer_forward.33} parent=0 // pred_fallthru
    _
  // Predicated region
  $region6: #{transformer_forward.33} parent=0 // pred_check
    _
  $region7: #{transformer_forward.33} parent=0 // pred_check_branch
    %14 = sbr.rel (0) target = $region9
  $region8: #{transformer_forward.33} parent=0 // pred_region
    _
  $region9: #{transformer_forward.33} parent=0 // pred_fallthru
    _
  // Predicated region
  $region10: #{transformer_forward.33} parent=0 // pred_check
    _
  $region11: #{transformer_forward.33} parent=0 // pred_check_branch
    %16 = sbr.rel (0) target = $region13
  $region12: #{transformer_forward.33} parent=0 // pred_region
    _
  $region13: #{transformer_forward.33} parent=0 // pred_fallthru
    _
  // Predicated region
  $region14: #{transformer_forward.33} parent=0 // pred_check
    _
  $region15: #{transformer_forward.33} parent=0 // pred_check_branch
    %18 = sbr.rel (0) target = $region17
  $region16: #{transformer_forward.33} parent=0 // pred_region
    _
  $region17: #{transformer_forward.33} parent=0 // pred_fallthru
    _
  // Predicated region
  $region18: #{transformer_forward.33} parent=0 // pred_check
    _
  $region19: #{transformer_forward.33} parent=0 // pred_check_branch
    %20 = sbr.rel (0) target = $region21
  $region20: #{transformer_forward.33} parent=0 // pred_region
    _
  $region21: #{transformer_forward.33} parent=0 // pred_fallthru
    _
  // Predicated region
  $region22: #{transformer_forward.33} parent=0 // pred_check
    _
  $region23: #{transformer_forward.33} parent=0 // pred_check_branch
    %22 = sbr.rel (0) target = $region25
  $region24: #{transformer_forward.33} parent=0 // pred_region
    _
  $region25: #{transformer_forward.33} parent=0 // pred_fallthru
    _
  %v24 = vld [vmem:[%s0] sm:$0xf]
  %v25 = vld [vmem:[%s0 + $0x4] sm:$0xf]
  %v26 = vld [vmem:[%s1] sm:$0xf]
  %v27 = vld [vmem:[%s1 + $0x4] sm:$0xf]
  %v28 = vld [vmem:[%s1 + $0x8] sm:$0xf]
  %v29 = vld [vmem:[%s1 + $0xc] sm:$0xf]
  %v30 = vld [vmem:[%s1 + $0x10] sm:$0xf]
  %v31 = vld [vmem:[%s1 + $0x14] sm:$0xf]
  %v32 = vld [vmem:[%s1 + $0x18] sm:$0xf]
  %v33 = vld [vmem:[%s1 + $0x1c] sm:$0xf]
  %v34 = vld [vmem:[%s2] sm:$0x1]
  %v36 = vlaneseq
  %v37 = vshrl.u32 %v36, 7
  %v38 = vsub.s32 0, %v37
  %v39 = vrot.slane %v34, %v38
  %v43 = vunpack.c.l.b16 %v24
  %v44 = vunpack.c.l.b16 %v25
  %v45 = vpack.c.b16 %v44, %v43
  %v54 = vunpack.c.l.b16 %v26
  %v55 = vunpack.c.l.b16 %v27
  %v56 = vunpack.c.l.b16 %v28
  %v57 = vunpack.c.l.b16 %v29
  %v58 = vunpack.c.l.b16 %v30
  %v59 = vunpack.c.l.b16 %v31
  %v60 = vunpack.c.l.b16 %v32
  %v61 = vunpack.c.l.b16 %v33
  %v62 = vpack.c.b16 %v55, %v54
  %v63 = vpack.c.b16 %v57, %v56
  %v64 = vpack.c.b16 %v59, %v58
  %v65 = vpack.c.b16 %v61, %v60
  %vm70 = vcmask 523264
  %v72 = vsel %vm70, %v45, 0
  %74 = vmatprep.subr.bf16.mxu0 0
  %75 = vmatpush1.bf16.msra.mxu0 %v62
  %76 = vmatprep.subr.bf16.mxu0 0
  %77 = vmatpush1.bf16.msra.mxu0 %v63
  %78 = vmatprep.subr.bf16.mxu0 0
  %79 = vmatpush1.bf16.msra.mxu0 %v64
  %80 = vmatprep.subr.bf16.mxu0 0
  %81 = vmatpush1.bf16.msra.mxu0 %v65
  %82 = vmatprep.subr.bf16.mxu0 0
  %83 = vmatpush1.bf16.msra.mxu0 0
  %84 = vmatprep.subr.bf16.mxu0 0
  %85 = vmatpush1.bf16.msra.mxu0 0
  %86 = vmatprep.subr.bf16.mxu0 0
  %87 = vmatpush1.bf16.msra.mxu0 0
  %88 = vmatprep.subr.bf16.mxu0 0
  %89 = vmatpush1.bf16.msra.mxu0 0
  %90 = vmatprep.subr.bf16.mxu0 0
  %91 = vmatpush1.bf16.msra.mxu0 0
  %92 = vmatprep.subr.bf16.mxu0 0
  %93 = vmatpush1.bf16.msra.mxu0 0
  %94 = vmatprep.subr.bf16.mxu0 0
  %95 = vmatpush1.bf16.msra.mxu0 0
  %96 = vmatprep.subr.bf16.mxu0 0
  %97 = vmatpush1.bf16.msra.mxu0 0
  %98 = vmatprep.subr.bf16.mxu0 0
  %99 = vmatpush1.bf16.msra.mxu0 0
  %100 = vmatprep.subr.bf16.mxu0 0
  %101 = vmatpush1.bf16.msra.mxu0 0
  %102 = vmatprep.subr.bf16.mxu0 0
  %103 = vmatpush1.bf16.msra.mxu0 0
  %104 = vmatprep.subr.bf16.mxu0 0
  %105 = vmatpush1.bf16.msra.mxu0 0
  %106 = vmatprep.mubr.bf16.mxu0 0
  %107 = vmatmul.mubr.bf16.gmra.mrb[0].mxu0 %v72
  %v108 = vpop.f32.mrb[0].mxu0
  %v109 = vadd.f32 %v39, %v108
  %v110 = vpop.f32.mrb[0].mxu0
  %v111 = vpop.f32.mrb[0].mxu0
  %v112 = vadd.f32 %v39, %v111
  %v113 = vpop.f32.mrb[0].mxu0
  %114 = vdwg.mxu0
  %v115 = vld [vmem:[%s3] sm:$0xf]
  %v116 = vld [vmem:[%s3 + $0x4] sm:$0xf]
  %v117 = vunpack.c.l.bf16 %v115
  %v118 = vunpack.c.l.bf16 %v116
  %v119 = vadd.f32 %v109, %v117
  %v120 = vadd.f32 %v112, %v118
  %v121 = vld [vmem:[%s4] sm:$0x1]
  %v122 = vld [vmem:[%s5] sm:$0x1]
  %vm123 = vcmask 261120
  %v124 = vsel %vm123, %v119, 0.0
  %125 = vadd.xlane.f32.xlu0 %v124
  %v126 = vpop.xlane.xlu0 %125
  %v127 = vsel %vm123, %v120, 0.0
  %128 = vadd.xlane.f32.xlu0 %v127
  %v129 = vpop.xlane.xlu0 %128
  %v130 = vrcp.pop 32.0
  %v131 = vmul.f32 %v126, %v130
  %v132 = vmul.f32 %v129, %v130
  %v133 = vsub.f32 %v119, %v131
  %v134 = vsub.f32 %v120, %v132
  %v135 = vmul.f32 %v133, %v133
  %v136 = vmul.f32 %v134, %v134
  %v137 = vsel %vm123, %v135, 0.0
  %138 = vadd.xlane.f32.xlu0 %v137
  %v139 = vpop.xlane.xlu0 %138
  %v140 = vsel %vm123, %v136, 0.0
  %141 = vadd.xlane.f32.xlu0 %v140
  %v142 = vpop.xlane.xlu0 %141
  %v143 = vmul.f32 %v139, %v130
  %v144 = vmul.f32 %v142, %v130
  %v145 = vadd.f32 %v143, 1e-12
  %v146 = vadd.f32 %v144, 1e-12
  %v147 = vrsqrt.pop %v145
  %v148 = vrsqrt.pop %v146
  %v150 = vlaneseq
  %v151 = vshrl.u32 %v150, 7
  %v152 = vsub.s32 0, %v151
  %v153 = vrot.slane %v121, %v152
  %v155 = vmul.f32 %v153, %v133
  %v156 = vmul.f32 %v153, %v134
  %v157 = vmul.f32 %v155, %v147
  %v158 = vmul.f32 %v156, %v148
  %v160 = vlaneseq
  %v161 = vshrl.u32 %v160, 7
  %v162 = vsub.s32 0, %v161
  %v163 = vrot.slane %v122, %v162
  %v165 = vadd.f32 %v157, %v163
  %v166 = vadd.f32 %v158, %v163
  %v167 = vpack.c.bf16 %v166, %v165
  %v169 = vunpack.c.l.b16 %v167
  %v170 = vunpack.c.h.b16 %v167
  %v171 = vpack.c.b16 %v169, %v169
  %v172 = vpack.c.b16 %v170, %v170
  %vm175 = vcmask 257024
  %176 = vst.msk [vmem:[%s6] sm:$0xf] %vm175, %v171
  %177 = vst.msk [vmem:[%s6 + $0x4] sm:$0xf] %vm175, %v172
  // Predicated region
  $region26: #{transformer_forward.33} parent=0 // pred_check
    _
  $region27: #{transformer_forward.33} parent=0 // pred_check_branch
    %179 = sbr.rel (0) target = $region29
  $region28: #{transformer_forward.33} parent=0 // pred_region
    _
  $region29: #{transformer_forward.33} parent=0 // pred_fallthru
    _
  // Predicated region
  $region30: #{transformer_forward.33} parent=0 // pred_check
    _
  $region31: #{transformer_forward.33} parent=0 // pred_check_branch
    %181 = sbr.rel (0) target = $region33
  $region32: #{transformer_forward.33} parent=0 // pred_region
    _
  $region33: #{transformer_forward.33} parent=0 // pred_fallthru
    _

// kernel: transformer_forward.42
$region0: #{transformer_forward.42}
  #allocation0 [shape = 'u32[]', space=smem, size = 0x4, offset = 0x4, fixed_abs, tag = 'smem constant byte address 0x4 - core index']
  #allocation1 [shape = 'u32[144,128]{1,0:T(1,128)}', space=vmem, size = 0x12000, scoped, tag = 'internal scratch']
  %s0 = inlined_call_operand.vmem [shape: bf16[16,32], index: 0, kind: input, shape index: {}]
  %s1 = inlined_call_operand.vmem [shape: bf16[32,32], index: 1, kind: input, shape index: {}]
  %s2 = inlined_call_operand.vmem [shape: f32[1,32], index: 2, kind: input, shape index: {}]
  %s3 = inlined_call_operand.vmem [shape: bf16[16,32], index: 3, kind: output, shape index: {}]
  %s4 = sld [smem:[#allocation0]]
  $region22: #{transformer_forward.42} parent=0
    _
  %s6 = ssub.s32 1, %s4
  %s7 = scalar_select 0, %s6, %s4
  // Predicated region
  $region2: #{transformer_forward.42} parent=0 // pred_check
    _
  $region3: #{transformer_forward.42} parent=0 // pred_check_branch
    %9 = sbr.rel (0) target = $region5
  $region4: #{transformer_forward.42} parent=0 // pred_region
    _
  $region5: #{transformer_forward.42} parent=0 // pred_fallthru
    _
  // Predicated region
  $region6: #{transformer_forward.42} parent=0 // pred_check
    _
  $region7: #{transformer_forward.42} parent=0 // pred_check_branch
    %11 = sbr.rel (0) target = $region9
  $region8: #{transformer_forward.42} parent=0 // pred_region
    _
  $region9: #{transformer_forward.42} parent=0 // pred_fallthru
    _
  // Predicated region
  $region10: #{transformer_forward.42} parent=0 // pred_check
    _
  $region11: #{transformer_forward.42} parent=0 // pred_check_branch
    %13 = sbr.rel (0) target = $region13
  $region12: #{transformer_forward.42} parent=0 // pred_region
    _
  $region13: #{transformer_forward.42} parent=0 // pred_fallthru
    _
  %v15 = vld [vmem:[%s0] sm:$0xf]
  %v16 = vld [vmem:[%s0 + $0x4] sm:$0xf]
  %v17 = vld [vmem:[%s1] sm:$0xf]
  %v18 = vld [vmem:[%s1 + $0x4] sm:$0xf]
  %v19 = vld [vmem:[%s1 + $0x8] sm:$0xf]
  %v20 = vld [vmem:[%s1 + $0xc] sm:$0xf]
  %v21 = vld [vmem:[%s2] sm:$0x1]
  %v23 = vlaneseq
  %v24 = vshrl.u32 %v23, 7
  %v25 = vsub.s32 0, %v24
  %v26 = vrot.slane %v21, %v25
  %v30 = vunpack.c.l.b16 %v15
  %v31 = vunpack.c.l.b16 %v16
  %v32 = vpack.c.b16 %v31, %v30
  %v37 = vunpack.c.l.b16 %v17
  %v38 = vunpack.c.l.b16 %v18
  %v39 = vunpack.c.l.b16 %v19
  %v40 = vunpack.c.l.b16 %v20
  %v41 = vpack.c.b16 %v38, %v37
  %v42 = vpack.c.b16 %v40, %v39
  %vm45 = vcmask 261120
  %v47 = vsel %vm45, %v32, 0
  %49 = vmatprep.subr.bf16.mxu0 0
  %50 = vmatpush1.bf16.msra.mxu0 %v41
  %51 = vmatprep.subr.bf16.mxu0 0
  %52 = vmatpush1.bf16.msra.mxu0 %v42
  %53 = vmatprep.subr.bf16.mxu0 0
  %54 = vmatpush1.bf16.msra.mxu0 0
  %55 = vmatprep.subr.bf16.mxu0 0
  %56 = vmatpush1.bf16.msra.mxu0 0
  %57 = vmatprep.subr.bf16.mxu0 0
  %58 = vmatpush1.bf16.msra.mxu0 0
  %59 = vmatprep.subr.bf16.mxu0 0
  %60 = vmatpush1.bf16.msra.mxu0 0
  %61 = vmatprep.subr.bf16.mxu0 0
  %62 = vmatpush1.bf16.msra.mxu0 0
  %63 = vmatprep.subr.bf16.mxu0 0
  %64 = vmatpush1.bf16.msra.mxu0 0
  %65 = vmatprep.subr.bf16.mxu0 0
  %66 = vmatpush1.bf16.msra.mxu0 0
  %67 = vmatprep.subr.bf16.mxu0 0
  %68 = vmatpush1.bf16.msra.mxu0 0
  %69 = vmatprep.subr.bf16.mxu0 0
  %70 = vmatpush1.bf16.msra.mxu0 0
  %71 = vmatprep.subr.bf16.mxu0 0
  %72 = vmatpush1.bf16.msra.mxu0 0
  %73 = vmatprep.subr.bf16.mxu0 0
  %74 = vmatpush1.bf16.msra.mxu0 0
  %75 = vmatprep.subr.bf16.mxu0 0
  %76 = vmatpush1.bf16.msra.mxu0 0
  %77 = vmatprep.subr.bf16.mxu0 0
  %78 = vmatpush1.bf16.msra.mxu0 0
  %79 = vmatprep.subr.bf16.mxu0 0
  %80 = vmatpush1.bf16.msra.mxu0 0
  %81 = vmatprep.mubr.bf16.mxu0 0
  %82 = vmatmul.mubr.bf16.gmra.mrb[0].mxu0 %v47
  %v83 = vpop.f32.mrb[0].mxu0
  %v84 = vadd.f32 %v26, %v83
  %v85 = vpop.f32.mrb[0].mxu0
  %v86 = vpop.f32.mrb[0].mxu0
  %v87 = vadd.f32 %v26, %v86
  %v88 = vpop.f32.mrb[0].mxu0
  %89 = vdwg.mxu0
  %v90 = vpack.c.bf16 %v87, %v84
  %v92 = vunpack.c.l.b16 %v90
  %v93 = vunpack.c.h.b16 %v90
  %v94 = vpack.c.b16 %v92, %v92
  %v95 = vpack.c.b16 %v93, %v93
  %vm98 = vcmask 257024
  %99 = vst.msk [vmem:[%s3] sm:$0xf] %vm98, %v94
  %100 = vst.msk [vmem:[%s3 + $0x4] sm:$0xf] %vm98, %v95
  // Predicated region
  $region14: #{transformer_forward.42} parent=0 // pred_check
    _
  $region15: #{transformer_forward.42} parent=0 // pred_check_branch
    %102 = sbr.rel (0) target = $region17
  $region16: #{transformer_forward.42} parent=0 // pred_region
    _
  $region17: #{transformer_forward.42} parent=0 // pred_fallthru
    _
  // Predicated region
  $region18: #{transformer_forward.42} parent=0 // pred_check
    _
  $region19: #{transformer_forward.42} parent=0 // pred_check_branch
    %104 = sbr.rel (0) target = $region21
  $region20: #{transformer_forward.42} parent=0 // pred_region
    _
  $region21: #{transformer_forward.42} parent=0 // pred_fallthru
    _

// kernel: transformer_forward.40
$region0: #{transformer_forward.40}
  #allocation0 [shape = 'u32[]', space=smem, size = 0x4, offset = 0x4, fixed_abs, tag = 'smem constant byte address 0x4 - core index']
  #allocation1 [shape = 'u32[144,128]{1,0:T(1,128)}', space=vmem, size = 0x12000, scoped, tag = 'internal scratch']
  %s0 = inlined_call_operand.vmem [shape: bf16[2,8,96], index: 0, kind: input, shape index: {}]
  %s1 = inlined_call_operand.vmem [shape: f32[2,1,8], index: 1, kind: input, shape index: {}]
  %s2 = inlined_call_operand.vmem [shape: f32[2,8,1], index: 2, kind: input, shape index: {}]
  %s3 = inlined_call_operand.vmem [shape: bf16[2,8,32], index: 3, kind: output, shape index: {}]
  %s4 = sld [smem:[#allocation0]]
  $region45: #{transformer_forward.40} parent=0
    _
  %s6 = ssub.s32 1, %s4
  %s7 = scalar_select 0, %s6, %s4
  loop: start=0, step=1, limit=4
  $region2: #{transformer_forward.40} parent=0 // loop_pre_header
    _
  $region3: #{transformer_forward.40} parent=0 // loop_header
    %s9 = sphi 0, %s13
    %p10 = scmp.ge.s32.totalorder %s9, 4
    %s19 = sphi 0, %s21
    %s22 = sphi 0, %s19
    %s23 = sphi 0, %s22
    %s39 = sphi 0, %s23
    %s45 = sphi 0, %s47
    %s48 = sphi 0, %s45
    %s49 = sphi 0, %s48
    %s65 = sphi 0, %s49
    %s71 = sphi 0, %s73
    %s74 = sphi 0, %s71
    %s75 = sphi 0, %s74
    %s91 = sphi 0, %s75
    %s97 = sphi 0, %s99
    %s100 = sphi 0, %s97
    %s101 = sphi 0, %s100
    %s117 = sphi 0, %s101
  $region4: #{transformer_forward.40} parent=0 // loop_header_branch
    %12 = sbr.rel (%p10) target = $region8
  $region5: #{transformer_forward.40} parent=0 // loop_body
    %s14 = ssub.s32 %s9, 1
    %s15 = ssub.s32 %s9, 2
    %s16 = sadd.s32 %s9, 1
    %s17 = ssub.s32 %s9, %s16
    %p18 = scmp.eq.s32.totalorder %s17, 0
    %s20 = sadd.s32 %s19, 1
    %s21 = scalar_select %p18, %s19, %s20
    %p24 = pneg %p18
    %p25 = scmp.eq.s32.totalorder %s9, 1
    %p26 = por %p24, %p25
    %p27 = scmp.ne.s32.totalorder %s19, %s22
    %p28 = scmp.eq.s32.totalorder %s9, 0
    %p29 = por %p27, %p28
    %p30 = scmp.ne.s32.totalorder %s19, %s22
    %p31 = scmp.eq.s32.totalorder %s14, 1
    %p32 = por %p30, %p31
    %p33 = scmp.ne.s32.totalorder %s22, %s23
    %p34 = scmp.eq.s32.totalorder %s14, 0
    %p35 = por %p33, %p34
    %p36 = scmp.ne.s32.totalorder %s22, %s23
    %p37 = scmp.eq.s32.totalorder %s15, 1
    %p38 = por %p36, %p37
    %p40 = scmp.ne.s32.totalorder %s23, %s39
    %p41 = scmp.eq.s32.totalorder %s15, 0
    %p42 = por %p40, %p41
    %s43 = ssub.s32 %s9, %s16
    %p44 = scmp.eq.s32.totalorder %s43, 0
    %s46 = sadd.s32 %s45, 1
    %s47 = scalar_select %p44, %s45, %s46
    %p50 = pneg %p44
    %p51 = scmp.eq.s32.totalorder %s9, 1
    %p52 = por %p50, %p51
    %p53 = scmp.ne.s32.totalorder %s45, %s48
    %p54 = scmp.eq.s32.totalorder %s9, 0
    %p55 = por %p53, %p54
    %p56 = scmp.ne.s32.totalorder %s45, %s48
    %p57 = scmp.eq.s32.totalorder %s14, 1
    %p58 = por %p56, %p57
    %p59 = scmp.ne.s32.totalorder %s48, %s49
    %p60 = scmp.eq.s32.totalorder %s14, 0
    %p61 = por %p59, %p60
    %p62 = scmp.ne.s32.totalorder %s48, %s49
    %p63 = scmp.eq.s32.totalorder %s15, 1
    %p64 = por %p62, %p63
    %p66 = scmp.ne.s32.totalorder %s49, %s65
    %p67 = scmp.eq.s32.totalorder %s15, 0
    %p68 = por %p66, %p67
    %s69 = ssub.s32 %s9, %s16
    %p70 = scmp.eq.s32.totalorder %s69, 0
    %s72 = sadd.s32 %s71, 1
    %s73 = scalar_select %p70, %s71, %s72
    %p76 = pneg %p70
    %p77 = scmp.eq.s32.totalorder %s9, 1
    %p78 = por %p76, %p77
    %p79 = scmp.ne.s32.totalorder %s71, %s74
    %p80 = scmp.eq.s32.totalorder %s9, 0
    %p81 = por %p79, %p80
    %p82 = scmp.ne.s32.totalorder %s71, %s74
    %p83 = scmp.eq.s32.totalorder %s14, 1
    %p84 = por %p82, %p83
    %p85 = scmp.ne.s32.totalorder %s74, %s75
    %p86 = scmp.eq.s32.totalorder %s14, 0
    %p87 = por %p85, %p86
    %p88 = scmp.ne.s32.totalorder %s74, %s75
    %p89 = scmp.eq.s32.totalorder %s15, 1
    %p90 = por %p88, %p89
    %p92 = scmp.ne.s32.totalorder %s75, %s91
    %p93 = scmp.eq.s32.totalorder %s15, 0
    %p94 = por %p92, %p93
    %s95 = ssub.s32 %s9, %s16
    %p96 = scmp.eq.s32.totalorder %s95, 0
    %s98 = sadd.s32 %s97, 1
    %s99 = scalar_select %p96, %s97, %s98
    %p102 = pneg %p96
    %p103 = scmp.eq.s32.totalorder %s9, 1
    %p104 = por %p102, %p103
    %p105 = scmp.ne.s32.totalorder %s97, %s100
    %p106 = scmp.eq.s32.totalorder %s9, 0
    %p107 = por %p105, %p106
    %p108 = scmp.ne.s32.totalorder %s97, %s100
    %p109 = scmp.eq.s32.totalorder %s14, 1
    %p110 = por %p108, %p109
    %p111 = scmp.ne.s32.totalorder %s100, %s101
    %p112 = scmp.eq.s32.totalorder %s14, 0
    %p113 = por %p111, %p112
    %p114 = scmp.ne.s32.totalorder %s100, %s101
    %p115 = scmp.eq.s32.totalorder %s15, 1
    %p116 = por %p114, %p115
    %p118 = scmp.ne.s32.totalorder %s101, %s117
    %p119 = scmp.eq.s32.totalorder %s15, 0
    %p120 = por %p118, %p119
    %p121 = scmp.le.s32.totalorder 1, %s9
    %p122 = scmp.lt.s32.totalorder %s9, 3
    %p123 = pnand %p121, %p122
    %p124 = pneg %p123
    // Predicated region
    $region9: #{transformer_forward.40} parent=5 // pred_check
      _
    $region10: #{transformer_forward.40} parent=5 // pred_check_branch
      %126 = sbr.rel (%p123) target = $region12
    $region11: #{transformer_forward.40} parent=5 // pred_region
      %s127 = ssub.s32 %s9, 1
    $region12: #{transformer_forward.40} parent=5 // pred_fallthru
      _
    %p128 = scmp.lt.s32.totalorder %s9, 2
    // Predicated region
    $region13: #{transformer_forward.40} parent=5 // pred_check
      %p129 = pneg %p128
    $region14: #{transformer_forward.40} parent=5 // pred_check_branch
      %131 = sbr.rel (%p129) target = $region16
    $region15: #{transformer_forward.40} parent=5 // pred_region
      // Predicated region
      $region17: #{transformer_forward.40} parent=15 // pred_check
        %p132 = pneg %p29
      $region18: #{transformer_forward.40} parent=15 // pred_check_branch
        %134 = sbr.rel (%p132) target = $region20
      $region19: #{transformer_forward.40} parent=15 // pred_region
        %p135 = scmp.lt.s32.totalorder %s9, 1
        %s136 = scalar_select %p135, %s9, 1
        %s137 = smul.addr %s136, 4
        %s138 = scalar_lea.vmem %s0, %s137
      $region20: #{transformer_forward.40} parent=15 // pred_fallthru
        _
      // Predicated region
      $region21: #{transformer_forward.40} parent=15 // pred_check
        %p139 = pneg %p55
      $region22: #{transformer_forward.40} parent=15 // pred_check_branch
        %141 = sbr.rel (%p139) target = $region24
      $region23: #{transformer_forward.40} parent=15 // pred_region
        %p142 = scmp.lt.s32.totalorder %s9, 1
        %s143 = scalar_select %p142, %s9, 1
        %s144 = scalar_lea.vmem %s1, %s143
      $region24: #{transformer_forward.40} parent=15 // pred_fallthru
        _
      // Predicated region
      $region25: #{transformer_forward.40} parent=15 // pred_check
        %p145 = pneg %p81
      $region26: #{transformer_forward.40} parent=15 // pred_check_branch
        %147 = sbr.rel (%p145) target = $region28
      $region27: #{transformer_forward.40} parent=15 // pred_region
        %p148 = scmp.lt.s32.totalorder %s9, 1
        %s149 = scalar_select %p148, %s9, 1
        %s150 = smul.addr %s149, 8
        %s151 = scalar_lea.vmem %s2, %s150
      $region28: #{transformer_forward.40} parent=15 // pred_fallthru
        _
    $region16: #{transformer_forward.40} parent=5 // pred_fallthru
      _
    %p152 = scmp.le.s32.totalorder 1, %s9
    %p153 = scmp.lt.s32.totalorder %s9, 3
    %p154 = pnand %p152, %p153
    %p155 = pneg %p154
    // Predicated region
    $region29: #{transformer_forward.40} parent=5 // pred_check
      _
    $region30: #{transformer_forward.40} parent=5 // pred_check_branch
      %157 = sbr.rel (%p154) target = $region32
    $region31: #{transformer_forward.40} parent=5 // pred_region
      %s158 = ssub.s32 %s9, 1
      %p159 = scmp.lt.s32.totalorder %s14, 1
      %s160 = scalar_select %p159, %s14, 1
      %s161 = smul.addr %s160, 4
      %s162 = scalar_lea.vmem %s0, %s161
      %p163 = pneg %p35
      %p164 = pneg %p32
      %p165 = scmp.lt.s32.totalorder %s14, 1
      %s166 = scalar_select %p165, %s14, 1
      %s167 = scalar_lea.vmem %s1, %s166
      %p168 = pneg %p61
      %p169 = pneg %p58
      %p170 = scmp.lt.s32.totalorder %s14, 1
      %s171 = scalar_select %p170, %s14, 1
      %s172 = smul.addr %s171, 8
      %s173 = scalar_lea.vmem %s2, %s172
      %p174 = pneg %p87
      %p175 = pneg %p84
      %p176 = pneg %p113
      %p177 = pneg %p110
      %p178 = scmp.lt.s32.totalorder %s14, 1
      %s179 = scalar_select %p178, %s14, 1
      %s180 = smul.addr %s179, 4
      %s181 = scalar_lea.vmem %s3, %s180
      %p182 = scmp.lt.s32.totalorder %s14, 1
      %s183 = scalar_select %p182, %s14, 1
      %s184 = smul.addr %s183, 4
      %s185 = scalar_lea.vmem %s0, %s184
      %p186 = scmp.lt.s32.totalorder %s14, 1
      %s187 = scalar_select %p186, %s14, 1
      %s188 = scalar_lea.vmem %s1, %s187
      %p189 = scmp.lt.s32.totalorder %s14, 1
      %s190 = scalar_select %p189, %s14, 1
      %s191 = smul.addr %s190, 8
      %s192 = scalar_lea.vmem %s2, %s191
      %p193 = scmp.lt.s32.totalorder %s14, 1
      %s194 = scalar_select %p193, %s14, 1
      %s195 = smul.addr %s194, 4
      %s196 = scalar_lea.vmem %s3, %s195
      %v198 = vld [vmem:[%s192] sm:$0xff]
      %v199 = vld [vmem:[%s188] sm:$0x1]
      %201 = vset.pattern.permute.xlu0 0
      %202 = vperm.xlu0 %201, %v198
      %v203 = vpop.permute.xlu0 %202
      %v206 = vlaneseq
      %v207 = vshrl.u32 %v206, 7
      %v208 = vsub.s32 0, %v207
      %v209 = vrot.slane %v199, %v208
      %v211 = vmul.f32 %v203, %v209
      %v212 = vlaneseq
      %v213 = vshrl.u32 %v212, 7
      %v214 = vlaneseq
      %v215 = vand.u32 %v214, 127
      %vm216 = vcmp.le.s32.totalorder %v215, %v213
      %v217 = vsel %vm216, 1, 0
      %v218 = vcvt.s32.f32 %v217
      %v219 = vmul.f32 %v211, %v218
      %vm220 = vcmp.eq.f32.partialorder %v219, 0.0
      %v221 = vld [vmem:[%s185] sm:$0xf]
      %v222 = vunpack.c.l.bf16 %v221
      %v223 = vmul.f32 %v222, 0.35355338
      %v224 = vpack.c.bf16 %v223, %v223
      %v226 = vunpack.c.l.b16 %v221
      %v227 = vpack.c.b16 %v226, %v226
      %228 = vrot.lane.b32.xlu0 %v227, 96
      %v229 = vpop.permute.xlu0 %228
      %vm230 = vcmask 64512
      %v232 = vsel %vm230, %v224, 0
      %v235 = vsel %vm230, %v229, 0
      %237 = vmatprep.subr.bf16.mxu0 0
      %238 = vmatpush1.bf16.xpose.msra.mxu0 %v235
      %239 = vmatprep.subr.bf16.mxu0 0
      %240 = vmatpush1.bf16.xpose.msra.mxu0 0
      %241 = vmatprep.subr.bf16.mxu0 0
      %242 = vmatpush1.bf16.xpose.msra.mxu0 0
      %243 = vmatprep.subr.bf16.mxu0 0
      %244 = vmatpush1.bf16.xpose.msra.mxu0 0
      %245 = vmatprep.subr.bf16.mxu0 0
      %246 = vmatpush1.bf16.xpose.msra.mxu0 0
      %247 = vmatprep.subr.bf16.mxu0 0
      %248 = vmatpush1.bf16.xpose.msra.mxu0 0
      %249 = vmatprep.subr.bf16.mxu0 0
      %250 = vmatpush1.bf16.xpose.msra.mxu0 0
      %251 = vmatprep.subr.bf16.mxu0 0
      %252 = vmatpush1.bf16.xpose.msra.mxu0 0
      %253 = vmatprep.subr.bf16.mxu0 0
      %254 = vmatpush1.bf16.xpose.msra.mxu0 0
      %255 = vmatprep.subr.bf16.mxu0 0
      %256 = vmatpush1.bf16.xpose.msra.mxu0 0
      %257 = vmatprep.subr.bf16.mxu0 0
      %258 = vmatpush1.bf16.xpose.msra.mxu0 0
      %259 = vmatprep.subr.bf16.mxu0 0
      %260 = vmatpush1.bf16.xpose.msra.mxu0 0
      %261 = vmatprep.subr.bf16.mxu0 0
      %262 = vmatpush1.bf16.xpose.msra.mxu0 0
      %263 = vmatprep.subr.bf16.mxu0 0
      %264 = vmatpush1.bf16.xpose.msra.mxu0 0
      %265 = vmatprep.subr.bf16.mxu0 0
      %266 = vmatpush1.bf16.xpose.msra.mxu0 0
      %267 = vmatprep.subr.bf16.mxu0 0
      %268 = vmatpush1.bf16.xpose.msra.mxu0 0
      %269 = vmatprep.mubr.bf16.mxu0 0
      %270 = vmatmul.mubr.bf16.gmra.mrb[0].mxu0 %v232
      %v271 = vpop.f32.mrb[0].mxu0
      %v272 = vadd.f32 0.0, %v271
      %v273 = vpop.f32.mrb[0].mxu0
      %v274 = vpop.f32.mrb[0].mxu0
      %v275 = vpop.f32.mrb[0].mxu0
      %276 = vdwg.mxu0
      %v277 = vsel %vm220, -10000.0, %v272
      %v278 = vsel %vm230, %v277, -inf
      %279 = vmax.xlane.f32.xlu0 %v278
      %v280 = vpop.xlane.xlu0 %279
      %v281 = vsub.f32 %v277, %v280
      %v282 = vmul.f32 %v281, 1.442695
      %v283 = vpow.pop %v282
      %v284 = vsel %vm230, %v283, 0.0
      %285 = vadd.xlane.f32.xlu0 %v284
      %v286 = vpop.xlane.xlu0 %285
      %v287 = vrcp.pop %v286
      %v288 = vmul.f32 %v283, %v287
      %v289 = vpack.c.bf16 %v288, %v288
      %290 = vrot.lane.b32.xlu0 %v227, 64
      %v291 = vpop.permute.xlu0 %290
      %v293 = vsel %vm230, %v289, 0
      %vm295 = vcmask 1043456
      %v297 = vsel %vm295, %v291, 0
      %299 = vmatprep.subr.bf16.mxu0 0
      %300 = vmatpush1.bf16.msra.mxu0 %v297
      %301 = vmatprep.subr.bf16.mxu0 0
      %302 = vmatpush1.bf16.msra.mxu0 0
      %303 = vmatprep.subr.bf16.mxu0 0
      %304 = vmatpush1.bf16.msra.mxu0 0
      %305 = vmatprep.subr.bf16.mxu0 0
      %306 = vmatpush1.bf16.msra.mxu0 0
      %307 = vmatprep.subr.bf16.mxu0 0
      %308 = vmatpush1.bf16.msra.mxu0 0
      %309 = vmatprep.subr.bf16.mxu0 0
      %310 = vmatpush1.bf16.msra.mxu0 0
      %311 = vmatprep.subr.bf16.mxu0 0
      %312 = vmatpush1.bf16.msra.mxu0 0
      %313 = vmatprep.subr.bf16.mxu0 0
      %314 = vmatpush1.bf16.msra.mxu0 0
      %315 = vmatprep.subr.bf16.mxu0 0
      %316 = vmatpush1.bf16.msra.mxu0 0
      %317 = vmatprep.subr.bf16.mxu0 0
      %318 = vmatpush1.bf16.msra.mxu0 0
      %319 = vmatprep.subr.bf16.mxu0 0
      %320 = vmatpush1.bf16.msra.mxu0 0
      %321 = vmatprep.subr.bf16.mxu0 0
      %322 = vmatpush1.bf16.msra.mxu0 0
      %323 = vmatprep.subr.bf16.mxu0 0
      %324 = vmatpush1.bf16.msra.mxu0 0
      %325 = vmatprep.subr.bf16.mxu0 0
      %326 = vmatpush1.bf16.msra.mxu0 0
      %327 = vmatprep.subr.bf16.mxu0 0
      %328 = vmatpush1.bf16.msra.mxu0 0
      %329 = vmatprep.subr.bf16.mxu0 0
      %330 = vmatpush1.bf16.msra.mxu0 0
      %331 = vmatprep.mubr.bf16.mxu0 0
      %332 = vmatmul.mubr.bf16.gmra.mrb[0].mxu0 %v293
      %v333 = vpop.f32.mrb[0].mxu0
      %v334 = vadd.f32 0.0, %v333
      %v335 = vpop.f32.mrb[0].mxu0
      %v336 = vpop.f32.mrb[0].mxu0
      %v337 = vpop.f32.mrb[0].mxu0
      %338 = vdwg.mxu0
      %340 = vrot.lane.b32.xlu0 %v224, 120
      %v341 = vpop.permute.xlu0 %340
      %342 = vrot.lane.b32.xlu0 %v227, 88
      %v343 = vpop.permute.xlu0 %342
      %v345 = vsel %vm230, %v341, 0
      %v348 = vsel %vm230, %v343, 0
      %350 = vmatprep.subr.bf16.mxu0 0
      %351 = vmatpush1.bf16.xpose.msra.mxu0 %v348
      %352 = vmatprep.subr.bf16.mxu0 0
      %353 = vmatpush1.bf16.xpose.msra.mxu0 0
      %354 = vmatprep.subr.bf16.mxu0 0
      %355 = vmatpush1.bf16.xpose.msra.mxu0 0
      %356 = vmatprep.subr.bf16.mxu0 0
      %357 = vmatpush1.bf16.xpose.msra.mxu0 0
      %358 = vmatprep.subr.bf16.mxu0 0
      %359 = vmatpush1.bf16.xpose.msra.mxu0 0
      %360 = vmatprep.subr.bf16.mxu0 0
      %361 = vmatpush1.bf16.xpose.msra.mxu0 0
      %362 = vmatprep.subr.bf16.mxu0 0
      %363 = vmatpush1.bf16.xpose.msra.mxu0 0
      %364 = vmatprep.subr.bf16.mxu0 0
      %365 = vmatpush1.bf16.xpose.msra.mxu0 0
      %366 = vmatprep.subr.bf16.mxu0 0
      %367 = vmatpush1.bf16.xpose.msra.mxu0 0
      %368 = vmatprep.subr.bf16.mxu0 0
      %369 = vmatpush1.bf16.xpose.msra.mxu0 0
      %370 = vmatprep.subr.bf16.mxu0 0
      %371 = vmatpush1.bf16.xpose.msra.mxu0 0
      %372 = vmatprep.subr.bf16.mxu0 0
      %373 = vmatpush1.bf16.xpose.msra.mxu0 0
      %374 = vmatprep.subr.bf16.mxu0 0
      %375 = vmatpush1.bf16.xpose.msra.mxu0 0
      %376 = vmatprep.subr.bf16.mxu0 0
      %377 = vmatpush1.bf16.xpose.msra.mxu0 0
      %378 = vmatprep.subr.bf16.mxu0 0
      %379 = vmatpush1.bf16.xpose.msra.mxu0 0
      %380 = vmatprep.subr.bf16.mxu0 0
      %381 = vmatpush1.bf16.xpose.msra.mxu0 0
      %382 = vmatprep.mubr.bf16.mxu0 0
      %383 = vmatmul.mubr.bf16.gmra.mrb[0].mxu0 %v345
      %v384 = vpop.f32.mrb[0].mxu0
      %v385 = vadd.f32 0.0, %v384
      %v386 = vpop.f32.mrb[0].mxu0
      %v387 = vpop.f32.mrb[0].mxu0
      %v388 = vpop.f32.mrb[0].mxu0
      %389 = vdwg.mxu0
      %v390 = vsel %vm220, -10000.0, %v385
      %v391 = vsel %vm230, %v390, -inf
      %392 = vmax.xlane.f32.xlu0 %v391
      %v393 = vpop.xlane.xlu0 %392
      %v394 = vsub.f32 %v390, %v393
      %v395 = vmul.f32 %v394, 1.442695
      %v396 = vpow.pop %v395
      %v397 = vsel %vm230, %v396, 0.0
      %398 = vadd.xlane.f32.xlu0 %v397
      %v399 = vpop.xlane.xlu0 %398
      %v400 = vrcp.pop %v399
      %v401 = vmul.f32 %v396, %v400
      %v402 = vpack.c.bf16 %v401, %v401
      %403 = vrot.lane.b32.xlu0 %v227, 56
      %v404 = vpop.permute.xlu0 %403
      %v406 = vsel %vm230, %v402, 0
      %v409 = vsel %vm295, %v404, 0
      %411 = vmatprep.subr.bf16.mxu0 0
      %412 = vmatpush1.bf16.msra.mxu0 %v409
      %413 = vmatprep.subr.bf16.mxu0 0
      %414 = vmatpush1.bf16.msra.mxu0 0
      %415 = vmatprep.subr.bf16.mxu0 0
      %416 = vmatpush1.bf16.msra.mxu0 0
      %417 = vmatprep.subr.bf16.mxu0 0
      %418 = vmatpush1.bf16.msra.mxu0 0
      %419 = vmatprep.subr.bf16.mxu0 0
      %420 = vmatpush1.bf16.msra.mxu0 0
      %421 = vmatprep.subr.bf16.mxu0 0
      %422 = vmatpush1.bf16.msra.mxu0 0
      %423 = vmatprep.subr.bf16.mxu0 0
      %424 = vmatpush1.bf16.msra.mxu0 0
      %425 = vmatprep.subr.bf16.mxu0 0
      %426 = vmatpush1.bf16.msra.mxu0 0
      %427 = vmatprep.subr.bf16.mxu0 0
      %428 = vmatpush1.bf16.msra.mxu0 0
      %429 = vmatprep.subr.bf16.mxu0 0
      %430 = vmatpush1.bf16.msra.mxu0 0
      %431 = vmatprep.subr.bf16.mxu0 0
      %432 = vmatpush1.bf16.msra.mxu0 0
      %433 = vmatprep.subr.bf16.mxu0 0
      %434 = vmatpush1.bf16.msra.mxu0 0
      %435 = vmatprep.subr.bf16.mxu0 0
      %436 = vmatpush1.bf16.msra.mxu0 0
      %437 = vmatprep.subr.bf16.mxu0 0
      %438 = vmatpush1.bf16.msra.mxu0 0
      %439 = vmatprep.subr.bf16.mxu0 0
      %440 = vmatpush1.bf16.msra.mxu0 0
      %441 = vmatprep.subr.bf16.mxu0 0
      %442 = vmatpush1.bf16.msra.mxu0 0
      %443 = vmatprep.mubr.bf16.mxu0 0
      %444 = vmatmul.mubr.bf16.gmra.mrb[0].mxu0 %v406
      %v445 = vpop.f32.mrb[0].mxu0
      %v446 = vadd.f32 0.0, %v445
      %v447 = vpop.f32.mrb[0].mxu0
      %v448 = vpop.f32.mrb[0].mxu0
      %v449 = vpop.f32.mrb[0].mxu0
      %450 = vdwg.mxu0
      %451 = vrot.lane.b32.xlu0 %v224, 112
      %v452 = vpop.permute.xlu0 %451
      %453 = vrot.lane.b32.xlu0 %v227, 80
      %v454 = vpop.permute.xlu0 %453
      %v456 = vsel %vm230, %v452, 0
      %v459 = vsel %vm230, %v454, 0
      %461 = vmatprep.subr.bf16.mxu0 0
      %462 = vmatpush1.bf16.xpose.msra.mxu0 %v459
      %463 = vmatprep.subr.bf16.mxu0 0
      %464 = vmatpush1.bf16.xpose.msra.mxu0 0
      %465 = vmatprep.subr.bf16.mxu0 0
      %466 = vmatpush1.bf16.xpose.msra.mxu0 0
      %467 = vmatprep.subr.bf16.mxu0 0
      %468 = vmatpush1.bf16.xpose.msra.mxu0 0
      %469 = vmatprep.subr.bf16.mxu0 0
      %470 = vmatpush1.bf16.xpose.msra.mxu0 0
      %471 = vmatprep.subr.bf16.mxu0 0
      %472 = vmatpush1.bf16.xpose.msra.mxu0 0
      %473 = vmatprep.subr.bf16.mxu0 0
      %474 = vmatpush1.bf16.xpose.msra.mxu0 0
      %475 = vmatprep.subr.bf16.mxu0 0
      %476 = vmatpush1.bf16.xpose.msra.mxu0 0
      %477 = vmatprep.subr.bf16.mxu0 0
      %478 = vmatpush1.bf16.xpose.msra.mxu0 0
      %479 = vmatprep.subr.bf16.mxu0 0
      %480 = vmatpush1.bf16.xpose.msra.mxu0 0
      %481 = vmatprep.subr.bf16.mxu0 0
      %482 = vmatpush1.bf16.xpose.msra.mxu0 0
      %483 = vmatprep.subr.bf16.mxu0 0
      %484 = vmatpush1.bf16.xpose.msra.mxu0 0
      %485 = vmatprep.subr.bf16.mxu0 0
      %486 = vmatpush1.bf16.xpose.msra.mxu0 0
      %487 = vmatprep.subr.bf16.mxu0 0
      %488 = vmatpush1.bf16.xpose.msra.mxu0 0
      %489 = vmatprep.subr.bf16.mxu0 0
      %490 = vmatpush1.bf16.xpose.msra.mxu0 0
      %491 = vmatprep.subr.bf16.mxu0 0
      %492 = vmatpush1.bf16.xpose.msra.mxu0 0
      %493 = vmatprep.mubr.bf16.mxu0 0
      %494 = vmatmul.mubr.bf16.gmra.mrb[0].mxu0 %v456
      %v495 = vpop.f32.mrb[0].mxu0
      %v496 = vadd.f32 0.0, %v495
      %v497 = vpop.f32.mrb[0].mxu0
      %v498 = vpop.f32.mrb[0].mxu0
      %v499 = vpop.f32.mrb[0].mxu0
      %500 = vdwg.mxu0
      %v501 = vsel %vm220, -10000.0, %v496
      %v502 = vsel %vm230, %v501, -inf
      %503 = vmax.xlane.f32.xlu0 %v502
      %v504 = vpop.xlane.xlu0 %503
      %v505 = vsub.f32 %v501, %v504
      %v506 = vmul.f32 %v505, 1.442695
      %v507 = vpow.pop %v506
      %v508 = vsel %vm230, %v507, 0.0
      %509 = vadd.xlane.f32.xlu0 %v508
      %v510 = vpop.xlane.xlu0 %509
      %v511 = vrcp.pop %v510
      %v512 = vmul.f32 %v507, %v511
      %v513 = vpack.c.bf16 %v512, %v512
      %514 = vrot.lane.b32.xlu0 %v227, 48
      %v515 = vpop.permute.xlu0 %514
      %v517 = vsel %vm230, %v513, 0
      %v520 = vsel %vm295, %v515, 0
      %522 = vmatprep.subr.bf16.mxu0 0
      %523 = vmatpush1.bf16.msra.mxu0 %v520
      %524 = vmatprep.subr.bf16.mxu0 0
      %525 = vmatpush1.bf16.msra.mxu0 0
      %526 = vmatprep.subr.bf16.mxu0 0
      %527 = vmatpush1.bf16.msra.mxu0 0
      %528 = vmatprep.subr.bf16.mxu0 0
      %529 = vmatpush1.bf16.msra.mxu0 0
      %530 = vmatprep.subr.bf16.mxu0 0
      %531 = vmatpush1.bf16.msra.mxu0 0
      %532 = vmatprep.subr.bf16.mxu0 0
      %533 = vmatpush1.bf16.msra.mxu0 0
      %534 = vmatprep.subr.bf16.mxu0 0
      %535 = vmatpush1.bf16.msra.mxu0 0
      %536 = vmatprep.subr.bf16.mxu0 0
      %537 = vmatpush1.bf16.msra.mxu0 0
      %538 = vmatprep.subr.bf16.mxu0 0
      %539 = vmatpush1.bf16.msra.mxu0 0
      %540 = vmatprep.subr.bf16.mxu0 0
      %541 = vmatpush1.bf16.msra.mxu0 0
      %542 = vmatprep.subr.bf16.mxu0 0
      %543 = vmatpush1.bf16.msra.mxu0 0
      %544 = vmatprep.subr.bf16.mxu0 0
      %545 = vmatpush1.bf16.msra.mxu0 0
      %546 = vmatprep.subr.bf16.mxu0 0
      %547 = vmatpush1.bf16.msra.mxu0 0
      %548 = vmatprep.subr.bf16.mxu0 0
      %549 = vmatpush1.bf16.msra.mxu0 0
      %550 = vmatprep.subr.bf16.mxu0 0
      %551 = vmatpush1.bf16.msra.mxu0 0
      %552 = vmatprep.subr.bf16.mxu0 0
      %553 = vmatpush1.bf16.msra.mxu0 0
      %554 = vmatprep.mubr.bf16.mxu0 0
      %555 = vmatmul.mubr.bf16.gmra.mrb[0].mxu0 %v517
      %v556 = vpop.f32.mrb[0].mxu0
      %v557 = vadd.f32 0.0, %v556
      %v558 = vpop.f32.mrb[0].mxu0
      %v559 = vpop.f32.mrb[0].mxu0
      %v560 = vpop.f32.mrb[0].mxu0
      %561 = vdwg.mxu0
      %562 = vrot.lane.b32.xlu0 %v224, 104
      %v563 = vpop.permute.xlu0 %562
      %564 = vrot.lane.b32.xlu0 %v227, 72
      %v565 = vpop.permute.xlu0 %564
      %v567 = vsel %vm230, %v563, 0
      %v570 = vsel %vm230, %v565, 0
      %572 = vmatprep.subr.bf16.mxu0 0
      %573 = vmatpush1.bf16.xpose.msra.mxu0 %v570
      %574 = vmatprep.subr.bf16.mxu0 0
      %575 = vmatpush1.bf16.xpose.msra.mxu0 0
      %576 = vmatprep.subr.bf16.mxu0 0
      %577 = vmatpush1.bf16.xpose.msra.mxu0 0
      %578 = vmatprep.subr.bf16.mxu0 0
      %579 = vmatpush1.bf16.xpose.msra.mxu0 0
      %580 = vmatprep.subr.bf16.mxu0 0
      %581 = vmatpush1.bf16.xpose.msra.mxu0 0
      %582 = vmatprep.subr.bf16.mxu0 0
      %583 = vmatpush1.bf16.xpose.msra.mxu0 0
      %584 = vmatprep.subr.bf16.mxu0 0
      %585 = vmatpush1.bf16.xpose.msra.mxu0 0
      %586 = vmatprep.subr.bf16.mxu0 0
      %587 = vmatpush1.bf16.xpose.msra.mxu0 0
      %588 = vmatprep.subr.bf16.mxu0 0
      %589 = vmatpush1.bf16.xpose.msra.mxu0 0
      %590 = vmatprep.subr.bf16.mxu0 0
      %591 = vmatpush1.bf16.xpose.msra.mxu0 0
      %592 = vmatprep.subr.bf16.mxu0 0
      %593 = vmatpush1.bf16.xpose.msra.mxu0 0
      %594 = vmatprep.subr.bf16.mxu0 0
      %595 = vmatpush1.bf16.xpose.msra.mxu0 0
      %596 = vmatprep.subr.bf16.mxu0 0
      %597 = vmatpush1.bf16.xpose.msra.mxu0 0
      %598 = vmatprep.subr.bf16.mxu0 0
      %599 = vmatpush1.bf16.xpose.msra.mxu0 0
      %600 = vmatprep.subr.bf16.mxu0 0
      %601 = vmatpush1.bf16.xpose.msra.mxu0 0
      %602 = vmatprep.subr.bf16.mxu0 0
      %603 = vmatpush1.bf16.xpose.msra.mxu0 0
      %604 = vmatprep.mubr.bf16.mxu0 0
      %605 = vmatmul.mubr.bf16.gmra.mrb[0].mxu0 %v567
      %v606 = vpop.f32.mrb[0].mxu0
      %v607 = vadd.f32 0.0, %v606
      %v608 = vpop.f32.mrb[0].mxu0
      %v609 = vpop.f32.mrb[0].mxu0
      %v610 = vpop.f32.mrb[0].mxu0
      %611 = vdwg.mxu0
      %v612 = vsel %vm220, -10000.0, %v607
      %v613 = vsel %vm230, %v612, -inf
      %614 = vmax.xlane.f32.xlu0 %v613
      %v615 = vpop.xlane.xlu0 %614
      %v616 = vsub.f32 %v612, %v615
      %v617 = vmul.f32 %v616, 1.442695
      %v618 = vpow.pop %v617
      %v619 = vsel %vm230, %v618, 0.0
      %620 = vadd.xlane.f32.xlu0 %v619
      %v621 = vpop.xlane.xlu0 %620
      %v622 = vrcp.pop %v621
      %v623 = vmul.f32 %v618, %v622
      %v624 = vpack.c.bf16 %v623, %v623
      %625 = vrot.lane.b32.xlu0 %v227, 40
      %v626 = vpop.permute.xlu0 %625
      %v628 = vsel %vm230, %v624, 0
      %v631 = vsel %vm295, %v626, 0
      %633 = vmatprep.subr.bf16.mxu0 0
      %634 = vmatpush1.bf16.msra.mxu0 %v631
      %635 = vmatprep.subr.bf16.mxu0 0
      %636 = vmatpush1.bf16.msra.mxu0 0
      %637 = vmatprep.subr.bf16.mxu0 0
      %638 = vmatpush1.bf16.msra.mxu0 0
      %639 = vmatprep.subr.bf16.mxu0 0
      %640 = vmatpush1.bf16.msra.mxu0 0
      %641 = vmatprep.subr.bf16.mxu0 0
      %642 = vmatpush1.bf16.msra.mxu0 0
      %643 = vmatprep.subr.bf16.mxu0 0
      %644 = vmatpush1.bf16.msra.mxu0 0
      %645 = vmatprep.subr.bf16.mxu0 0
      %646 = vmatpush1.bf16.msra.mxu0 0
      %647 = vmatprep.subr.bf16.mxu0 0
      %648 = vmatpush1.bf16.msra.mxu0 0
      %649 = vmatprep.subr.bf16.mxu0 0
      %650 = vmatpush1.bf16.msra.mxu0 0
      %651 = vmatprep.subr.bf16.mxu0 0
      %652 = vmatpush1.bf16.msra.mxu0 0
      %653 = vmatprep.subr.bf16.mxu0 0
      %654 = vmatpush1.bf16.msra.mxu0 0
      %655 = vmatprep.subr.bf16.mxu0 0
      %656 = vmatpush1.bf16.msra.mxu0 0
      %657 = vmatprep.subr.bf16.mxu0 0
      %658 = vmatpush1.bf16.msra.mxu0 0
      %659 = vmatprep.subr.bf16.mxu0 0
      %660 = vmatpush1.bf16.msra.mxu0 0
      %661 = vmatprep.subr.bf16.mxu0 0
      %662 = vmatpush1.bf16.msra.mxu0 0
      %663 = vmatprep.subr.bf16.mxu0 0
      %664 = vmatpush1.bf16.msra.mxu0 0
      %665 = vmatprep.mubr.bf16.mxu0 0
      %666 = vmatmul.mubr.bf16.gmra.mrb[0].mxu0 %v628
      %v667 = vpop.f32.mrb[0].mxu0
      %v668 = vadd.f32 0.0, %v667
      %v669 = vpop.f32.mrb[0].mxu0
      %v670 = vpop.f32.mrb[0].mxu0
      %v671 = vpop.f32.mrb[0].mxu0
      %672 = vdwg.mxu0
      %674 = vrot.lane.b32.xlu0 %v446, 8
      %v675 = vpop.permute.xlu0 %674
      %678 = vrot.lane.b32.xlu0 %v557, 16
      %v679 = vpop.permute.xlu0 %678
      %682 = vrot.lane.b32.xlu0 %v668, 24
      %v683 = vpop.permute.xlu0 %682
      %v685 = vsel %vm230, %v334, %v675
      %vm686 = vcmask 130048
      %v687 = vsel %vm686, %v685, %v679
      %vm688 = vcmask 195584
      %v689 = vsel %vm688, %v687, %v683
      %v690 = vpack.c.bf16 %v689, %v689
      %vm691 = vcmask 257024
      %692 = vst.msk [vmem:[%s196] sm:$0xf] %vm691, %v690
      %p693 = scmp.lt.s32.totalorder %s14, 1
      %s694 = scalar_select %p693, %s14, 1
      %s695 = smul.addr %s694, 4
      %s696 = scalar_lea.vmem %s3, %s695
      // Predicated region
      $region33: #{transformer_forward.40} parent=31 // pred_check
        %p697 = pneg %p110
      $region34: #{transformer_forward.40} parent=31 // pred_check_branch
        %699 = sbr.rel (%p697) target = $region36
      $region35: #{transformer_forward.40} parent=31 // pred_region
        _
      $region36: #{transformer_forward.40} parent=31 // pred_fallthru
        _
    $region32: #{transformer_forward.40} parent=5 // pred_fallthru
      _
    %p700 = scmp.le.s32.totalorder 2, %s9
    // Predicated region
    $region37: #{transformer_forward.40} parent=5 // pred_check
      %p701 = pneg %p700
    $region38: #{transformer_forward.40} parent=5 // pred_check_branch
      %703 = sbr.rel (%p701) target = $region40
    $region39: #{transformer_forward.40} parent=5 // pred_region
      %s704 = ssub.s32 %s9, 2
      // Predicated region
      $region41: #{transformer_forward.40} parent=39 // pred_check
        %p705 = pneg %p116
      $region42: #{transformer_forward.40} parent=39 // pred_check_branch
        %707 = sbr.rel (%p705) target = $region44
      $region43: #{transformer_forward.40} parent=39 // pred_region
        %p708 = scmp.lt.s32.totalorder %s15, 1
        %s709 = scalar_select %p708, %s15, 1
        %s710 = smul.addr %s709, 4
        %s711 = scalar_lea.vmem %s3, %s710
      $region44: #{transformer_forward.40} parent=39 // pred_fallthru
        _
    $region40: #{transformer_forward.40} parent=5 // pred_fallthru
      _
  $region6: #{transformer_forward.40} parent=0 // loop_footer
    %s13 = sadd.s32 1, %s9
  $region7: #{transformer_forward.40} parent=0 // loop_footer_branch
    %8 = sbr.rel target = $region3
  $region8: #{transformer_forward.40} parent=0 // loop_exit
    _

// kernel: transformer_forward.44
$region0: #{transformer_forward.44}
  #allocation0 [shape = 'u32[]', space=smem, size = 0x4, offset = 0x4, fixed_abs, tag = 'smem constant byte address 0x4 - core index']
  #allocation1 [shape = 'u32[144,128]{1,0:T(1,128)}', space=vmem, size = 0x12000, scoped, tag = 'internal scratch']
  %s0 = inlined_call_operand.vmem [shape: bf16[2,8,32], index: 0, kind: input, shape index: {}]
  %s1 = inlined_call_operand.vmem [shape: bf16[2,8,64], index: 1, kind: input, shape index: {}]
  %s2 = inlined_call_operand.vmem [shape: f32[2,1,8], index: 2, kind: input, shape index: {}]
  %s3 = inlined_call_operand.vmem [shape: bf16[2,8,32], index: 3, kind: output, shape index: {}]
  %s4 = sld [smem:[#allocation0]]
  $region45: #{transformer_forward.44} parent=0
    _
  %s6 = ssub.s32 1, %s4
  %s7 = scalar_select 0, %s6, %s4
  loop: start=0, step=1, limit=4
  $region2: #{transformer_forward.44} parent=0 // loop_pre_header
    _
  $region3: #{transformer_forward.44} parent=0 // loop_header
    %s9 = sphi 0, %s13
    %p10 = scmp.ge.s32.totalorder %s9, 4
    %s19 = sphi 0, %s21
    %s22 = sphi 0, %s19
    %s23 = sphi 0, %s22
    %s39 = sphi 0, %s23
    %s45 = sphi 0, %s47
    %s48 = sphi 0, %s45
    %s49 = sphi 0, %s48
    %s65 = sphi 0, %s49
    %s71 = sphi 0, %s73
    %s74 = sphi 0, %s71
    %s75 = sphi 0, %s74
    %s91 = sphi 0, %s75
    %s97 = sphi 0, %s99
    %s100 = sphi 0, %s97
    %s101 = sphi 0, %s100
    %s117 = sphi 0, %s101
  $region4: #{transformer_forward.44} parent=0 // loop_header_branch
    %12 = sbr.rel (%p10) target = $region8
  $region5: #{transformer_forward.44} parent=0 // loop_body
    %s14 = ssub.s32 %s9, 1
    %s15 = ssub.s32 %s9, 2
    %s16 = sadd.s32 %s9, 1
    %s17 = ssub.s32 %s9, %s16
    %p18 = scmp.eq.s32.totalorder %s17, 0
    %s20 = sadd.s32 %s19, 1
    %s21 = scalar_select %p18, %s19, %s20
    %p24 = pneg %p18
    %p25 = scmp.eq.s32.totalorder %s9, 1
    %p26 = por %p24, %p25
    %p27 = scmp.ne.s32.totalorder %s19, %s22
    %p28 = scmp.eq.s32.totalorder %s9, 0
    %p29 = por %p27, %p28
    %p30 = scmp.ne.s32.totalorder %s19, %s22
    %p31 = scmp.eq.s32.totalorder %s14, 1
    %p32 = por %p30, %p31
    %p33 = scmp.ne.s32.totalorder %s22, %s23
    %p34 = scmp.eq.s32.totalorder %s14, 0
    %p35 = por %p33, %p34
    %p36 = scmp.ne.s32.totalorder %s22, %s23
    %p37 = scmp.eq.s32.totalorder %s15, 1
    %p38 = por %p36, %p37
    %p40 = scmp.ne.s32.totalorder %s23, %s39
    %p41 = scmp.eq.s32.totalorder %s15, 0
    %p42 = por %p40, %p41
    %s43 = ssub.s32 %s9, %s16
    %p44 = scmp.eq.s32.totalorder %s43, 0
    %s46 = sadd.s32 %s45, 1
    %s47 = scalar_select %p44, %s45, %s46
    %p50 = pneg %p44
    %p51 = scmp.eq.s32.totalorder %s9, 1
    %p52 = por %p50, %p51
    %p53 = scmp.ne.s32.totalorder %s45, %s48
    %p54 = scmp.eq.s32.totalorder %s9, 0
    %p55 = por %p53, %p54
    %p56 = scmp.ne.s32.totalorder %s45, %s48
    %p57 = scmp.eq.s32.totalorder %s14, 1
    %p58 = por %p56, %p57
    %p59 = scmp.ne.s32.totalorder %s48, %s49
    %p60 = scmp.eq.s32.totalorder %s14, 0
    %p61 = por %p59, %p60
    %p62 = scmp.ne.s32.totalorder %s48, %s49
    %p63 = scmp.eq.s32.totalorder %s15, 1
    %p64 = por %p62, %p63
    %p66 = scmp.ne.s32.totalorder %s49, %s65
    %p67 = scmp.eq.s32.totalorder %s15, 0
    %p68 = por %p66, %p67
    %s69 = ssub.s32 %s9, %s16
    %p70 = scmp.eq.s32.totalorder %s69, 0
    %s72 = sadd.s32 %s71, 1
    %s73 = scalar_select %p70, %s71, %s72
    %p76 = pneg %p70
    %p77 = scmp.eq.s32.totalorder %s9, 1
    %p78 = por %p76, %p77
    %p79 = scmp.ne.s32.totalorder %s71, %s74
    %p80 = scmp.eq.s32.totalorder %s9, 0
    %p81 = por %p79, %p80
    %p82 = scmp.ne.s32.totalorder %s71, %s74
    %p83 = scmp.eq.s32.totalorder %s14, 1
    %p84 = por %p82, %p83
    %p85 = scmp.ne.s32.totalorder %s74, %s75
    %p86 = scmp.eq.s32.totalorder %s14, 0
    %p87 = por %p85, %p86
    %p88 = scmp.ne.s32.totalorder %s74, %s75
    %p89 = scmp.eq.s32.totalorder %s15, 1
    %p90 = por %p88, %p89
    %p92 = scmp.ne.s32.totalorder %s75, %s91
    %p93 = scmp.eq.s32.totalorder %s15, 0
    %p94 = por %p92, %p93
    %s95 = ssub.s32 %s9, %s16
    %p96 = scmp.eq.s32.totalorder %s95, 0
    %s98 = sadd.s32 %s97, 1
    %s99 = scalar_select %p96, %s97, %s98
    %p102 = pneg %p96
    %p103 = scmp.eq.s32.totalorder %s9, 1
    %p104 = por %p102, %p103
    %p105 = scmp.ne.s32.totalorder %s97, %s100
    %p106 = scmp.eq.s32.totalorder %s9, 0
    %p107 = por %p105, %p106
    %p108 = scmp.ne.s32.totalorder %s97, %s100
    %p109 = scmp.eq.s32.totalorder %s14, 1
    %p110 = por %p108, %p109
    %p111 = scmp.ne.s32.totalorder %s100, %s101
    %p112 = scmp.eq.s32.totalorder %s14, 0
    %p113 = por %p111, %p112
    %p114 = scmp.ne.s32.totalorder %s100, %s101
    %p115 = scmp.eq.s32.totalorder %s15, 1
    %p116 = por %p114, %p115
    %p118 = scmp.ne.s32.totalorder %s101, %s117
    %p119 = scmp.eq.s32.totalorder %s15, 0
    %p120 = por %p118, %p119
    %p121 = scmp.le.s32.totalorder 1, %s9
    %p122 = scmp.lt.s32.totalorder %s9, 3
    %p123 = pnand %p121, %p122
    %p124 = pneg %p123
    // Predicated region
    $region9: #{transformer_forward.44} parent=5 // pred_check
      _
    $region10: #{transformer_forward.44} parent=5 // pred_check_branch
      %126 = sbr.rel (%p123) target = $region12
    $region11: #{transformer_forward.44} parent=5 // pred_region
      %s127 = ssub.s32 %s9, 1
    $region12: #{transformer_forward.44} parent=5 // pred_fallthru
      _
    %p128 = scmp.lt.s32.totalorder %s9, 2
    // Predicated region
    $region13: #{transformer_forward.44} parent=5 // pred_check
      %p129 = pneg %p128
    $region14: #{transformer_forward.44} parent=5 // pred_check_branch
      %131 = sbr.rel (%p129) target = $region16
    $region15: #{transformer_forward.44} parent=5 // pred_region
      // Predicated region
      $region17: #{transformer_forward.44} parent=15 // pred_check
        %p132 = pneg %p29
      $region18: #{transformer_forward.44} parent=15 // pred_check_branch
        %134 = sbr.rel (%p132) target = $region20
      $region19: #{transformer_forward.44} parent=15 // pred_region
        %p135 = scmp.lt.s32.totalorder %s9, 1
        %s136 = scalar_select %p135, %s9, 1
        %s137 = smul.addr %s136, 4
        %s138 = scalar_lea.vmem %s0, %s137
      $region20: #{transformer_forward.44} parent=15 // pred_fallthru
        _
      // Predicated region
      $region21: #{transformer_forward.44} parent=15 // pred_check
        %p139 = pneg %p55
      $region22: #{transformer_forward.44} parent=15 // pred_check_branch
        %141 = sbr.rel (%p139) target = $region24
      $region23: #{transformer_forward.44} parent=15 // pred_region
        %p142 = scmp.lt.s32.totalorder %s9, 1
        %s143 = scalar_select %p142, %s9, 1
        %s144 = smul.addr %s143, 4
        %s145 = scalar_lea.vmem %s1, %s144
      $region24: #{transformer_forward.44} parent=15 // pred_fallthru
        _
      // Predicated region
      $region25: #{transformer_forward.44} parent=15 // pred_check
        %p146 = pneg %p81
      $region26: #{transformer_forward.44} parent=15 // pred_check_branch
        %148 = sbr.rel (%p146) target = $region28
      $region27: #{transformer_forward.44} parent=15 // pred_region
        %p149 = scmp.lt.s32.totalorder %s9, 1
        %s150 = scalar_select %p149, %s9, 1
        %s151 = scalar_lea.vmem %s2, %s150
      $region28: #{transformer_forward.44} parent=15 // pred_fallthru
        _
    $region16: #{transformer_forward.44} parent=5 // pred_fallthru
      _
    %p152 = scmp.le.s32.totalorder 1, %s9
    %p153 = scmp.lt.s32.totalorder %s9, 3
    %p154 = pnand %p152, %p153
    %p155 = pneg %p154
    // Predicated region
    $region29: #{transformer_forward.44} parent=5 // pred_check
      _
    $region30: #{transformer_forward.44} parent=5 // pred_check_branch
      %157 = sbr.rel (%p154) target = $region32
    $region31: #{transformer_forward.44} parent=5 // pred_region
      %s158 = ssub.s32 %s9, 1
      %p159 = scmp.lt.s32.totalorder %s14, 1
      %s160 = scalar_select %p159, %s14, 1
      %s161 = smul.addr %s160, 4
      %s162 = scalar_lea.vmem %s0, %s161
      %p163 = pneg %p35
      %p164 = pneg %p32
      %p165 = scmp.lt.s32.totalorder %s14, 1
      %s166 = scalar_select %p165, %s14, 1
      %s167 = smul.addr %s166, 4
      %s168 = scalar_lea.vmem %s1, %s167
      %p169 = pneg %p61
      %p170 = pneg %p58
      %p171 = scmp.lt.s32.totalorder %s14, 1
      %s172 = scalar_select %p171, %s14, 1
      %s173 = scalar_lea.vmem %s2, %s172
      %p174 = pneg %p87
      %p175 = pneg %p84
      %p176 = pneg %p113
      %p177 = pneg %p110
      %p178 = scmp.lt.s32.totalorder %s14, 1
      %s179 = scalar_select %p178, %s14, 1
      %s180 = smul.addr %s179, 4
      %s181 = scalar_lea.vmem %s3, %s180
      %p182 = scmp.lt.s32.totalorder %s14, 1
      %s183 = scalar_select %p182, %s14, 1
      %s184 = smul.addr %s183, 4
      %s185 = scalar_lea.vmem %s0, %s184
      %p186 = scmp.lt.s32.totalorder %s14, 1
      %s187 = scalar_select %p186, %s14, 1
      %s188 = smul.addr %s187, 4
      %s189 = scalar_lea.vmem %s1, %s188
      %p190 = scmp.lt.s32.totalorder %s14, 1
      %s191 = scalar_select %p190, %s14, 1
      %s192 = scalar_lea.vmem %s2, %s191
      %p193 = scmp.lt.s32.totalorder %s14, 1
      %s194 = scalar_select %p193, %s14, 1
      %s195 = smul.addr %s194, 4
      %s196 = scalar_lea.vmem %s3, %s195
      %v198 = vld [vmem:[%s192] sm:$0x1]
      %vm199 = vcmp.eq.f32.partialorder %v198, 0.0
      %v200 = vld [vmem:[%s189] sm:$0xf]
      %v201 = vld [vmem:[%s185] sm:$0xf]
      %v202 = vunpack.c.l.bf16 %v201
      %v203 = vmul.f32 %v202, 0.35355338
      %v204 = vpack.c.bf16 %v203, %v203
      %vm205 = vcmask 64512
      %v207 = vsel %vm205, %v204, 0
      %v210 = vsel %vm205, %v200, 0
      %212 = vmatprep.subr.bf16.mxu0 0
      %213 = vmatpush1.bf16.xpose.msra.mxu0 %v210
      %214 = vmatprep.subr.bf16.mxu0 0
      %215 = vmatpush1.bf16.xpose.msra.mxu0 0
      %216 = vmatprep.subr.bf16.mxu0 0
      %217 = vmatpush1.bf16.xpose.msra.mxu0 0
      %218 = vmatprep.subr.bf16.mxu0 0
      %219 = vmatpush1.bf16.xpose.msra.mxu0 0
      %220 = vmatprep.subr.bf16.mxu0 0
      %221 = vmatpush1.bf16.xpose.msra.mxu0 0
      %222 = vmatprep.subr.bf16.mxu0 0
      %223 = vmatpush1.bf16.xpose.msra.mxu0 0
      %224 = vmatprep.subr.bf16.mxu0 0
      %225 = vmatpush1.bf16.xpose.msra.mxu0 0
      %226 = vmatprep.subr.bf16.mxu0 0
      %227 = vmatpush1.bf16.xpose.msra.mxu0 0
      %228 = vmatprep.subr.bf16.mxu0 0
      %229 = vmatpush1.bf16.xpose.msra.mxu0 0
      %230 = vmatprep.subr.bf16.mxu0 0
      %231 = vmatpush1.bf16.xpose.msra.mxu0 0
      %232 = vmatprep.subr.bf16.mxu0 0
      %233 = vmatpush1.bf16.xpose.msra.mxu0 0
      %234 = vmatprep.subr.bf16.mxu0 0
      %235 = vmatpush1.bf16.xpose.msra.mxu0 0
      %236 = vmatprep.subr.bf16.mxu0 0
      %237 = vmatpush1.bf16.xpose.msra.mxu0 0
      %238 = vmatprep.subr.bf16.mxu0 0
      %239 = vmatpush1.bf16.xpose.msra.mxu0 0
      %240 = vmatprep.subr.bf16.mxu0 0
      %241 = vmatpush1.bf16.xpose.msra.mxu0 0
      %242 = vmatprep.subr.bf16.mxu0 0
      %243 = vmatpush1.bf16.xpose.msra.mxu0 0
      %244 = vmatprep.mubr.bf16.mxu0 0
      %245 = vmatmul.mubr.bf16.gmra.mrb[0].mxu0 %v207
      %v246 = vpop.f32.mrb[0].mxu0
      %v247 = vadd.f32 0.0, %v246
      %v248 = vpop.f32.mrb[0].mxu0
      %v249 = vpop.f32.mrb[0].mxu0
      %v250 = vpop.f32.mrb[0].mxu0
      %251 = vdwg.mxu0
      %v252 = vsel %vm199, 1, 0
      %v253 = vlaneseq
      %v254 = vshrl.u32 %v253, 7
      %v255 = vsub.s32 0, %v254
      %v256 = vrot.slane %v252, %v255
      %vm257 = vcmp.eq.s32.totalorder %v256, 1
      %v258 = vsel %vm257, -10000.0, %v247
      %v259 = vsel %vm205, %v258, -inf
      %260 = vmax.xlane.f32.xlu0 %v259
      %v261 = vpop.xlane.xlu0 %260
      %v262 = vsub.f32 %v258, %v261
      %v263 = vmul.f32 %v262, 1.442695
      %v264 = vpow.pop %v263
      %v265 = vsel %vm205, %v264, 0.0
      %266 = vadd.xlane.f32.xlu0 %v265
      %v267 = vpop.xlane.xlu0 %266
      %v268 = vrcp.pop %v267
      %v269 = vmul.f32 %v264, %v268
      %v270 = vpack.c.bf16 %v269, %v269
      %v272 = vunpack.c.l.b16 %v200
      %v273 = vpack.c.b16 %v272, %v272
      %274 = vrot.lane.b32.xlu0 %v273, 96
      %v275 = vpop.permute.xlu0 %274
      %v277 = vsel %vm205, %v270, 0
      %vm279 = vcmask 1043456
      %v281 = vsel %vm279, %v275, 0
      %283 = vmatprep.subr.bf16.mxu0 0
      %284 = vmatpush1.bf16.msra.mxu0 %v281
      %285 = vmatprep.subr.bf16.mxu0 0
      %286 = vmatpush1.bf16.msra.mxu0 0
      %287 = vmatprep.subr.bf16.mxu0 0
      %288 = vmatpush1.bf16.msra.mxu0 0
      %289 = vmatprep.subr.bf16.mxu0 0
      %290 = vmatpush1.bf16.msra.mxu0 0
      %291 = vmatprep.subr.bf16.mxu0 0
      %292 = vmatpush1.bf16.msra.mxu0 0
      %293 = vmatprep.subr.bf16.mxu0 0
      %294 = vmatpush1.bf16.msra.mxu0 0
      %295 = vmatprep.subr.bf16.mxu0 0
      %296 = vmatpush1.bf16.msra.mxu0 0
      %297 = vmatprep.subr.bf16.mxu0 0
      %298 = vmatpush1.bf16.msra.mxu0 0
      %299 = vmatprep.subr.bf16.mxu0 0
      %300 = vmatpush1.bf16.msra.mxu0 0
      %301 = vmatprep.subr.bf16.mxu0 0
      %302 = vmatpush1.bf16.msra.mxu0 0
      %303 = vmatprep.subr.bf16.mxu0 0
      %304 = vmatpush1.bf16.msra.mxu0 0
      %305 = vmatprep.subr.bf16.mxu0 0
      %306 = vmatpush1.bf16.msra.mxu0 0
      %307 = vmatprep.subr.bf16.mxu0 0
      %308 = vmatpush1.bf16.msra.mxu0 0
      %309 = vmatprep.subr.bf16.mxu0 0
      %310 = vmatpush1.bf16.msra.mxu0 0
      %311 = vmatprep.subr.bf16.mxu0 0
      %312 = vmatpush1.bf16.msra.mxu0 0
      %313 = vmatprep.subr.bf16.mxu0 0
      %314 = vmatpush1.bf16.msra.mxu0 0
      %315 = vmatprep.mubr.bf16.mxu0 0
      %316 = vmatmul.mubr.bf16.gmra.mrb[0].mxu0 %v277
      %v317 = vpop.f32.mrb[0].mxu0
      %v318 = vadd.f32 0.0, %v317
      %v319 = vpop.f32.mrb[0].mxu0
      %v320 = vpop.f32.mrb[0].mxu0
      %v321 = vpop.f32.mrb[0].mxu0
      %322 = vdwg.mxu0
      %324 = vrot.lane.b32.xlu0 %v204, 120
      %v325 = vpop.permute.xlu0 %324
      %326 = vrot.lane.b32.xlu0 %v273, 120
      %v327 = vpop.permute.xlu0 %326
      %v329 = vsel %vm205, %v325, 0
      %v332 = vsel %vm205, %v327, 0
      %334 = vmatprep.subr.bf16.mxu0 0
      %335 = vmatpush1.bf16.xpose.msra.mxu0 %v332
      %336 = vmatprep.subr.bf16.mxu0 0
      %337 = vmatpush1.bf16.xpose.msra.mxu0 0
      %338 = vmatprep.subr.bf16.mxu0 0
      %339 = vmatpush1.bf16.xpose.msra.mxu0 0
      %340 = vmatprep.subr.bf16.mxu0 0
      %341 = vmatpush1.bf16.xpose.msra.mxu0 0
      %342 = vmatprep.subr.bf16.mxu0 0
      %343 = vmatpush1.bf16.xpose.msra.mxu0 0
      %344 = vmatprep.subr.bf16.mxu0 0
      %345 = vmatpush1.bf16.xpose.msra.mxu0 0
      %346 = vmatprep.subr.bf16.mxu0 0
      %347 = vmatpush1.bf16.xpose.msra.mxu0 0
      %348 = vmatprep.subr.bf16.mxu0 0
      %349 = vmatpush1.bf16.xpose.msra.mxu0 0
      %350 = vmatprep.subr.bf16.mxu0 0
      %351 = vmatpush1.bf16.xpose.msra.mxu0 0
      %352 = vmatprep.subr.bf16.mxu0 0
      %353 = vmatpush1.bf16.xpose.msra.mxu0 0
      %354 = vmatprep.subr.bf16.mxu0 0
      %355 = vmatpush1.bf16.xpose.msra.mxu0 0
      %356 = vmatprep.subr.bf16.mxu0 0
      %357 = vmatpush1.bf16.xpose.msra.mxu0 0
      %358 = vmatprep.subr.bf16.mxu0 0
      %359 = vmatpush1.bf16.xpose.msra.mxu0 0
      %360 = vmatprep.subr.bf16.mxu0 0
      %361 = vmatpush1.bf16.xpose.msra.mxu0 0
      %362 = vmatprep.subr.bf16.mxu0 0
      %363 = vmatpush1.bf16.xpose.msra.mxu0 0
      %364 = vmatprep.subr.bf16.mxu0 0
      %365 = vmatpush1.bf16.xpose.msra.mxu0 0
      %366 = vmatprep.mubr.bf16.mxu0 0
      %367 = vmatmul.mubr.bf16.gmra.mrb[0].mxu0 %v329
      %v368 = vpop.f32.mrb[0].mxu0
      %v369 = vadd.f32 0.0, %v368
      %v370 = vpop.f32.mrb[0].mxu0
      %v371 = vpop.f32.mrb[0].mxu0
      %v372 = vpop.f32.mrb[0].mxu0
      %373 = vdwg.mxu0
      %v374 = vsel %vm257, -10000.0, %v369
      %v375 = vsel %vm205, %v374, -inf
      %376 = vmax.xlane.f32.xlu0 %v375
      %v377 = vpop.xlane.xlu0 %376
      %v378 = vsub.f32 %v374, %v377
      %v379 = vmul.f32 %v378, 1.442695
      %v380 = vpow.pop %v379
      %v381 = vsel %vm205, %v380, 0.0
      %382 = vadd.xlane.f32.xlu0 %v381
      %v383 = vpop.xlane.xlu0 %382
      %v384 = vrcp.pop %v383
      %v385 = vmul.f32 %v380, %v384
      %v386 = vpack.c.bf16 %v385, %v385
      %387 = vrot.lane.b32.xlu0 %v273, 88
      %v388 = vpop.permute.xlu0 %387
      %v390 = vsel %vm205, %v386, 0
      %v393 = vsel %vm279, %v388, 0
      %395 = vmatprep.subr.bf16.mxu0 0
      %396 = vmatpush1.bf16.msra.mxu0 %v393
      %397 = vmatprep.subr.bf16.mxu0 0
      %398 = vmatpush1.bf16.msra.mxu0 0
      %399 = vmatprep.subr.bf16.mxu0 0
      %400 = vmatpush1.bf16.msra.mxu0 0
      %401 = vmatprep.subr.bf16.mxu0 0
      %402 = vmatpush1.bf16.msra.mxu0 0
      %403 = vmatprep.subr.bf16.mxu0 0
      %404 = vmatpush1.bf16.msra.mxu0 0
      %405 = vmatprep.subr.bf16.mxu0 0
      %406 = vmatpush1.bf16.msra.mxu0 0
      %407 = vmatprep.subr.bf16.mxu0 0
      %408 = vmatpush1.bf16.msra.mxu0 0
      %409 = vmatprep.subr.bf16.mxu0 0
      %410 = vmatpush1.bf16.msra.mxu0 0
      %411 = vmatprep.subr.bf16.mxu0 0
      %412 = vmatpush1.bf16.msra.mxu0 0
      %413 = vmatprep.subr.bf16.mxu0 0
      %414 = vmatpush1.bf16.msra.mxu0 0
      %415 = vmatprep.subr.bf16.mxu0 0
      %416 = vmatpush1.bf16.msra.mxu0 0
      %417 = vmatprep.subr.bf16.mxu0 0
      %418 = vmatpush1.bf16.msra.mxu0 0
      %419 = vmatprep.subr.bf16.mxu0 0
      %420 = vmatpush1.bf16.msra.mxu0 0
      %421 = vmatprep.subr.bf16.mxu0 0
      %422 = vmatpush1.bf16.msra.mxu0 0
      %423 = vmatprep.subr.bf16.mxu0 0
      %424 = vmatpush1.bf16.msra.mxu0 0
      %425 = vmatprep.subr.bf16.mxu0 0
      %426 = vmatpush1.bf16.msra.mxu0 0
      %427 = vmatprep.mubr.bf16.mxu0 0
      %428 = vmatmul.mubr.bf16.gmra.mrb[0].mxu0 %v390
      %v429 = vpop.f32.mrb[0].mxu0
      %v430 = vadd.f32 0.0, %v429
      %v431 = vpop.f32.mrb[0].mxu0
      %v432 = vpop.f32.mrb[0].mxu0
      %v433 = vpop.f32.mrb[0].mxu0
      %434 = vdwg.mxu0
      %435 = vrot.lane.b32.xlu0 %v204, 112
      %v436 = vpop.permute.xlu0 %435
      %437 = vrot.lane.b32.xlu0 %v273, 112
      %v438 = vpop.permute.xlu0 %437
      %v440 = vsel %vm205, %v436, 0
      %v443 = vsel %vm205, %v438, 0
      %445 = vmatprep.subr.bf16.mxu0 0
      %446 = vmatpush1.bf16.xpose.msra.mxu0 %v443
      %447 = vmatprep.subr.bf16.mxu0 0
      %448 = vmatpush1.bf16.xpose.msra.mxu0 0
      %449 = vmatprep.subr.bf16.mxu0 0
      %450 = vmatpush1.bf16.xpose.msra.mxu0 0
      %451 = vmatprep.subr.bf16.mxu0 0
      %452 = vmatpush1.bf16.xpose.msra.mxu0 0
      %453 = vmatprep.subr.bf16.mxu0 0
      %454 = vmatpush1.bf16.xpose.msra.mxu0 0
      %455 = vmatprep.subr.bf16.mxu0 0
      %456 = vmatpush1.bf16.xpose.msra.mxu0 0
      %457 = vmatprep.subr.bf16.mxu0 0
      %458 = vmatpush1.bf16.xpose.msra.mxu0 0
      %459 = vmatprep.subr.bf16.mxu0 0
      %460 = vmatpush1.bf16.xpose.msra.mxu0 0
      %461 = vmatprep.subr.bf16.mxu0 0
      %462 = vmatpush1.bf16.xpose.msra.mxu0 0
      %463 = vmatprep.subr.bf16.mxu0 0
      %464 = vmatpush1.bf16.xpose.msra.mxu0 0
      %465 = vmatprep.subr.bf16.mxu0 0
      %466 = vmatpush1.bf16.xpose.msra.mxu0 0
      %467 = vmatprep.subr.bf16.mxu0 0
      %468 = vmatpush1.bf16.xpose.msra.mxu0 0
      %469 = vmatprep.subr.bf16.mxu0 0
      %470 = vmatpush1.bf16.xpose.msra.mxu0 0
      %471 = vmatprep.subr.bf16.mxu0 0
      %472 = vmatpush1.bf16.xpose.msra.mxu0 0
      %473 = vmatprep.subr.bf16.mxu0 0
      %474 = vmatpush1.bf16.xpose.msra.mxu0 0
      %475 = vmatprep.subr.bf16.mxu0 0
      %476 = vmatpush1.bf16.xpose.msra.mxu0 0
      %477 = vmatprep.mubr.bf16.mxu0 0
      %478 = vmatmul.mubr.bf16.gmra.mrb[0].mxu0 %v440
      %v479 = vpop.f32.mrb[0].mxu0
      %v480 = vadd.f32 0.0, %v479
      %v481 = vpop.f32.mrb[0].mxu0
      %v482 = vpop.f32.mrb[0].mxu0
      %v483 = vpop.f32.mrb[0].mxu0
      %484 = vdwg.mxu0
      %v485 = vsel %vm257, -10000.0, %v480
      %v486 = vsel %vm205, %v485, -inf
      %487 = vmax.xlane.f32.xlu0 %v486
      %v488 = vpop.xlane.xlu0 %487
      %v489 = vsub.f32 %v485, %v488
      %v490 = vmul.f32 %v489, 1.442695
      %v491 = vpow.pop %v490
      %v492 = vsel %vm205, %v491, 0.0
      %493 = vadd.xlane.f32.xlu0 %v492
      %v494 = vpop.xlane.xlu0 %493
      %v495 = vrcp.pop %v494
      %v496 = vmul.f32 %v491, %v495
      %v497 = vpack.c.bf16 %v496, %v496
      %498 = vrot.lane.b32.xlu0 %v273, 80
      %v499 = vpop.permute.xlu0 %498
      %v501 = vsel %vm205, %v497, 0
      %v504 = vsel %vm279, %v499, 0
      %506 = vmatprep.subr.bf16.mxu0 0
      %507 = vmatpush1.bf16.msra.mxu0 %v504
      %508 = vmatprep.subr.bf16.mxu0 0
      %509 = vmatpush1.bf16.msra.mxu0 0
      %510 = vmatprep.subr.bf16.mxu0 0
      %511 = vmatpush1.bf16.msra.mxu0 0
      %512 = vmatprep.subr.bf16.mxu0 0
      %513 = vmatpush1.bf16.msra.mxu0 0
      %514 = vmatprep.subr.bf16.mxu0 0
      %515 = vmatpush1.bf16.msra.mxu0 0
      %516 = vmatprep.subr.bf16.mxu0 0
      %517 = vmatpush1.bf16.msra.mxu0 0
      %518 = vmatprep.subr.bf16.mxu0 0
      %519 = vmatpush1.bf16.msra.mxu0 0
      %520 = vmatprep.subr.bf16.mxu0 0
      %521 = vmatpush1.bf16.msra.mxu0 0
      %522 = vmatprep.subr.bf16.mxu0 0
      %523 = vmatpush1.bf16.msra.mxu0 0
      %524 = vmatprep.subr.bf16.mxu0 0
      %525 = vmatpush1.bf16.msra.mxu0 0
      %526 = vmatprep.subr.bf16.mxu0 0
      %527 = vmatpush1.bf16.msra.mxu0 0
      %528 = vmatprep.subr.bf16.mxu0 0
      %529 = vmatpush1.bf16.msra.mxu0 0
      %530 = vmatprep.subr.bf16.mxu0 0
      %531 = vmatpush1.bf16.msra.mxu0 0
      %532 = vmatprep.subr.bf16.mxu0 0
      %533 = vmatpush1.bf16.msra.mxu0 0
      %534 = vmatprep.subr.bf16.mxu0 0
      %535 = vmatpush1.bf16.msra.mxu0 0
      %536 = vmatprep.subr.bf16.mxu0 0
      %537 = vmatpush1.bf16.msra.mxu0 0
      %538 = vmatprep.mubr.bf16.mxu0 0
      %539 = vmatmul.mubr.bf16.gmra.mrb[0].mxu0 %v501
      %v540 = vpop.f32.mrb[0].mxu0
      %v541 = vadd.f32 0.0, %v540
      %v542 = vpop.f32.mrb[0].mxu0
      %v543 = vpop.f32.mrb[0].mxu0
      %v544 = vpop.f32.mrb[0].mxu0
      %545 = vdwg.mxu0
      %546 = vrot.lane.b32.xlu0 %v204, 104
      %v547 = vpop.permute.xlu0 %546
      %548 = vrot.lane.b32.xlu0 %v273, 104
      %v549 = vpop.permute.xlu0 %548
      %v551 = vsel %vm205, %v547, 0
      %v554 = vsel %vm205, %v549, 0
      %556 = vmatprep.subr.bf16.mxu0 0
      %557 = vmatpush1.bf16.xpose.msra.mxu0 %v554
      %558 = vmatprep.subr.bf16.mxu0 0
      %559 = vmatpush1.bf16.xpose.msra.mxu0 0
      %560 = vmatprep.subr.bf16.mxu0 0
      %561 = vmatpush1.bf16.xpose.msra.mxu0 0
      %562 = vmatprep.subr.bf16.mxu0 0
      %563 = vmatpush1.bf16.xpose.msra.mxu0 0
      %564 = vmatprep.subr.bf16.mxu0 0
      %565 = vmatpush1.bf16.xpose.msra.mxu0 0
      %566 = vmatprep.subr.bf16.mxu0 0
      %567 = vmatpush1.bf16.xpose.msra.mxu0 0
      %568 = vmatprep.subr.bf16.mxu0 0
      %569 = vmatpush1.bf16.xpose.msra.mxu0 0
      %570 = vmatprep.subr.bf16.mxu0 0
      %571 = vmatpush1.bf16.xpose.msra.mxu0 0
      %572 = vmatprep.subr.bf16.mxu0 0
      %573 = vmatpush1.bf16.xpose.msra.mxu0 0
      %574 = vmatprep.subr.bf16.mxu0 0
      %575 = vmatpush1.bf16.xpose.msra.mxu0 0
      %576 = vmatprep.subr.bf16.mxu0 0
      %577 = vmatpush1.bf16.xpose.msra.mxu0 0
      %578 = vmatprep.subr.bf16.mxu0 0
      %579 = vmatpush1.bf16.xpose.msra.mxu0 0
      %580 = vmatprep.subr.bf16.mxu0 0
      %581 = vmatpush1.bf16.xpose.msra.mxu0 0
      %582 = vmatprep.subr.bf16.mxu0 0
      %583 = vmatpush1.bf16.xpose.msra.mxu0 0
      %584 = vmatprep.subr.bf16.mxu0 0
      %585 = vmatpush1.bf16.xpose.msra.mxu0 0
      %586 = vmatprep.subr.bf16.mxu0 0
      %587 = vmatpush1.bf16.xpose.msra.mxu0 0
      %588 = vmatprep.mubr.bf16.mxu0 0
      %589 = vmatmul.mubr.bf16.gmra.mrb[0].mxu0 %v551
      %v590 = vpop.f32.mrb[0].mxu0
      %v591 = vadd.f32 0.0, %v590
      %v592 = vpop.f32.mrb[0].mxu0
      %v593 = vpop.f32.mrb[0].mxu0
      %v594 = vpop.f32.mrb[0].mxu0
      %595 = vdwg.mxu0
      %v596 = vsel %vm257, -10000.0, %v591
      %v597 = vsel %vm205, %v596, -inf
      %598 = vmax.xlane.f32.xlu0 %v597
      %v599 = vpop.xlane.xlu0 %598
      %v600 = vsub.f32 %v596, %v599
      %v601 = vmul.f32 %v600, 1.442695
      %v602 = vpow.pop %v601
      %v603 = vsel %vm205, %v602, 0.0
      %604 = vadd.xlane.f32.xlu0 %v603
      %v605 = vpop.xlane.xlu0 %604
      %v606 = vrcp.pop %v605
      %v607 = vmul.f32 %v602, %v606
      %v608 = vpack.c.bf16 %v607, %v607
      %609 = vrot.lane.b32.xlu0 %v273, 72
      %v610 = vpop.permute.xlu0 %609
      %v612 = vsel %vm205, %v608, 0
      %v615 = vsel %vm279, %v610, 0
      %617 = vmatprep.subr.bf16.mxu0 0
      %618 = vmatpush1.bf16.msra.mxu0 %v615
      %619 = vmatprep.subr.bf16.mxu0 0
      %620 = vmatpush1.bf16.msra.mxu0 0
      %621 = vmatprep.subr.bf16.mxu0 0
      %622 = vmatpush1.bf16.msra.mxu0 0
      %623 = vmatprep.subr.bf16.mxu0 0
      %624 = vmatpush1.bf16.msra.mxu0 0
      %625 = vmatprep.subr.bf16.mxu0 0
      %626 = vmatpush1.bf16.msra.mxu0 0
      %627 = vmatprep.subr.bf16.mxu0 0
      %628 = vmatpush1.bf16.msra.mxu0 0
      %629 = vmatprep.subr.bf16.mxu0 0
      %630 = vmatpush1.bf16.msra.mxu0 0
      %631 = vmatprep.subr.bf16.mxu0 0
      %632 = vmatpush1.bf16.msra.mxu0 0
      %633 = vmatprep.subr.bf16.mxu0 0
      %634 = vmatpush1.bf16.msra.mxu0 0
      %635 = vmatprep.subr.bf16.mxu0 0
      %636 = vmatpush1.bf16.msra.mxu0 0
      %637 = vmatprep.subr.bf16.mxu0 0
      %638 = vmatpush1.bf16.msra.mxu0 0
      %639 = vmatprep.subr.bf16.mxu0 0
      %640 = vmatpush1.bf16.msra.mxu0 0
      %641 = vmatprep.subr.bf16.mxu0 0
      %642 = vmatpush1.bf16.msra.mxu0 0
      %643 = vmatprep.subr.bf16.mxu0 0
      %644 = vmatpush1.bf16.msra.mxu0 0
      %645 = vmatprep.subr.bf16.mxu0 0
      %646 = vmatpush1.bf16.msra.mxu0 0
      %647 = vmatprep.subr.bf16.mxu0 0
      %648 = vmatpush1.bf16.msra.mxu0 0
      %649 = vmatprep.mubr.bf16.mxu0 0
      %650 = vmatmul.mubr.bf16.gmra.mrb[0].mxu0 %v612
      %v651 = vpop.f32.mrb[0].mxu0
      %v652 = vadd.f32 0.0, %v651
      %v653 = vpop.f32.mrb[0].mxu0
      %v654 = vpop.f32.mrb[0].mxu0
      %v655 = vpop.f32.mrb[0].mxu0
      %656 = vdwg.mxu0
      %658 = vrot.lane.b32.xlu0 %v430, 8
      %v659 = vpop.permute.xlu0 %658
      %662 = vrot.lane.b32.xlu0 %v541, 16
      %v663 = vpop.permute.xlu0 %662
      %666 = vrot.lane.b32.xlu0 %v652, 24
      %v667 = vpop.permute.xlu0 %666
      %v669 = vsel %vm205, %v318, %v659
      %vm670 = vcmask 130048
      %v671 = vsel %vm670, %v669, %v663
      %vm672 = vcmask 195584
      %v673 = vsel %vm672, %v671, %v667
      %v674 = vpack.c.bf16 %v673, %v673
      %vm675 = vcmask 257024
      %676 = vst.msk [vmem:[%s196] sm:$0xf] %vm675, %v674
      %p677 = scmp.lt.s32.totalorder %s14, 1
      %s678 = scalar_select %p677, %s14, 1
      %s679 = smul.addr %s678, 4
      %s680 = scalar_lea.vmem %s3, %s679
      // Predicated region
      $region33: #{transformer_forward.44} parent=31 // pred_check
        %p681 = pneg %p110
      $region34: #{transformer_forward.44} parent=31 // pred_check_branch
        %683 = sbr.rel (%p681) target = $region36
      $region35: #{transformer_forward.44} parent=31 // pred_region
        _
      $region36: #{transformer_forward.44} parent=31 // pred_fallthru
        _
    $region32: #{transformer_forward.44} parent=5 // pred_fallthru
      _
    %p684 = scmp.le.s32.totalorder 2, %s9
    // Predicated region
    $region37: #{transformer_forward.44} parent=5 // pred_check
      %p685 = pneg %p684
    $region38: #{transformer_forward.44} parent=5 // pred_check_branch
      %687 = sbr.rel (%p685) target = $region40
    $region39: #{transformer_forward.44} parent=5 // pred_region
      %s688 = ssub.s32 %s9, 2
      // Predicated region
      $region41: #{transformer_forward.44} parent=39 // pred_check
        %p689 = pneg %p116
      $region42: #{transformer_forward.44} parent=39 // pred_check_branch
        %691 = sbr.rel (%p689) target = $region44
      $region43: #{transformer_forward.44} parent=39 // pred_region
        %p692 = scmp.lt.s32.totalorder %s15, 1
        %s693 = scalar_select %p692, %s15, 1
        %s694 = smul.addr %s693, 4
        %s695 = scalar_lea.vmem %s3, %s694
      $region44: #{transformer_forward.44} parent=39 // pred_fallthru
        _
    $region40: #{transformer_forward.44} parent=5 // pred_fallthru
      _
  $region6: #{transformer_forward.44} parent=0 // loop_footer
    %s13 = sadd.s32 1, %s9
  $region7: #{transformer_forward.44} parent=0 // loop_footer_branch
    %8 = sbr.rel target = $region3
  $region8: #{transformer_forward.44} parent=0 // loop_exit
    _

// kernel: transformer_forward.57
$region0: #{transformer_forward.57}
  #allocation0 [shape = 'u32[]', space=smem, size = 0x4, offset = 0x4, fixed_abs, tag = 'smem constant byte address 0x4 - core index']
  #allocation1 [shape = 'u32[144,128]{1,0:T(1,128)}', space=vmem, size = 0x12000, scoped, tag = 'internal scratch']
  %s0 = inlined_call_operand.vmem [shape: bf16[16,32], index: 0, kind: input, shape index: {}]
  %s1 = inlined_call_operand.vmem [shape: bf16[32,32], index: 1, kind: input, shape index: {}]
  %s2 = inlined_call_operand.vmem [shape: f32[1,32], index: 2, kind: input, shape index: {}]
  %s3 = inlined_call_operand.hbm [shape: f32[16,32], index: 3, kind: output, shape index: {}]
  %s4 = sld [smem:[#allocation0]]
  $region22: #{transformer_forward.57} parent=0
    _
  %s6 = ssub.s32 1, %s4
  %s7 = scalar_select 0, %s6, %s4
  $region1: #{transformer_forward.57} parent=0
    #allocation2 [shape = 'u8[8192]{0}', space=vmem, size = 0x2000, scoped, tag = 'output window, operand 0, single buffered']
    #allocation3 [shape = 's32[1]{0}', space=sflag, size = 0x4, scoped, tag = 'scoped memory for transformer_forward.57']
    %8 = vsyncpa [#allocation3], 0
    // Predicated region
    $region2: #{transformer_forward.57} parent=1 // pred_check
      _
    $region3: #{transformer_forward.57} parent=1 // pred_check_branch
      %10 = sbr.rel (0) target = $region5
    $region4: #{transformer_forward.57} parent=1 // pred_region
      _
    $region5: #{transformer_forward.57} parent=1 // pred_fallthru
      _
    // Predicated region
    $region6: #{transformer_forward.57} parent=1 // pred_check
      _
    $region7: #{transformer_forward.57} parent=1 // pred_check_branch
      %12 = sbr.rel (0) target = $region9
    $region8: #{transformer_forward.57} parent=1 // pred_region
      _
    $region9: #{transformer_forward.57} parent=1 // pred_fallthru
      _
    // Predicated region
    $region10: #{transformer_forward.57} parent=1 // pred_check
      _
    $region11: #{transformer_forward.57} parent=1 // pred_check_branch
      %14 = sbr.rel (0) target = $region13
    $region12: #{transformer_forward.57} parent=1 // pred_region
      _
    $region13: #{transformer_forward.57} parent=1 // pred_fallthru
      _
    %v16 = vld [vmem:[%s0] sm:$0xf]
    %v17 = vld [vmem:[%s0 + $0x4] sm:$0xf]
    %v18 = vld [vmem:[%s1] sm:$0xf]
    %v19 = vld [vmem:[%s1 + $0x4] sm:$0xf]
    %v20 = vld [vmem:[%s1 + $0x8] sm:$0xf]
    %v21 = vld [vmem:[%s1 + $0xc] sm:$0xf]
    %v22 = vld [vmem:[%s2] sm:$0x1]
    %v24 = vlaneseq
    %v25 = vshrl.u32 %v24, 7
    %v26 = vsub.s32 0, %v25
    %v27 = vrot.slane %v22, %v26
    %v31 = vunpack.c.l.b16 %v16
    %v32 = vunpack.c.l.b16 %v17
    %v33 = vpack.c.b16 %v32, %v31
    %v38 = vunpack.c.l.b16 %v18
    %v39 = vunpack.c.l.b16 %v19
    %v40 = vunpack.c.l.b16 %v20
    %v41 = vunpack.c.l.b16 %v21
    %v42 = vpack.c.b16 %v39, %v38
    %v43 = vpack.c.b16 %v41, %v40
    %vm46 = vcmask 261120
    %v48 = vsel %vm46, %v33, 0
    %50 = vmatprep.subr.bf16.mxu0 0
    %51 = vmatpush1.bf16.msra.mxu0 %v42
    %52 = vmatprep.subr.bf16.mxu0 0
    %53 = vmatpush1.bf16.msra.mxu0 %v43
    %54 = vmatprep.subr.bf16.mxu0 0
    %55 = vmatpush1.bf16.msra.mxu0 0
    %56 = vmatprep.subr.bf16.mxu0 0
    %57 = vmatpush1.bf16.msra.mxu0 0
    %58 = vmatprep.subr.bf16.mxu0 0
    %59 = vmatpush1.bf16.msra.mxu0 0
    %60 = vmatprep.subr.bf16.mxu0 0
    %61 = vmatpush1.bf16.msra.mxu0 0
    %62 = vmatprep.subr.bf16.mxu0 0
    %63 = vmatpush1.bf16.msra.mxu0 0
    %64 = vmatprep.subr.bf16.mxu0 0
    %65 = vmatpush1.bf16.msra.mxu0 0
    %66 = vmatprep.subr.bf16.mxu0 0
    %67 = vmatpush1.bf16.msra.mxu0 0
    %68 = vmatprep.subr.bf16.mxu0 0
    %69 = vmatpush1.bf16.msra.mxu0 0
    %70 = vmatprep.subr.bf16.mxu0 0
    %71 = vmatpush1.bf16.msra.mxu0 0
    %72 = vmatprep.subr.bf16.mxu0 0
    %73 = vmatpush1.bf16.msra.mxu0 0
    %74 = vmatprep.subr.bf16.mxu0 0
    %75 = vmatpush1.bf16.msra.mxu0 0
    %76 = vmatprep.subr.bf16.mxu0 0
    %77 = vmatpush1.bf16.msra.mxu0 0
    %78 = vmatprep.subr.bf16.mxu0 0
    %79 = vmatpush1.bf16.msra.mxu0 0
    %80 = vmatprep.subr.bf16.mxu0 0
    %81 = vmatpush1.bf16.msra.mxu0 0
    %82 = vmatprep.mubr.bf16.mxu0 0
    %83 = vmatmul.mubr.bf16.gmra.mrb[0].mxu0 %v48
    %v84 = vpop.f32.mrb[0].mxu0
    %v85 = vadd.f32 %v27, %v84
    %v86 = vpop.f32.mrb[0].mxu0
    %v87 = vpop.f32.mrb[0].mxu0
    %v88 = vadd.f32 %v27, %v87
    %v89 = vpop.f32.mrb[0].mxu0
    %90 = vdwg.mxu0
    %91 = vst.msk [vmem:[#allocation2] sm:$0xff] %vm46, %v85
    %92 = vst.msk [vmem:[#allocation2 + $0x8] sm:$0xff] %vm46, %v88
    // Predicated region
    $region14: #{transformer_forward.57} parent=1 // pred_check
      _
    $region15: #{transformer_forward.57} parent=1 // pred_check_branch
      %94 = sbr.rel (0) target = $region17
    $region16: #{transformer_forward.57} parent=1 // pred_region
      %s96 = ssub.s32 256, 256
      %97 = vsyncadd [#allocation3], %s96
      %s98 = sshll.u32 [#allocation2], 4
      %s99 = int_to_ptr.vmem [resolvable:$true] %s98
      %104 = dma.vmem_to_hbm [thread:$0]  %s99, 256, %s3, [#allocation3], 128, 128, 8
    $region17: #{transformer_forward.57} parent=1 // pred_fallthru
      _
    // Predicated region
    $region18: #{transformer_forward.57} parent=1 // pred_check
      _
    $region19: #{transformer_forward.57} parent=1 // pred_check_branch
      %106 = sbr.rel (0) target = $region21
    $region20: #{transformer_forward.57} parent=1 // pred_region
      %107 = dma.done [#allocation3], 256
    $region21: #{transformer_forward.57} parent=1 // pred_fallthru
      _
    %108 = vsyncpa [#allocation3], 1

</llo_original>
